<compile_context>
chip_gen: v7x
topology: tpu7x:2x2x1
jax: 0.10.0
libtpu: 0.0.40
codegen_flags: <defaults>
</compile_context>

<pallas_src>
import numpy as np
import jax
import jax.numpy as jnp
from jax import lax
from jax.experimental import pallas as pl
from jax.experimental.pallas import tpu as pltpu


# ----------------------------- glue (plain JAX) ------------------------------

def lin2mlaw(x, levels):
    # TODO(synk): exact lpcnet lin2mlaw source not provided; standard mu-law
    # companding mapped to the [0, levels-1] "u8-style" scale is used.
    mu = float(levels - 1)
    y = jnp.sign(x) * jnp.log1p(mu * jnp.abs(x) / 32768.0) / jnp.log(1.0 + mu)
    return jnp.clip(levels / 2.0 * y + levels / 2.0, 0.0, levels - 1.0)


def diff_embedding(table, idx, levels):
    # TODO(synk): DifferentialEmbedding source not provided; linear interpolation
    # between adjacent codebook rows (the usual differentiable embedding) is used.
    idx = jnp.clip(idx, 0.0, levels - 1.0)
    lo = jnp.clip(jnp.floor(idx), 0.0, levels - 2.0)
    frac = idx - lo
    lo_i = lo.astype(jnp.int32)
    e_lo = jnp.take(table, lo_i, axis=0)
    e_hi = jnp.take(table, lo_i + 1, axis=0)
    return e_lo * (1.0 - frac[..., None]) + e_hi * frac[..., None]


def build_tree_select_mats(levels):
    # TODO(synk): tree_to_logpdf source not provided; heap-ordered binary tree of
    # bit-conditional probabilities (node 1 = root, children 2n/2n+1) is assumed.
    # logpdf = log(p) @ S1 + log(1-p) @ S0 with static (node, leaf) selection mats.
    assert levels & (levels - 1) == 0, "sample_level must be a power of two"
    k_bits = int(np.log2(levels))
    s1 = np.zeros((levels, levels), np.float32)
    s0 = np.zeros((levels, levels), np.float32)
    for leaf in range(levels):
        node = 1
        for j in range(k_bits - 1, -1, -1):
            bit = (leaf >> j) & 1
            if bit:
                s1[node, leaf] = 1.0
            else:
                s0[node, leaf] = 1.0
            node = 2 * node + bit
    return jnp.asarray(s1), jnp.asarray(s0)


# ------------------------------- Pallas kernel --------------------------------

def _gru_cell(gi, gh, h, hidden):
    # PyTorch nn.GRU equations, gate order [r, z, n]; b_hn lives inside r*(...).
    r = jax.nn.sigmoid(gi[:, :hidden] + gh[:, :hidden])
    z = jax.nn.sigmoid(gi[:, hidden:2 * hidden] + gh[:, hidden:2 * hidden])
    n = jnp.tanh(gi[:, 2 * hidden:] + r * gh[:, 2 * hidden:])
    return (1.0 - z) * n + z * h


def samplenet_kernel(
    gia_ref, gib_ref, noise_ref,
    wah_ref, bah_ref,
    wbh_ref, wbb_ref, bbh_ref,
    w1_ref, b1_ref, a1_ref, w2_ref, b2_ref, a2_ref,
    s1_ref, s0_ref,
    out_ref,
    ha_ref, hb_ref, hbseq_ref,
):
    bb, Ha = ha_ref.shape
    Hb = hb_ref.shape[1]
    tc = gia_ref.shape[0] // bb          # timesteps in this chunk
    cd = wah_ref.dtype                   # matmul compute dtype (bf16 or f32)

    # Reset carried hidden state at the start of each sequence (first time chunk).
    @pl.when(pl.program_id(1) == 0)
    def _():
        ha_ref[...] = jnp.zeros_like(ha_ref)
        hb_ref[...] = jnp.zeros_like(hb_ref)

    def body(t, carry):
        h_a, h_b = carry
        r0 = pl.multiple_of(t * bb, bb)  # row block [t*bb, t*bb+bb)

        # GRU_A: input-side gates precomputed in the wrapper (emb@Wae + cond@Wac + b_ih_a).
        gha = jnp.dot(h_a.astype(cd), wah_ref[...],
                      preferred_element_type=jnp.float32) + bah_ref[...]
        h_a = _gru_cell(gia_ref[pl.ds(r0, bb), :], gha, h_a, Ha)

        # Noise is added to GRU_A *output* only; the carried state stays clean.
        o_a = h_a + noise_ref[pl.ds(r0, bb), :]

        # GRU_B: cond part of input gates precomputed (cond@Wbc + b_ih_b).
        gib = gib_ref[pl.ds(r0, bb), :] + jnp.dot(
            o_a.astype(cd), wbh_ref[...], preferred_element_type=jnp.float32)
        ghb = jnp.dot(h_b.astype(cd), wbb_ref[...],
                      preferred_element_type=jnp.float32) + bbh_ref[...]
        h_b = _gru_cell(gib, ghb, h_b, Hb)

        # Stash h_b; DualFC / tree stage deferred out of the recurrence.
        hbseq_ref[pl.ds(r0, bb), :] = h_b
        return h_a, h_b

    unroll = tc if tc <= 16 else 4
    h_a, h_b = lax.fori_loop(0, tc, body, (ha_ref[...], hb_ref[...]),
                             unroll=unroll)
    ha_ref[...] = h_a
    hb_ref[...] = h_b

    # ---- Deferred DualFC + tree_to_logpdf over the whole chunk (M = tc*bb) ----
    # TODO(synk): DualFC source not provided; standard LPCNet dual dense
    # (per-channel-weighted sum of two tanh branches, then sigmoid) is used.
    hseq = hbseq_ref[...].astype(cd)
    g1 = jnp.tanh(jnp.dot(hseq, w1_ref[...],
                          preferred_element_type=jnp.float32) + b1_ref[...])
    g2 = jnp.tanh(jnp.dot(hseq, w2_ref[...],
                          preferred_element_type=jnp.float32) + b2_ref[...])
    p = jax.nn.sigmoid(a1_ref[...] * g1 + a2_ref[...] * g2)
    p = jnp.clip(p, 1e-7, 1.0 - 1e-7)
    logp = (jnp.dot(jnp.log(p), s1_ref[...], preferred_element_type=jnp.float32)
            + jnp.dot(jnp.log(1.0 - p), s0_ref[...],
                      preferred_element_type=jnp.float32))
    out_ref[...] = logp                  # single lane-dense block store


# --------------------------------- wrapper ------------------------------------

WEIGHT_NAMES_KERNEL = [
    "whh_a", "bhh_a", "wih_b_h", "whh_b", "bhh_b",
    "w1", "b1", "a1", "w2", "b2", "a2", "s1", "s0",
]
_MATMUL_WEIGHTS = {"whh_a", "wih_b_h", "whh_b", "w1", "w2"}


def samplenet_forward(params, s_t_1, p_t, e_t_1, cond, rng_key,
                      batch_block=None, time_chunk=None,
                      compute_dtype=jnp.bfloat16):
    B, T = s_t_1.shape
    L = params["sample_level"]
    E = params["emb_table"].shape[1]
    Ha = params["whh_a"].shape[0]
    Hb = params["whh_b"].shape[0]
    cd = compute_dtype

    k_i, k_a = jax.random.split(rng_key)

    # mu-law + input noise + differential embedding (gather) + GRU noise: glue.
    i_t = jnp.stack(
        [lin2mlaw(s_t_1, L), lin2mlaw(p_t, L), lin2mlaw(e_t_1, L)], axis=-1)
    i_t = i_t + jax.random.normal(k_i, (B, T, 3), jnp.float32) * 0.3
    emb = diff_embedding(params["emb_table"], i_t, L).reshape(B, T, 3 * E)
    noise_a = jax.random.normal(k_a, (B, T, Ha), jnp.float32) * params["noise_gru"]

    # Hoisted non-recurrent input projections: one big (B*T, .) matmul each.
    gia = (jnp.dot(emb.astype(cd), params["wih_a_e"].astype(cd),
                   preferred_element_type=jnp.float32)
           + jnp.dot(cond.astype(cd), params["wih_a_c"].astype(cd),
                     preferred_element_type=jnp.float32)
           + params["bih_a"])
    gib_c = (jnp.dot(cond.astype(cd), params["wih_b_c"].astype(cd),
                     preferred_element_type=jnp.float32)
             + params["bih_b"])

    # ---- blocking: (batch blocks [parallel]) x (time chunks [arbitrary]) -----
    bb = batch_block if batch_block is not None else max(1, -(-B // 2))
    tc = time_chunk if time_chunk is not None else min(T, 256)
    Bp = -(-B // bb) * bb
    Tp = -(-T // tc) * tc
    nb, nt = Bp // bb, Tp // tc

    def to_blocks(x):
        d = x.shape[-1]
        x = jnp.pad(x, ((0, Bp - B), (0, Tp - T), (0, 0)))
        x = x.reshape(nb, bb, nt, tc, d).transpose(0, 2, 3, 1, 4)
        return x.reshape(nb, nt, tc * bb, d)     # row index = t_local*bb + batch

    gia_b = to_blocks(gia)
    gib_b = to_blocks(gib_c)
    noise_b = to_blocks(noise_a)

    weights = [params[n].astype(cd) if n in _MATMUL_WEIGHTS else params[n]
               for n in WEIGHT_NAMES_KERNEL]

    def seq_spec(d):
        return pl.BlockSpec((None, None, tc * bb, d), lambda b, j: (b, j, 0, 0))

    out = pl.pallas_call(
        samplenet_kernel,
        out_shape=jax.ShapeDtypeStruct((nb, nt, tc * bb, L), jnp.float32),
        grid=(nb, nt),
        in_specs=[seq_spec(3 * Ha), seq_spec(3 * Hb), seq_spec(Ha)]
                 + [pl.BlockSpec(w.shape, lambda b, j: (0, 0)) for w in weights],
        out_specs=seq_spec(L),
        scratch_shapes=[
            pltpu.VMEM((bb, Ha), jnp.float32),        # carried h_a across chunks
            pltpu.VMEM((bb, Hb), jnp.float32),        # carried h_b across chunks
            pltpu.VMEM((tc * bb, Hb), jnp.float32),   # per-chunk h_b stash
        ],
        compiler_params=pltpu.CompilerParams(
            dimension_semantics=("parallel", "arbitrary"),
            vmem_limit_bytes=64 * 1024 * 1024),
    )(gia_b, gib_b, noise_b, *weights)

    # un-block: (nb, nt, tc*bb, L) -> (B, T, L)
    out = out.reshape(nb, nt, tc, bb, L).transpose(0, 3, 1, 2, 4)
    out = out.reshape(Bp, Tp, L)
    return out[:B, :T]


def init_params(key, L, E, F, Ha, Hb, noise_gru=0.05):
    ks = jax.random.split(key, 18)

    def nrm(k, shape, scale=0.1):
        return jax.random.normal(k, shape, jnp.float32) * scale

    p = {"sample_level": L, "noise_gru": noise_gru}
    p["emb_table"] = nrm(ks[0], (L, E), 0.5)
    # GRU_A (input = 3E + F, hidden Ha); input weight split into emb/cond blocks
    p["wih_a_e"] = nrm(ks[1], (3 * E, 3 * Ha))
    p["wih_a_c"] = nrm(ks[2], (F, 3 * Ha))
    p["whh_a"] = nrm(ks[3], (Ha, 3 * Ha))
    p["bih_a"] = nrm(ks[4], (1, 3 * Ha))
    p["bhh_a"] = nrm(ks[5], (1, 3 * Ha))
    # GRU_B (input = Ha + F, hidden Hb)
    p["wih_b_h"] = nrm(ks[6], (Ha, 3 * Hb))
    p["wih_b_c"] = nrm(ks[7], (F, 3 * Hb))
    p["whh_b"] = nrm(ks[8], (Hb, 3 * Hb))
    p["bih_b"] = nrm(ks[9], (1, 3 * Hb))
    p["bhh_b"] = nrm(ks[10], (1, 3 * Hb))
    # DualFC
    p["w1"] = nrm(ks[11], (Hb, L))
    p["b1"] = nrm(ks[12], (1, L))
    p["a1"] = nrm(ks[13], (1, L), 0.5)
    p["w2"] = nrm(ks[14], (Hb, L))
    p["b2"] = nrm(ks[15], (1, L))
    p["a2"] = nrm(ks[16], (1, L), 0.5)
    p["s1"], p["s0"] = build_tree_select_mats(L)
    return p


if __name__ == "__main__":
    B, T = 4, 16
    L, E, F, Ha, Hb = 16, 8, 16, 32, 32   # sample_level, ndim_emb, cond_feat, gru_a, gru_b

    key = jax.random.PRNGKey(0)
    kp, k_s, k_p, k_e, k_c, k_n = jax.random.split(key, 6)
    params = init_params(kp, L, E, F, Ha, Hb, noise_gru=0.05)

    # linear s16-scale autoregressive inputs and conditioning series
    s_t_1 = jax.random.randint(k_s, (B, T), -32768, 32768).astype(jnp.float32)
    p_t = jax.random.randint(k_p, (B, T), -32768, 32768).astype(jnp.float32)
    e_t_1 = jax.random.randint(k_e, (B, T), -32768, 32768).astype(jnp.float32)
    cond = jax.random.normal(k_c, (B, T, F), jnp.float32)

    out = samplenet_forward(params, s_t_1, p_t, e_t_1, cond, k_n,
                            batch_block=2, time_chunk=8)
    out = jax.block_until_ready(out)

    assert out.shape == (B, T, L)
    # sanity: each timestep is a log probability distribution -> logsumexp ~ 0
    # (exact by tree construction regardless of gate precision, log/tree stage is f32)
    lse = np.asarray(jax.scipy.special.logsumexp(out, axis=-1))
    assert np.allclose(lse, 0.0, atol=1e-2), lse
    print("KERNEL_OK")
</pallas_src>

<mosaic_0001>
module attributes {stable_mosaic.version = 11 : i64} {
  func.func @samplenet_kernel(%arg0: i32, %arg1: i32, %arg2: memref<1x1x16x96xf32, #tpu.memory_space<vmem>>, %arg3: memref<1x1x16x96xf32, #tpu.memory_space<vmem>>, %arg4: memref<1x1x16x32xf32, #tpu.memory_space<vmem>>, %arg5: memref<32x96xbf16, #tpu.memory_space<vmem>>, %arg6: memref<1x96xf32, #tpu.memory_space<vmem>>, %arg7: memref<32x96xbf16, #tpu.memory_space<vmem>>, %arg8: memref<32x96xbf16, #tpu.memory_space<vmem>>, %arg9: memref<1x96xf32, #tpu.memory_space<vmem>>, %arg10: memref<32x16xbf16, #tpu.memory_space<vmem>>, %arg11: memref<1x16xf32, #tpu.memory_space<vmem>>, %arg12: memref<1x16xf32, #tpu.memory_space<vmem>>, %arg13: memref<32x16xbf16, #tpu.memory_space<vmem>>, %arg14: memref<1x16xf32, #tpu.memory_space<vmem>>, %arg15: memref<1x16xf32, #tpu.memory_space<vmem>>, %arg16: memref<16x16xf32, #tpu.memory_space<vmem>>, %arg17: memref<16x16xf32, #tpu.memory_space<vmem>>, %arg18: memref<1x1x16x16xf32, #tpu.memory_space<vmem>>, %arg19: memref<2x32xf32, #tpu.memory_space<vmem>>, %arg20: memref<2x32xf32, #tpu.memory_space<vmem>>, %arg21: memref<16x32xf32, #tpu.memory_space<vmem>>) attributes {dimension_semantics = [#tpu.dimension_semantics<parallel>, #tpu.dimension_semantics<arbitrary>], iteration_bounds = array<i64: 2, 2>, scalar_prefetch = 0 : i64, scratch_operands = 3 : i64, tpu.core_type = #tpu.core_type<tc>, window_params = [{transform_indices = @transform_0, window_bounds = array<i64: 1, 1, 16, 96>}, {transform_indices = @transform_1, window_bounds = array<i64: 1, 1, 16, 96>}, {transform_indices = @transform_2, window_bounds = array<i64: 1, 1, 16, 32>}, {pipeline_mode = #tpu.pipeline_mode<synchronous>, transform_indices = @transform_3, window_bounds = array<i64: 32, 96>}, {pipeline_mode = #tpu.pipeline_mode<synchronous>, transform_indices = @transform_4, window_bounds = array<i64: 1, 96>}, {pipeline_mode = #tpu.pipeline_mode<synchronous>, transform_indices = @transform_5, window_bounds = array<i64: 32, 96>}, {pipeline_mode = #tpu.pipeline_mode<synchronous>, transform_indices = @transform_6, window_bounds = array<i64: 32, 96>}, {pipeline_mode = #tpu.pipeline_mode<synchronous>, transform_indices = @transform_7, window_bounds = array<i64: 1, 96>}, {pipeline_mode = #tpu.pipeline_mode<synchronous>, transform_indices = @transform_8, window_bounds = array<i64: 32, 16>}, {pipeline_mode = #tpu.pipeline_mode<synchronous>, transform_indices = @transform_9, window_bounds = array<i64: 1, 16>}, {pipeline_mode = #tpu.pipeline_mode<synchronous>, transform_indices = @transform_10, window_bounds = array<i64: 1, 16>}, {pipeline_mode = #tpu.pipeline_mode<synchronous>, transform_indices = @transform_11, window_bounds = array<i64: 32, 16>}, {pipeline_mode = #tpu.pipeline_mode<synchronous>, transform_indices = @transform_12, window_bounds = array<i64: 1, 16>}, {pipeline_mode = #tpu.pipeline_mode<synchronous>, transform_indices = @transform_13, window_bounds = array<i64: 1, 16>}, {pipeline_mode = #tpu.pipeline_mode<synchronous>, transform_indices = @transform_14, window_bounds = array<i64: 16, 16>}, {pipeline_mode = #tpu.pipeline_mode<synchronous>, transform_indices = @transform_15, window_bounds = array<i64: 16, 16>}, {transform_indices = @transform_16, window_bounds = array<i64: 1, 1, 16, 16>}]} {
    %c0_i32 = arith.constant 0 : i32
    %0 = arith.cmpi eq, %arg1, %c0_i32 : i32
    %1 = arith.extui %0 : i1 to i32
    %c0_i32_0 = arith.constant 0 : i32
    %2 = arith.cmpi ne, %1, %c0_i32_0 : i32
    scf.if %2 {
      %cst_278 = arith.constant 0.000000e+00 : f32
      %705 = vector.broadcast %cst_278 : f32 to vector<2x32xf32>
      %c0_279 = arith.constant 0 : index
      %c0_280 = arith.constant 0 : index
      %706 = vector.load %arg19[%c0_279, %c0_280] : memref<2x32xf32, #tpu.memory_space<vmem>>, vector<2x32xf32>
      tpu.vector_store %arg19[%c0_279, %c0_280], %705 {strides = array<i32>} : memref<2x32xf32, #tpu.memory_space<vmem>>, vector<2x32xf32>,
      %cst_281 = arith.constant 0.000000e+00 : f32
      %707 = vector.broadcast %cst_281 : f32 to vector<2x32xf32>
      %c0_282 = arith.constant 0 : index
      %c0_283 = arith.constant 0 : index
      %708 = vector.load %arg20[%c0_282, %c0_283] : memref<2x32xf32, #tpu.memory_space<vmem>>, vector<2x32xf32>
      tpu.vector_store %arg20[%c0_282, %c0_283], %707 {strides = array<i32>} : memref<2x32xf32, #tpu.memory_space<vmem>>, vector<2x32xf32>,
    } else {
    }
    %c0 = arith.constant 0 : index
    %c0_1 = arith.constant 0 : index
    %3 = vector.load %arg19[%c0, %c0_1] : memref<2x32xf32, #tpu.memory_space<vmem>>, vector<2x32xf32>
    %c0_2 = arith.constant 0 : index
    %c0_3 = arith.constant 0 : index
    %4 = vector.load %arg20[%c0_2, %c0_3] : memref<2x32xf32, #tpu.memory_space<vmem>>, vector<2x32xf32>
    %c0_i32_4 = arith.constant 0 : i32
    %c2_i32 = arith.constant 2 : i32
    %5 = arith.muli %c0_i32_4, %c2_i32 : i32
    %6 = tpu.assume_multiple %5, 2 : i32
    %7 = arith.truncf %3 : vector<2x32xf32> to vector<2x32xbf16>
    %c0_5 = arith.constant 0 : index
    %c0_6 = arith.constant 0 : index
    %8 = vector.load %arg5[%c0_5, %c0_6] : memref<32x96xbf16, #tpu.memory_space<vmem>>, vector<32x96xbf16>
    %cst = arith.constant dense<0.000000e+00> : vector<2x96xf32>
    %9 = tpu.matmul %7, %8, %cst {dimension_numbers = #tpu.dot_dimension_numbers<[1], [0], [0], [1], [0, 0, 1, 1], [], []>} : vector<2x32xbf16>, vector<32x96xbf16>, vector<2x96xf32> -> vector<2x96xf32>
    %c0_7 = arith.constant 0 : index
    %c0_8 = arith.constant 0 : index
    %10 = vector.load %arg6[%c0_7, %c0_8] : memref<1x96xf32, #tpu.memory_space<vmem>>, vector<1x96xf32>
    %11 = vector.broadcast %10 : vector<1x96xf32> to vector<2x96xf32>
    %12 = arith.addf %9, %11 : vector<2x96xf32>
    %c0_9 = arith.constant 0 : index
    %c0_10 = arith.constant 0 : index
    %13 = arith.index_cast %6 : i32 to index
    %c0_11 = arith.constant 0 : index
    %14 = vector.load %arg2[%c0_9, %c0_10, %13, %c0_11] : memref<1x1x16x96xf32, #tpu.memory_space<vmem>>, vector<1x1x2x96xf32>
    %15 = vector.shape_cast %14 : vector<1x1x2x96xf32> to vector<2x96xf32>
    %16 = vector.extract_strided_slice %15 {offsets = [0, 0], sizes = [2, 32], strides = [1, 1]} : vector<2x96xf32> to vector<2x32xf32>
    %17 = vector.extract_strided_slice %12 {offsets = [0, 0], sizes = [2, 32], strides = [1, 1]} : vector<2x96xf32> to vector<2x32xf32>
    %18 = arith.addf %16, %17 : vector<2x32xf32>
    %19 = arith.negf %18 : vector<2x32xf32>
    %20 = math.exp %19 : vector<2x32xf32>
    %cst_12 = arith.constant 1.000000e+00 : f32
    %21 = vector.broadcast %cst_12 : f32 to vector<2x32xf32>
    %22 = arith.addf %21, %20 : vector<2x32xf32>
    %23 = arith.divf %21, %22 : vector<2x32xf32>
    %24 = vector.extract_strided_slice %15 {offsets = [0, 32], sizes = [2, 32], strides = [1, 1]} : vector<2x96xf32> to vector<2x32xf32>
    %25 = vector.extract_strided_slice %12 {offsets = [0, 32], sizes = [2, 32], strides = [1, 1]} : vector<2x96xf32> to vector<2x32xf32>
    %26 = arith.addf %24, %25 : vector<2x32xf32>
    %27 = arith.negf %26 : vector<2x32xf32>
    %28 = math.exp %27 : vector<2x32xf32>
    %cst_13 = arith.constant 1.000000e+00 : f32
    %29 = vector.broadcast %cst_13 : f32 to vector<2x32xf32>
    %30 = arith.addf %29, %28 : vector<2x32xf32>
    %31 = arith.divf %29, %30 : vector<2x32xf32>
    %32 = vector.extract_strided_slice %15 {offsets = [0, 64], sizes = [2, 32], strides = [1, 1]} : vector<2x96xf32> to vector<2x32xf32>
    %33 = vector.extract_strided_slice %12 {offsets = [0, 64], sizes = [2, 32], strides = [1, 1]} : vector<2x96xf32> to vector<2x32xf32>
    %34 = arith.mulf %23, %33 : vector<2x32xf32>
    %35 = arith.addf %32, %34 : vector<2x32xf32>
    %36 = math.tanh %35 : vector<2x32xf32>
    %cst_14 = arith.constant 1.000000e+00 : f32
    %37 = vector.broadcast %cst_14 : f32 to vector<2x32xf32>
    %38 = arith.subf %37, %31 : vector<2x32xf32>
    %39 = arith.mulf %38, %36 : vector<2x32xf32>
    %40 = arith.mulf %31, %3 : vector<2x32xf32>
    %41 = arith.addf %39, %40 : vector<2x32xf32>
    %c0_15 = arith.constant 0 : index
    %c0_16 = arith.constant 0 : index
    %42 = arith.index_cast %6 : i32 to index
    %c0_17 = arith.constant 0 : index
    %43 = vector.load %arg4[%c0_15, %c0_16, %42, %c0_17] : memref<1x1x16x32xf32, #tpu.memory_space<vmem>>, vector<1x1x2x32xf32>
    %44 = vector.shape_cast %43 : vector<1x1x2x32xf32> to vector<2x32xf32>
    %45 = arith.addf %41, %44 : vector<2x32xf32>
    %c0_18 = arith.constant 0 : index
    %c0_19 = arith.constant 0 : index
    %46 = arith.index_cast %6 : i32 to index
    %c0_20 = arith.constant 0 : index
    %47 = vector.load %arg3[%c0_18, %c0_19, %46, %c0_20] : memref<1x1x16x96xf32, #tpu.memory_space<vmem>>, vector<1x1x2x96xf32>
    %48 = vector.shape_cast %47 : vector<1x1x2x96xf32> to vector<2x96xf32>
    %49 = arith.truncf %45 : vector<2x32xf32> to vector<2x32xbf16>
    %c0_21 = arith.constant 0 : index
    %c0_22 = arith.constant 0 : index
    %50 = vector.load %arg7[%c0_21, %c0_22] : memref<32x96xbf16, #tpu.memory_space<vmem>>, vector<32x96xbf16>
    %cst_23 = arith.constant dense<0.000000e+00> : vector<2x96xf32>
    %51 = tpu.matmul %49, %50, %cst_23 {dimension_numbers = #tpu.dot_dimension_numbers<[1], [0], [0], [1], [0, 0, 1, 1], [], []>} : vector<2x32xbf16>, vector<32x96xbf16>, vector<2x96xf32> -> vector<2x96xf32>
    %52 = arith.addf %48, %51 : vector<2x96xf32>
    %53 = arith.truncf %4 : vector<2x32xf32> to vector<2x32xbf16>
    %c0_24 = arith.constant 0 : index
    %c0_25 = arith.constant 0 : index
    %54 = vector.load %arg8[%c0_24, %c0_25] : memref<32x96xbf16, #tpu.memory_space<vmem>>, vector<32x96xbf16>
    %cst_26 = arith.constant dense<0.000000e+00> : vector<2x96xf32>
    %55 = tpu.matmul %53, %54, %cst_26 {dimension_numbers = #tpu.dot_dimension_numbers<[1], [0], [0], [1], [0, 0, 1, 1], [], []>} : vector<2x32xbf16>, vector<32x96xbf16>, vector<2x96xf32> -> vector<2x96xf32>
    %c0_27 = arith.constant 0 : index
    %c0_28 = arith.constant 0 : index
    %56 = vector.load %arg9[%c0_27, %c0_28] : memref<1x96xf32, #tpu.memory_space<vmem>>, vector<1x96xf32>
    %57 = vector.broadcast %56 : vector<1x96xf32> to vector<2x96xf32>
    %58 = arith.addf %55, %57 : vector<2x96xf32>
    %59 = vector.extract_strided_slice %52 {offsets = [0, 0], sizes = [2, 32], strides = [1, 1]} : vector<2x96xf32> to vector<2x32xf32>
    %60 = vector.extract_strided_slice %58 {offsets = [0, 0], sizes = [2, 32], strides = [1, 1]} : vector<2x96xf32> to vector<2x32xf32>
    %61 = arith.addf %59, %60 : vector<2x32xf32>
    %62 = arith.negf %61 : vector<2x32xf32>
    %63 = math.exp %62 : vector<2x32xf32>
    %cst_29 = arith.constant 1.000000e+00 : f32
    %64 = vector.broadcast %cst_29 : f32 to vector<2x32xf32>
    %65 = arith.addf %64, %63 : vector<2x32xf32>
    %66 = arith.divf %64, %65 : vector<2x32xf32>
    %67 = vector.extract_strided_slice %52 {offsets = [0, 32], sizes = [2, 32], strides = [1, 1]} : vector<2x96xf32> to vector<2x32xf32>
    %68 = vector.extract_strided_slice %58 {offsets = [0, 32], sizes = [2, 32], strides = [1, 1]} : vector<2x96xf32> to vector<2x32xf32>
    %69 = arith.addf %67, %68 : vector<2x32xf32>
    %70 = arith.negf %69 : vector<2x32xf32>
    %71 = math.exp %70 : vector<2x32xf32>
    %cst_30 = arith.constant 1.000000e+00 : f32
    %72 = vector.broadcast %cst_30 : f32 to vector<2x32xf32>
    %73 = arith.addf %72, %71 : vector<2x32xf32>
    %74 = arith.divf %72, %73 : vector<2x32xf32>
    %75 = vector.extract_strided_slice %52 {offsets = [0, 64], sizes = [2, 32], strides = [1, 1]} : vector<2x96xf32> to vector<2x32xf32>
    %76 = vector.extract_strided_slice %58 {offsets = [0, 64], sizes = [2, 32], strides = [1, 1]} : vector<2x96xf32> to vector<2x32xf32>
    %77 = arith.mulf %66, %76 : vector<2x32xf32>
    %78 = arith.addf %75, %77 : vector<2x32xf32>
    %79 = math.tanh %78 : vector<2x32xf32>
    %cst_31 = arith.constant 1.000000e+00 : f32
    %80 = vector.broadcast %cst_31 : f32 to vector<2x32xf32>
    %81 = arith.subf %80, %74 : vector<2x32xf32>
    %82 = arith.mulf %81, %79 : vector<2x32xf32>
    %83 = arith.mulf %74, %4 : vector<2x32xf32>
    %84 = arith.addf %82, %83 : vector<2x32xf32>
    %85 = arith.index_cast %6 : i32 to index
    %c0_32 = arith.constant 0 : index
    %86 = vector.load %arg21[%85, %c0_32] : memref<16x32xf32, #tpu.memory_space<vmem>>, vector<2x32xf32>
    tpu.vector_store %arg21[%85, %c0_32], %84 {strides = array<i32>} : memref<16x32xf32, #tpu.memory_space<vmem>>, vector<2x32xf32>,
    %c1_i32 = arith.constant 1 : i32
    %c2_i32_33 = arith.constant 2 : i32
    %87 = arith.muli %c1_i32, %c2_i32_33 : i32
    %88 = tpu.assume_multiple %87, 2 : i32
    %89 = arith.truncf %41 : vector<2x32xf32> to vector<2x32xbf16>
    %c0_34 = arith.constant 0 : index
    %c0_35 = arith.constant 0 : index
    %90 = vector.load %arg5[%c0_34, %c0_35] : memref<32x96xbf16, #tpu.memory_space<vmem>>, vector<32x96xbf16>
    %cst_36 = arith.constant dense<0.000000e+00> : vector<2x96xf32>
    %91 = tpu.matmul %89, %90, %cst_36 {dimension_numbers = #tpu.dot_dimension_numbers<[1], [0], [0], [1], [0, 0, 1, 1], [], []>} : vector<2x32xbf16>, vector<32x96xbf16>, vector<2x96xf32> -> vector<2x96xf32>
    %c0_37 = arith.constant 0 : index
    %c0_38 = arith.constant 0 : index
    %92 = vector.load %arg6[%c0_37, %c0_38] : memref<1x96xf32, #tpu.memory_space<vmem>>, vector<1x96xf32>
    %93 = vector.broadcast %92 : vector<1x96xf32> to vector<2x96xf32>
    %94 = arith.addf %91, %93 : vector<2x96xf32>
    %c0_39 = arith.constant 0 : index
    %c0_40 = arith.constant 0 : index
    %95 = arith.index_cast %88 : i32 to index
    %c0_41 = arith.constant 0 : index
    %96 = vector.load %arg2[%c0_39, %c0_40, %95, %c0_41] : memref<1x1x16x96xf32, #tpu.memory_space<vmem>>, vector<1x1x2x96xf32>
    %97 = vector.shape_cast %96 : vector<1x1x2x96xf32> to vector<2x96xf32>
    %98 = vector.extract_strided_slice %97 {offsets = [0, 0], sizes = [2, 32], strides = [1, 1]} : vector<2x96xf32> to vector<2x32xf32>
    %99 = vector.extract_strided_slice %94 {offsets = [0, 0], sizes = [2, 32], strides = [1, 1]} : vector<2x96xf32> to vector<2x32xf32>
    %100 = arith.addf %98, %99 : vector<2x32xf32>
    %101 = arith.negf %100 : vector<2x32xf32>
    %102 = math.exp %101 : vector<2x32xf32>
    %cst_42 = arith.constant 1.000000e+00 : f32
    %103 = vector.broadcast %cst_42 : f32 to vector<2x32xf32>
    %104 = arith.addf %103, %102 : vector<2x32xf32>
    %105 = arith.divf %103, %104 : vector<2x32xf32>
    %106 = vector.extract_strided_slice %97 {offsets = [0, 32], sizes = [2, 32], strides = [1, 1]} : vector<2x96xf32> to vector<2x32xf32>
    %107 = vector.extract_strided_slice %94 {offsets = [0, 32], sizes = [2, 32], strides = [1, 1]} : vector<2x96xf32> to vector<2x32xf32>
    %108 = arith.addf %106, %107 : vector<2x32xf32>
    %109 = arith.negf %108 : vector<2x32xf32>
    %110 = math.exp %109 : vector<2x32xf32>
    %cst_43 = arith.constant 1.000000e+00 : f32
    %111 = vector.broadcast %cst_43 : f32 to vector<2x32xf32>
    %112 = arith.addf %111, %110 : vector<2x32xf32>
    %113 = arith.divf %111, %112 : vector<2x32xf32>
    %114 = vector.extract_strided_slice %97 {offsets = [0, 64], sizes = [2, 32], strides = [1, 1]} : vector<2x96xf32> to vector<2x32xf32>
    %115 = vector.extract_strided_slice %94 {offsets = [0, 64], sizes = [2, 32], strides = [1, 1]} : vector<2x96xf32> to vector<2x32xf32>
    %116 = arith.mulf %105, %115 : vector<2x32xf32>
    %117 = arith.addf %114, %116 : vector<2x32xf32>
    %118 = math.tanh %117 : vector<2x32xf32>
    %cst_44 = arith.constant 1.000000e+00 : f32
    %119 = vector.broadcast %cst_44 : f32 to vector<2x32xf32>
    %120 = arith.subf %119, %113 : vector<2x32xf32>
    %121 = arith.mulf %120, %118 : vector<2x32xf32>
    %122 = arith.mulf %113, %41 : vector<2x32xf32>
    %123 = arith.addf %121, %122 : vector<2x32xf32>
    %c0_45 = arith.constant 0 : index
    %c0_46 = arith.constant 0 : index
    %124 = arith.index_cast %88 : i32 to index
    %c0_47 = arith.constant 0 : index
    %125 = vector.load %arg4[%c0_45, %c0_46, %124, %c0_47] : memref<1x1x16x32xf32, #tpu.memory_space<vmem>>, vector<1x1x2x32xf32>
    %126 = vector.shape_cast %125 : vector<1x1x2x32xf32> to vector<2x32xf32>
    %127 = arith.addf %123, %126 : vector<2x32xf32>
    %c0_48 = arith.constant 0 : index
    %c0_49 = arith.constant 0 : index
    %128 = arith.index_cast %88 : i32 to index
    %c0_50 = arith.constant 0 : index
    %129 = vector.load %arg3[%c0_48, %c0_49, %128, %c0_50] : memref<1x1x16x96xf32, #tpu.memory_space<vmem>>, vector<1x1x2x96xf32>
    %130 = vector.shape_cast %129 : vector<1x1x2x96xf32> to vector<2x96xf32>
    %131 = arith.truncf %127 : vector<2x32xf32> to vector<2x32xbf16>
    %c0_51 = arith.constant 0 : index
    %c0_52 = arith.constant 0 : index
    %132 = vector.load %arg7[%c0_51, %c0_52] : memref<32x96xbf16, #tpu.memory_space<vmem>>, vector<32x96xbf16>
    %cst_53 = arith.constant dense<0.000000e+00> : vector<2x96xf32>
    %133 = tpu.matmul %131, %132, %cst_53 {dimension_numbers = #tpu.dot_dimension_numbers<[1], [0], [0], [1], [0, 0, 1, 1], [], []>} : vector<2x32xbf16>, vector<32x96xbf16>, vector<2x96xf32> -> vector<2x96xf32>
    %134 = arith.addf %130, %133 : vector<2x96xf32>
    %135 = arith.truncf %84 : vector<2x32xf32> to vector<2x32xbf16>
    %c0_54 = arith.constant 0 : index
    %c0_55 = arith.constant 0 : index
    %136 = vector.load %arg8[%c0_54, %c0_55] : memref<32x96xbf16, #tpu.memory_space<vmem>>, vector<32x96xbf16>
    %cst_56 = arith.constant dense<0.000000e+00> : vector<2x96xf32>
    %137 = tpu.matmul %135, %136, %cst_56 {dimension_numbers = #tpu.dot_dimension_numbers<[1], [0], [0], [1], [0, 0, 1, 1], [], []>} : vector<2x32xbf16>, vector<32x96xbf16>, vector<2x96xf32> -> vector<2x96xf32>
    %c0_57 = arith.constant 0 : index
    %c0_58 = arith.constant 0 : index
    %138 = vector.load %arg9[%c0_57, %c0_58] : memref<1x96xf32, #tpu.memory_space<vmem>>, vector<1x96xf32>
    %139 = vector.broadcast %138 : vector<1x96xf32> to vector<2x96xf32>
    %140 = arith.addf %137, %139 : vector<2x96xf32>
    %141 = vector.extract_strided_slice %134 {offsets = [0, 0], sizes = [2, 32], strides = [1, 1]} : vector<2x96xf32> to vector<2x32xf32>
    %142 = vector.extract_strided_slice %140 {offsets = [0, 0], sizes = [2, 32], strides = [1, 1]} : vector<2x96xf32> to vector<2x32xf32>
    %143 = arith.addf %141, %142 : vector<2x32xf32>
    %144 = arith.negf %143 : vector<2x32xf32>
    %145 = math.exp %144 : vector<2x32xf32>
    %cst_59 = arith.constant 1.000000e+00 : f32
    %146 = vector.broadcast %cst_59 : f32 to vector<2x32xf32>
    %147 = arith.addf %146, %145 : vector<2x32xf32>
    %148 = arith.divf %146, %147 : vector<2x32xf32>
    %149 = vector.extract_strided_slice %134 {offsets = [0, 32], sizes = [2, 32], strides = [1, 1]} : vector<2x96xf32> to vector<2x32xf32>
    %150 = vector.extract_strided_slice %140 {offsets = [0, 32], sizes = [2, 32], strides = [1, 1]} : vector<2x96xf32> to vector<2x32xf32>
    %151 = arith.addf %149, %150 : vector<2x32xf32>
    %152 = arith.negf %151 : vector<2x32xf32>
    %153 = math.exp %152 : vector<2x32xf32>
    %cst_60 = arith.constant 1.000000e+00 : f32
    %154 = vector.broadcast %cst_60 : f32 to vector<2x32xf32>
    %155 = arith.addf %154, %153 : vector<2x32xf32>
    %156 = arith.divf %154, %155 : vector<2x32xf32>
    %157 = vector.extract_strided_slice %134 {offsets = [0, 64], sizes = [2, 32], strides = [1, 1]} : vector<2x96xf32> to vector<2x32xf32>
    %158 = vector.extract_strided_slice %140 {offsets = [0, 64], sizes = [2, 32], strides = [1, 1]} : vector<2x96xf32> to vector<2x32xf32>
    %159 = arith.mulf %148, %158 : vector<2x32xf32>
    %160 = arith.addf %157, %159 : vector<2x32xf32>
    %161 = math.tanh %160 : vector<2x32xf32>
    %cst_61 = arith.constant 1.000000e+00 : f32
    %162 = vector.broadcast %cst_61 : f32 to vector<2x32xf32>
    %163 = arith.subf %162, %156 : vector<2x32xf32>
    %164 = arith.mulf %163, %161 : vector<2x32xf32>
    %165 = arith.mulf %156, %84 : vector<2x32xf32>
    %166 = arith.addf %164, %165 : vector<2x32xf32>
    %167 = arith.index_cast %88 : i32 to index
    %c0_62 = arith.constant 0 : index
    %168 = vector.load %arg21[%167, %c0_62] : memref<16x32xf32, #tpu.memory_space<vmem>>, vector<2x32xf32>
    tpu.vector_store %arg21[%167, %c0_62], %166 {strides = array<i32>} : memref<16x32xf32, #tpu.memory_space<vmem>>, vector<2x32xf32>,
    %c2_i32_63 = arith.constant 2 : i32
    %c2_i32_64 = arith.constant 2 : i32
    %169 = arith.muli %c2_i32_63, %c2_i32_64 : i32
    %170 = tpu.assume_multiple %169, 2 : i32
    %171 = arith.truncf %123 : vector<2x32xf32> to vector<2x32xbf16>
    %c0_65 = arith.constant 0 : index
    %c0_66 = arith.constant 0 : index
    %172 = vector.load %arg5[%c0_65, %c0_66] : memref<32x96xbf16, #tpu.memory_space<vmem>>, vector<32x96xbf16>
    %cst_67 = arith.constant dense<0.000000e+00> : vector<2x96xf32>
    %173 = tpu.matmul %171, %172, %cst_67 {dimension_numbers = #tpu.dot_dimension_numbers<[1], [0], [0], [1], [0, 0, 1, 1], [], []>} : vector<2x32xbf16>, vector<32x96xbf16>, vector<2x96xf32> -> vector<2x96xf32>
    %c0_68 = arith.constant 0 : index
    %c0_69 = arith.constant 0 : index
    %174 = vector.load %arg6[%c0_68, %c0_69] : memref<1x96xf32, #tpu.memory_space<vmem>>, vector<1x96xf32>
    %175 = vector.broadcast %174 : vector<1x96xf32> to vector<2x96xf32>
    %176 = arith.addf %173, %175 : vector<2x96xf32>
    %c0_70 = arith.constant 0 : index
    %c0_71 = arith.constant 0 : index
    %177 = arith.index_cast %170 : i32 to index
    %c0_72 = arith.constant 0 : index
    %178 = vector.load %arg2[%c0_70, %c0_71, %177, %c0_72] : memref<1x1x16x96xf32, #tpu.memory_space<vmem>>, vector<1x1x2x96xf32>
    %179 = vector.shape_cast %178 : vector<1x1x2x96xf32> to vector<2x96xf32>
    %180 = vector.extract_strided_slice %179 {offsets = [0, 0], sizes = [2, 32], strides = [1, 1]} : vector<2x96xf32> to vector<2x32xf32>
    %181 = vector.extract_strided_slice %176 {offsets = [0, 0], sizes = [2, 32], strides = [1, 1]} : vector<2x96xf32> to vector<2x32xf32>
    %182 = arith.addf %180, %181 : vector<2x32xf32>
    %183 = arith.negf %182 : vector<2x32xf32>
    %184 = math.exp %183 : vector<2x32xf32>
    %cst_73 = arith.constant 1.000000e+00 : f32
    %185 = vector.broadcast %cst_73 : f32 to vector<2x32xf32>
    %186 = arith.addf %185, %184 : vector<2x32xf32>
    %187 = arith.divf %185, %186 : vector<2x32xf32>
    %188 = vector.extract_strided_slice %179 {offsets = [0, 32], sizes = [2, 32], strides = [1, 1]} : vector<2x96xf32> to vector<2x32xf32>
    %189 = vector.extract_strided_slice %176 {offsets = [0, 32], sizes = [2, 32], strides = [1, 1]} : vector<2x96xf32> to vector<2x32xf32>
    %190 = arith.addf %188, %189 : vector<2x32xf32>
    %191 = arith.negf %190 : vector<2x32xf32>
    %192 = math.exp %191 : vector<2x32xf32>
    %cst_74 = arith.constant 1.000000e+00 : f32
    %193 = vector.broadcast %cst_74 : f32 to vector<2x32xf32>
    %194 = arith.addf %193, %192 : vector<2x32xf32>
    %195 = arith.divf %193, %194 : vector<2x32xf32>
    %196 = vector.extract_strided_slice %179 {offsets = [0, 64], sizes = [2, 32], strides = [1, 1]} : vector<2x96xf32> to vector<2x32xf32>
    %197 = vector.extract_strided_slice %176 {offsets = [0, 64], sizes = [2, 32], strides = [1, 1]} : vector<2x96xf32> to vector<2x32xf32>
    %198 = arith.mulf %187, %197 : vector<2x32xf32>
    %199 = arith.addf %196, %198 : vector<2x32xf32>
    %200 = math.tanh %199 : vector<2x32xf32>
    %cst_75 = arith.constant 1.000000e+00 : f32
    %201 = vector.broadcast %cst_75 : f32 to vector<2x32xf32>
    %202 = arith.subf %201, %195 : vector<2x32xf32>
    %203 = arith.mulf %202, %200 : vector<2x32xf32>
    %204 = arith.mulf %195, %123 : vector<2x32xf32>
    %205 = arith.addf %203, %204 : vector<2x32xf32>
    %c0_76 = arith.constant 0 : index
    %c0_77 = arith.constant 0 : index
    %206 = arith.index_cast %170 : i32 to index
    %c0_78 = arith.constant 0 : index
    %207 = vector.load %arg4[%c0_76, %c0_77, %206, %c0_78] : memref<1x1x16x32xf32, #tpu.memory_space<vmem>>, vector<1x1x2x32xf32>
    %208 = vector.shape_cast %207 : vector<1x1x2x32xf32> to vector<2x32xf32>
    %209 = arith.addf %205, %208 : vector<2x32xf32>
    %c0_79 = arith.constant 0 : index
    %c0_80 = arith.constant 0 : index
    %210 = arith.index_cast %170 : i32 to index
    %c0_81 = arith.constant 0 : index
    %211 = vector.load %arg3[%c0_79, %c0_80, %210, %c0_81] : memref<1x1x16x96xf32, #tpu.memory_space<vmem>>, vector<1x1x2x96xf32>
    %212 = vector.shape_cast %211 : vector<1x1x2x96xf32> to vector<2x96xf32>
    %213 = arith.truncf %209 : vector<2x32xf32> to vector<2x32xbf16>
    %c0_82 = arith.constant 0 : index
    %c0_83 = arith.constant 0 : index
    %214 = vector.load %arg7[%c0_82, %c0_83] : memref<32x96xbf16, #tpu.memory_space<vmem>>, vector<32x96xbf16>
    %cst_84 = arith.constant dense<0.000000e+00> : vector<2x96xf32>
    %215 = tpu.matmul %213, %214, %cst_84 {dimension_numbers = #tpu.dot_dimension_numbers<[1], [0], [0], [1], [0, 0, 1, 1], [], []>} : vector<2x32xbf16>, vector<32x96xbf16>, vector<2x96xf32> -> vector<2x96xf32>
    %216 = arith.addf %212, %215 : vector<2x96xf32>
    %217 = arith.truncf %166 : vector<2x32xf32> to vector<2x32xbf16>
    %c0_85 = arith.constant 0 : index
    %c0_86 = arith.constant 0 : index
    %218 = vector.load %arg8[%c0_85, %c0_86] : memref<32x96xbf16, #tpu.memory_space<vmem>>, vector<32x96xbf16>
    %cst_87 = arith.constant dense<0.000000e+00> : vector<2x96xf32>
    %219 = tpu.matmul %217, %218, %cst_87 {dimension_numbers = #tpu.dot_dimension_numbers<[1], [0], [0], [1], [0, 0, 1, 1], [], []>} : vector<2x32xbf16>, vector<32x96xbf16>, vector<2x96xf32> -> vector<2x96xf32>
    %c0_88 = arith.constant 0 : index
    %c0_89 = arith.constant 0 : index
    %220 = vector.load %arg9[%c0_88, %c0_89] : memref<1x96xf32, #tpu.memory_space<vmem>>, vector<1x96xf32>
    %221 = vector.broadcast %220 : vector<1x96xf32> to vector<2x96xf32>
    %222 = arith.addf %219, %221 : vector<2x96xf32>
    %223 = vector.extract_strided_slice %216 {offsets = [0, 0], sizes = [2, 32], strides = [1, 1]} : vector<2x96xf32> to vector<2x32xf32>
    %224 = vector.extract_strided_slice %222 {offsets = [0, 0], sizes = [2, 32], strides = [1, 1]} : vector<2x96xf32> to vector<2x32xf32>
    %225 = arith.addf %223, %224 : vector<2x32xf32>
    %226 = arith.negf %225 : vector<2x32xf32>
    %227 = math.exp %226 : vector<2x32xf32>
    %cst_90 = arith.constant 1.000000e+00 : f32
    %228 = vector.broadcast %cst_90 : f32 to vector<2x32xf32>
    %229 = arith.addf %228, %227 : vector<2x32xf32>
    %230 = arith.divf %228, %229 : vector<2x32xf32>
    %231 = vector.extract_strided_slice %216 {offsets = [0, 32], sizes = [2, 32], strides = [1, 1]} : vector<2x96xf32> to vector<2x32xf32>
    %232 = vector.extract_strided_slice %222 {offsets = [0, 32], sizes = [2, 32], strides = [1, 1]} : vector<2x96xf32> to vector<2x32xf32>
    %233 = arith.addf %231, %232 : vector<2x32xf32>
    %234 = arith.negf %233 : vector<2x32xf32>
    %235 = math.exp %234 : vector<2x32xf32>
    %cst_91 = arith.constant 1.000000e+00 : f32
    %236 = vector.broadcast %cst_91 : f32 to vector<2x32xf32>
    %237 = arith.addf %236, %235 : vector<2x32xf32>
    %238 = arith.divf %236, %237 : vector<2x32xf32>
    %239 = vector.extract_strided_slice %216 {offsets = [0, 64], sizes = [2, 32], strides = [1, 1]} : vector<2x96xf32> to vector<2x32xf32>
    %240 = vector.extract_strided_slice %222 {offsets = [0, 64], sizes = [2, 32], strides = [1, 1]} : vector<2x96xf32> to vector<2x32xf32>
    %241 = arith.mulf %230, %240 : vector<2x32xf32>
    %242 = arith.addf %239, %241 : vector<2x32xf32>
    %243 = math.tanh %242 : vector<2x32xf32>
    %cst_92 = arith.constant 1.000000e+00 : f32
    %244 = vector.broadcast %cst_92 : f32 to vector<2x32xf32>
    %245 = arith.subf %244, %238 : vector<2x32xf32>
    %246 = arith.mulf %245, %243 : vector<2x32xf32>
    %247 = arith.mulf %238, %166 : vector<2x32xf32>
    %248 = arith.addf %246, %247 : vector<2x32xf32>
    %249 = arith.index_cast %170 : i32 to index
    %c0_93 = arith.constant 0 : index
    %250 = vector.load %arg21[%249, %c0_93] : memref<16x32xf32, #tpu.memory_space<vmem>>, vector<2x32xf32>
    tpu.vector_store %arg21[%249, %c0_93], %248 {strides = array<i32>} : memref<16x32xf32, #tpu.memory_space<vmem>>, vector<2x32xf32>,
    %c3_i32 = arith.constant 3 : i32
    %c2_i32_94 = arith.constant 2 : i32
    %251 = arith.muli %c3_i32, %c2_i32_94 : i32
    %252 = tpu.assume_multiple %251, 2 : i32
    %253 = arith.truncf %205 : vector<2x32xf32> to vector<2x32xbf16>
    %c0_95 = arith.constant 0 : index
    %c0_96 = arith.constant 0 : index
    %254 = vector.load %arg5[%c0_95, %c0_96] : memref<32x96xbf16, #tpu.memory_space<vmem>>, vector<32x96xbf16>
    %cst_97 = arith.constant dense<0.000000e+00> : vector<2x96xf32>
    %255 = tpu.matmul %253, %254, %cst_97 {dimension_numbers = #tpu.dot_dimension_numbers<[1], [0], [0], [1], [0, 0, 1, 1], [], []>} : vector<2x32xbf16>, vector<32x96xbf16>, vector<2x96xf32> -> vector<2x96xf32>
    %c0_98 = arith.constant 0 : index
    %c0_99 = arith.constant 0 : index
    %256 = vector.load %arg6[%c0_98, %c0_99] : memref<1x96xf32, #tpu.memory_space<vmem>>, vector<1x96xf32>
    %257 = vector.broadcast %256 : vector<1x96xf32> to vector<2x96xf32>
    %258 = arith.addf %255, %257 : vector<2x96xf32>
    %c0_100 = arith.constant 0 : index
    %c0_101 = arith.constant 0 : index
    %259 = arith.index_cast %252 : i32 to index
    %c0_102 = arith.constant 0 : index
    %260 = vector.load %arg2[%c0_100, %c0_101, %259, %c0_102] : memref<1x1x16x96xf32, #tpu.memory_space<vmem>>, vector<1x1x2x96xf32>
    %261 = vector.shape_cast %260 : vector<1x1x2x96xf32> to vector<2x96xf32>
    %262 = vector.extract_strided_slice %261 {offsets = [0, 0], sizes = [2, 32], strides = [1, 1]} : vector<2x96xf32> to vector<2x32xf32>
    %263 = vector.extract_strided_slice %258 {offsets = [0, 0], sizes = [2, 32], strides = [1, 1]} : vector<2x96xf32> to vector<2x32xf32>
    %264 = arith.addf %262, %263 : vector<2x32xf32>
    %265 = arith.negf %264 : vector<2x32xf32>
    %266 = math.exp %265 : vector<2x32xf32>
    %cst_103 = arith.constant 1.000000e+00 : f32
    %267 = vector.broadcast %cst_103 : f32 to vector<2x32xf32>
    %268 = arith.addf %267, %266 : vector<2x32xf32>
    %269 = arith.divf %267, %268 : vector<2x32xf32>
    %270 = vector.extract_strided_slice %261 {offsets = [0, 32], sizes = [2, 32], strides = [1, 1]} : vector<2x96xf32> to vector<2x32xf32>
    %271 = vector.extract_strided_slice %258 {offsets = [0, 32], sizes = [2, 32], strides = [1, 1]} : vector<2x96xf32> to vector<2x32xf32>
    %272 = arith.addf %270, %271 : vector<2x32xf32>
    %273 = arith.negf %272 : vector<2x32xf32>
    %274 = math.exp %273 : vector<2x32xf32>
    %cst_104 = arith.constant 1.000000e+00 : f32
    %275 = vector.broadcast %cst_104 : f32 to vector<2x32xf32>
    %276 = arith.addf %275, %274 : vector<2x32xf32>
    %277 = arith.divf %275, %276 : vector<2x32xf32>
    %278 = vector.extract_strided_slice %261 {offsets = [0, 64], sizes = [2, 32], strides = [1, 1]} : vector<2x96xf32> to vector<2x32xf32>
    %279 = vector.extract_strided_slice %258 {offsets = [0, 64], sizes = [2, 32], strides = [1, 1]} : vector<2x96xf32> to vector<2x32xf32>
    %280 = arith.mulf %269, %279 : vector<2x32xf32>
    %281 = arith.addf %278, %280 : vector<2x32xf32>
    %282 = math.tanh %281 : vector<2x32xf32>
    %cst_105 = arith.constant 1.000000e+00 : f32
    %283 = vector.broadcast %cst_105 : f32 to vector<2x32xf32>
    %284 = arith.subf %283, %277 : vector<2x32xf32>
    %285 = arith.mulf %284, %282 : vector<2x32xf32>
    %286 = arith.mulf %277, %205 : vector<2x32xf32>
    %287 = arith.addf %285, %286 : vector<2x32xf32>
    %c0_106 = arith.constant 0 : index
    %c0_107 = arith.constant 0 : index
    %288 = arith.index_cast %252 : i32 to index
    %c0_108 = arith.constant 0 : index
    %289 = vector.load %arg4[%c0_106, %c0_107, %288, %c0_108] : memref<1x1x16x32xf32, #tpu.memory_space<vmem>>, vector<1x1x2x32xf32>
    %290 = vector.shape_cast %289 : vector<1x1x2x32xf32> to vector<2x32xf32>
    %291 = arith.addf %287, %290 : vector<2x32xf32>
    %c0_109 = arith.constant 0 : index
    %c0_110 = arith.constant 0 : index
    %292 = arith.index_cast %252 : i32 to index
    %c0_111 = arith.constant 0 : index
    %293 = vector.load %arg3[%c0_109, %c0_110, %292, %c0_111] : memref<1x1x16x96xf32, #tpu.memory_space<vmem>>, vector<1x1x2x96xf32>
    %294 = vector.shape_cast %293 : vector<1x1x2x96xf32> to vector<2x96xf32>
    %295 = arith.truncf %291 : vector<2x32xf32> to vector<2x32xbf16>
    %c0_112 = arith.constant 0 : index
    %c0_113 = arith.constant 0 : index
    %296 = vector.load %arg7[%c0_112, %c0_113] : memref<32x96xbf16, #tpu.memory_space<vmem>>, vector<32x96xbf16>
    %cst_114 = arith.constant dense<0.000000e+00> : vector<2x96xf32>
    %297 = tpu.matmul %295, %296, %cst_114 {dimension_numbers = #tpu.dot_dimension_numbers<[1], [0], [0], [1], [0, 0, 1, 1], [], []>} : vector<2x32xbf16>, vector<32x96xbf16>, vector<2x96xf32> -> vector<2x96xf32>
    %298 = arith.addf %294, %297 : vector<2x96xf32>
    %299 = arith.truncf %248 : vector<2x32xf32> to vector<2x32xbf16>
    %c0_115 = arith.constant 0 : index
    %c0_116 = arith.constant 0 : index
    %300 = vector.load %arg8[%c0_115, %c0_116] : memref<32x96xbf16, #tpu.memory_space<vmem>>, vector<32x96xbf16>
    %cst_117 = arith.constant dense<0.000000e+00> : vector<2x96xf32>
    %301 = tpu.matmul %299, %300, %cst_117 {dimension_numbers = #tpu.dot_dimension_numbers<[1], [0], [0], [1], [0, 0, 1, 1], [], []>} : vector<2x32xbf16>, vector<32x96xbf16>, vector<2x96xf32> -> vector<2x96xf32>
    %c0_118 = arith.constant 0 : index
    %c0_119 = arith.constant 0 : index
    %302 = vector.load %arg9[%c0_118, %c0_119] : memref<1x96xf32, #tpu.memory_space<vmem>>, vector<1x96xf32>
    %303 = vector.broadcast %302 : vector<1x96xf32> to vector<2x96xf32>
    %304 = arith.addf %301, %303 : vector<2x96xf32>
    %305 = vector.extract_strided_slice %298 {offsets = [0, 0], sizes = [2, 32], strides = [1, 1]} : vector<2x96xf32> to vector<2x32xf32>
    %306 = vector.extract_strided_slice %304 {offsets = [0, 0], sizes = [2, 32], strides = [1, 1]} : vector<2x96xf32> to vector<2x32xf32>
    %307 = arith.addf %305, %306 : vector<2x32xf32>
    %308 = arith.negf %307 : vector<2x32xf32>
    %309 = math.exp %308 : vector<2x32xf32>
    %cst_120 = arith.constant 1.000000e+00 : f32
    %310 = vector.broadcast %cst_120 : f32 to vector<2x32xf32>
    %311 = arith.addf %310, %309 : vector<2x32xf32>
    %312 = arith.divf %310, %311 : vector<2x32xf32>
    %313 = vector.extract_strided_slice %298 {offsets = [0, 32], sizes = [2, 32], strides = [1, 1]} : vector<2x96xf32> to vector<2x32xf32>
    %314 = vector.extract_strided_slice %304 {offsets = [0, 32], sizes = [2, 32], strides = [1, 1]} : vector<2x96xf32> to vector<2x32xf32>
    %315 = arith.addf %313, %314 : vector<2x32xf32>
    %316 = arith.negf %315 : vector<2x32xf32>
    %317 = math.exp %316 : vector<2x32xf32>
    %cst_121 = arith.constant 1.000000e+00 : f32
    %318 = vector.broadcast %cst_121 : f32 to vector<2x32xf32>
    %319 = arith.addf %318, %317 : vector<2x32xf32>
    %320 = arith.divf %318, %319 : vector<2x32xf32>
    %321 = vector.extract_strided_slice %298 {offsets = [0, 64], sizes = [2, 32], strides = [1, 1]} : vector<2x96xf32> to vector<2x32xf32>
    %322 = vector.extract_strided_slice %304 {offsets = [0, 64], sizes = [2, 32], strides = [1, 1]} : vector<2x96xf32> to vector<2x32xf32>
    %323 = arith.mulf %312, %322 : vector<2x32xf32>
    %324 = arith.addf %321, %323 : vector<2x32xf32>
    %325 = math.tanh %324 : vector<2x32xf32>
    %cst_122 = arith.constant 1.000000e+00 : f32
    %326 = vector.broadcast %cst_122 : f32 to vector<2x32xf32>
    %327 = arith.subf %326, %320 : vector<2x32xf32>
    %328 = arith.mulf %327, %325 : vector<2x32xf32>
    %329 = arith.mulf %320, %248 : vector<2x32xf32>
    %330 = arith.addf %328, %329 : vector<2x32xf32>
    %331 = arith.index_cast %252 : i32 to index
    %c0_123 = arith.constant 0 : index
    %332 = vector.load %arg21[%331, %c0_123] : memref<16x32xf32, #tpu.memory_space<vmem>>, vector<2x32xf32>
    tpu.vector_store %arg21[%331, %c0_123], %330 {strides = array<i32>} : memref<16x32xf32, #tpu.memory_space<vmem>>, vector<2x32xf32>,
    %c4_i32 = arith.constant 4 : i32
    %c2_i32_124 = arith.constant 2 : i32
    %333 = arith.muli %c4_i32, %c2_i32_124 : i32
    %334 = tpu.assume_multiple %333, 2 : i32
    %335 = arith.truncf %287 : vector<2x32xf32> to vector<2x32xbf16>
    %c0_125 = arith.constant 0 : index
    %c0_126 = arith.constant 0 : index
    %336 = vector.load %arg5[%c0_125, %c0_126] : memref<32x96xbf16, #tpu.memory_space<vmem>>, vector<32x96xbf16>
    %cst_127 = arith.constant dense<0.000000e+00> : vector<2x96xf32>
    %337 = tpu.matmul %335, %336, %cst_127 {dimension_numbers = #tpu.dot_dimension_numbers<[1], [0], [0], [1], [0, 0, 1, 1], [], []>} : vector<2x32xbf16>, vector<32x96xbf16>, vector<2x96xf32> -> vector<2x96xf32>
    %c0_128 = arith.constant 0 : index
    %c0_129 = arith.constant 0 : index
    %338 = vector.load %arg6[%c0_128, %c0_129] : memref<1x96xf32, #tpu.memory_space<vmem>>, vector<1x96xf32>
    %339 = vector.broadcast %338 : vector<1x96xf32> to vector<2x96xf32>
    %340 = arith.addf %337, %339 : vector<2x96xf32>
    %c0_130 = arith.constant 0 : index
    %c0_131 = arith.constant 0 : index
    %341 = arith.index_cast %334 : i32 to index
    %c0_132 = arith.constant 0 : index
    %342 = vector.load %arg2[%c0_130, %c0_131, %341, %c0_132] : memref<1x1x16x96xf32, #tpu.memory_space<vmem>>, vector<1x1x2x96xf32>
    %343 = vector.shape_cast %342 : vector<1x1x2x96xf32> to vector<2x96xf32>
    %344 = vector.extract_strided_slice %343 {offsets = [0, 0], sizes = [2, 32], strides = [1, 1]} : vector<2x96xf32> to vector<2x32xf32>
    %345 = vector.extract_strided_slice %340 {offsets = [0, 0], sizes = [2, 32], strides = [1, 1]} : vector<2x96xf32> to vector<2x32xf32>
    %346 = arith.addf %344, %345 : vector<2x32xf32>
    %347 = arith.negf %346 : vector<2x32xf32>
    %348 = math.exp %347 : vector<2x32xf32>
    %cst_133 = arith.constant 1.000000e+00 : f32
    %349 = vector.broadcast %cst_133 : f32 to vector<2x32xf32>
    %350 = arith.addf %349, %348 : vector<2x32xf32>
    %351 = arith.divf %349, %350 : vector<2x32xf32>
    %352 = vector.extract_strided_slice %343 {offsets = [0, 32], sizes = [2, 32], strides = [1, 1]} : vector<2x96xf32> to vector<2x32xf32>
    %353 = vector.extract_strided_slice %340 {offsets = [0, 32], sizes = [2, 32], strides = [1, 1]} : vector<2x96xf32> to vector<2x32xf32>
    %354 = arith.addf %352, %353 : vector<2x32xf32>
    %355 = arith.negf %354 : vector<2x32xf32>
    %356 = math.exp %355 : vector<2x32xf32>
    %cst_134 = arith.constant 1.000000e+00 : f32
    %357 = vector.broadcast %cst_134 : f32 to vector<2x32xf32>
    %358 = arith.addf %357, %356 : vector<2x32xf32>
    %359 = arith.divf %357, %358 : vector<2x32xf32>
    %360 = vector.extract_strided_slice %343 {offsets = [0, 64], sizes = [2, 32], strides = [1, 1]} : vector<2x96xf32> to vector<2x32xf32>
    %361 = vector.extract_strided_slice %340 {offsets = [0, 64], sizes = [2, 32], strides = [1, 1]} : vector<2x96xf32> to vector<2x32xf32>
    %362 = arith.mulf %351, %361 : vector<2x32xf32>
    %363 = arith.addf %360, %362 : vector<2x32xf32>
    %364 = math.tanh %363 : vector<2x32xf32>
    %cst_135 = arith.constant 1.000000e+00 : f32
    %365 = vector.broadcast %cst_135 : f32 to vector<2x32xf32>
    %366 = arith.subf %365, %359 : vector<2x32xf32>
    %367 = arith.mulf %366, %364 : vector<2x32xf32>
    %368 = arith.mulf %359, %287 : vector<2x32xf32>
    %369 = arith.addf %367, %368 : vector<2x32xf32>
    %c0_136 = arith.constant 0 : index
    %c0_137 = arith.constant 0 : index
    %370 = arith.index_cast %334 : i32 to index
    %c0_138 = arith.constant 0 : index
    %371 = vector.load %arg4[%c0_136, %c0_137, %370, %c0_138] : memref<1x1x16x32xf32, #tpu.memory_space<vmem>>, vector<1x1x2x32xf32>
    %372 = vector.shape_cast %371 : vector<1x1x2x32xf32> to vector<2x32xf32>
    %373 = arith.addf %369, %372 : vector<2x32xf32>
    %c0_139 = arith.constant 0 : index
    %c0_140 = arith.constant 0 : index
    %374 = arith.index_cast %334 : i32 to index
    %c0_141 = arith.constant 0 : index
    %375 = vector.load %arg3[%c0_139, %c0_140, %374, %c0_141] : memref<1x1x16x96xf32, #tpu.memory_space<vmem>>, vector<1x1x2x96xf32>
    %376 = vector.shape_cast %375 : vector<1x1x2x96xf32> to vector<2x96xf32>
    %377 = arith.truncf %373 : vector<2x32xf32> to vector<2x32xbf16>
    %c0_142 = arith.constant 0 : index
    %c0_143 = arith.constant 0 : index
    %378 = vector.load %arg7[%c0_142, %c0_143] : memref<32x96xbf16, #tpu.memory_space<vmem>>, vector<32x96xbf16>
    %cst_144 = arith.constant dense<0.000000e+00> : vector<2x96xf32>
    %379 = tpu.matmul %377, %378, %cst_144 {dimension_numbers = #tpu.dot_dimension_numbers<[1], [0], [0], [1], [0, 0, 1, 1], [], []>} : vector<2x32xbf16>, vector<32x96xbf16>, vector<2x96xf32> -> vector<2x96xf32>
    %380 = arith.addf %376, %379 : vector<2x96xf32>
    %381 = arith.truncf %330 : vector<2x32xf32> to vector<2x32xbf16>
    %c0_145 = arith.constant 0 : index
    %c0_146 = arith.constant 0 : index
    %382 = vector.load %arg8[%c0_145, %c0_146] : memref<32x96xbf16, #tpu.memory_space<vmem>>, vector<32x96xbf16>
    %cst_147 = arith.constant dense<0.000000e+00> : vector<2x96xf32>
    %383 = tpu.matmul %381, %382, %cst_147 {dimension_numbers = #tpu.dot_dimension_numbers<[1], [0], [0], [1], [0, 0, 1, 1], [], []>} : vector<2x32xbf16>, vector<32x96xbf16>, vector<2x96xf32> -> vector<2x96xf32>
    %c0_148 = arith.constant 0 : index
    %c0_149 = arith.constant 0 : index
    %384 = vector.load %arg9[%c0_148, %c0_149] : memref<1x96xf32, #tpu.memory_space<vmem>>, vector<1x96xf32>
    %385 = vector.broadcast %384 : vector<1x96xf32> to vector<2x96xf32>
    %386 = arith.addf %383, %385 : vector<2x96xf32>
    %387 = vector.extract_strided_slice %380 {offsets = [0, 0], sizes = [2, 32], strides = [1, 1]} : vector<2x96xf32> to vector<2x32xf32>
    %388 = vector.extract_strided_slice %386 {offsets = [0, 0], sizes = [2, 32], strides = [1, 1]} : vector<2x96xf32> to vector<2x32xf32>
    %389 = arith.addf %387, %388 : vector<2x32xf32>
    %390 = arith.negf %389 : vector<2x32xf32>
    %391 = math.exp %390 : vector<2x32xf32>
    %cst_150 = arith.constant 1.000000e+00 : f32
    %392 = vector.broadcast %cst_150 : f32 to vector<2x32xf32>
    %393 = arith.addf %392, %391 : vector<2x32xf32>
    %394 = arith.divf %392, %393 : vector<2x32xf32>
    %395 = vector.extract_strided_slice %380 {offsets = [0, 32], sizes = [2, 32], strides = [1, 1]} : vector<2x96xf32> to vector<2x32xf32>
    %396 = vector.extract_strided_slice %386 {offsets = [0, 32], sizes = [2, 32], strides = [1, 1]} : vector<2x96xf32> to vector<2x32xf32>
    %397 = arith.addf %395, %396 : vector<2x32xf32>
    %398 = arith.negf %397 : vector<2x32xf32>
    %399 = math.exp %398 : vector<2x32xf32>
    %cst_151 = arith.constant 1.000000e+00 : f32
    %400 = vector.broadcast %cst_151 : f32 to vector<2x32xf32>
    %401 = arith.addf %400, %399 : vector<2x32xf32>
    %402 = arith.divf %400, %401 : vector<2x32xf32>
    %403 = vector.extract_strided_slice %380 {offsets = [0, 64], sizes = [2, 32], strides = [1, 1]} : vector<2x96xf32> to vector<2x32xf32>
    %404 = vector.extract_strided_slice %386 {offsets = [0, 64], sizes = [2, 32], strides = [1, 1]} : vector<2x96xf32> to vector<2x32xf32>
    %405 = arith.mulf %394, %404 : vector<2x32xf32>
    %406 = arith.addf %403, %405 : vector<2x32xf32>
    %407 = math.tanh %406 : vector<2x32xf32>
    %cst_152 = arith.constant 1.000000e+00 : f32
    %408 = vector.broadcast %cst_152 : f32 to vector<2x32xf32>
    %409 = arith.subf %408, %402 : vector<2x32xf32>
    %410 = arith.mulf %409, %407 : vector<2x32xf32>
    %411 = arith.mulf %402, %330 : vector<2x32xf32>
    %412 = arith.addf %410, %411 : vector<2x32xf32>
    %413 = arith.index_cast %334 : i32 to index
    %c0_153 = arith.constant 0 : index
    %414 = vector.load %arg21[%413, %c0_153] : memref<16x32xf32, #tpu.memory_space<vmem>>, vector<2x32xf32>
    tpu.vector_store %arg21[%413, %c0_153], %412 {strides = array<i32>} : memref<16x32xf32, #tpu.memory_space<vmem>>, vector<2x32xf32>,
    %c5_i32 = arith.constant 5 : i32
    %c2_i32_154 = arith.constant 2 : i32
    %415 = arith.muli %c5_i32, %c2_i32_154 : i32
    %416 = tpu.assume_multiple %415, 2 : i32
    %417 = arith.truncf %369 : vector<2x32xf32> to vector<2x32xbf16>
    %c0_155 = arith.constant 0 : index
    %c0_156 = arith.constant 0 : index
    %418 = vector.load %arg5[%c0_155, %c0_156] : memref<32x96xbf16, #tpu.memory_space<vmem>>, vector<32x96xbf16>
    %cst_157 = arith.constant dense<0.000000e+00> : vector<2x96xf32>
    %419 = tpu.matmul %417, %418, %cst_157 {dimension_numbers = #tpu.dot_dimension_numbers<[1], [0], [0], [1], [0, 0, 1, 1], [], []>} : vector<2x32xbf16>, vector<32x96xbf16>, vector<2x96xf32> -> vector<2x96xf32>
    %c0_158 = arith.constant 0 : index
    %c0_159 = arith.constant 0 : index
    %420 = vector.load %arg6[%c0_158, %c0_159] : memref<1x96xf32, #tpu.memory_space<vmem>>, vector<1x96xf32>
    %421 = vector.broadcast %420 : vector<1x96xf32> to vector<2x96xf32>
    %422 = arith.addf %419, %421 : vector<2x96xf32>
    %c0_160 = arith.constant 0 : index
    %c0_161 = arith.constant 0 : index
    %423 = arith.index_cast %416 : i32 to index
    %c0_162 = arith.constant 0 : index
    %424 = vector.load %arg2[%c0_160, %c0_161, %423, %c0_162] : memref<1x1x16x96xf32, #tpu.memory_space<vmem>>, vector<1x1x2x96xf32>
    %425 = vector.shape_cast %424 : vector<1x1x2x96xf32> to vector<2x96xf32>
    %426 = vector.extract_strided_slice %425 {offsets = [0, 0], sizes = [2, 32], strides = [1, 1]} : vector<2x96xf32> to vector<2x32xf32>
    %427 = vector.extract_strided_slice %422 {offsets = [0, 0], sizes = [2, 32], strides = [1, 1]} : vector<2x96xf32> to vector<2x32xf32>
    %428 = arith.addf %426, %427 : vector<2x32xf32>
    %429 = arith.negf %428 : vector<2x32xf32>
    %430 = math.exp %429 : vector<2x32xf32>
    %cst_163 = arith.constant 1.000000e+00 : f32
    %431 = vector.broadcast %cst_163 : f32 to vector<2x32xf32>
    %432 = arith.addf %431, %430 : vector<2x32xf32>
    %433 = arith.divf %431, %432 : vector<2x32xf32>
    %434 = vector.extract_strided_slice %425 {offsets = [0, 32], sizes = [2, 32], strides = [1, 1]} : vector<2x96xf32> to vector<2x32xf32>
    %435 = vector.extract_strided_slice %422 {offsets = [0, 32], sizes = [2, 32], strides = [1, 1]} : vector<2x96xf32> to vector<2x32xf32>
    %436 = arith.addf %434, %435 : vector<2x32xf32>
    %437 = arith.negf %436 : vector<2x32xf32>
    %438 = math.exp %437 : vector<2x32xf32>
    %cst_164 = arith.constant 1.000000e+00 : f32
    %439 = vector.broadcast %cst_164 : f32 to vector<2x32xf32>
    %440 = arith.addf %439, %438 : vector<2x32xf32>
    %441 = arith.divf %439, %440 : vector<2x32xf32>
    %442 = vector.extract_strided_slice %425 {offsets = [0, 64], sizes = [2, 32], strides = [1, 1]} : vector<2x96xf32> to vector<2x32xf32>
    %443 = vector.extract_strided_slice %422 {offsets = [0, 64], sizes = [2, 32], strides = [1, 1]} : vector<2x96xf32> to vector<2x32xf32>
    %444 = arith.mulf %433, %443 : vector<2x32xf32>
    %445 = arith.addf %442, %444 : vector<2x32xf32>
    %446 = math.tanh %445 : vector<2x32xf32>
    %cst_165 = arith.constant 1.000000e+00 : f32
    %447 = vector.broadcast %cst_165 : f32 to vector<2x32xf32>
    %448 = arith.subf %447, %441 : vector<2x32xf32>
    %449 = arith.mulf %448, %446 : vector<2x32xf32>
    %450 = arith.mulf %441, %369 : vector<2x32xf32>
    %451 = arith.addf %449, %450 : vector<2x32xf32>
    %c0_166 = arith.constant 0 : index
    %c0_167 = arith.constant 0 : index
    %452 = arith.index_cast %416 : i32 to index
    %c0_168 = arith.constant 0 : index
    %453 = vector.load %arg4[%c0_166, %c0_167, %452, %c0_168] : memref<1x1x16x32xf32, #tpu.memory_space<vmem>>, vector<1x1x2x32xf32>
    %454 = vector.shape_cast %453 : vector<1x1x2x32xf32> to vector<2x32xf32>
    %455 = arith.addf %451, %454 : vector<2x32xf32>
    %c0_169 = arith.constant 0 : index
    %c0_170 = arith.constant 0 : index
    %456 = arith.index_cast %416 : i32 to index
    %c0_171 = arith.constant 0 : index
    %457 = vector.load %arg3[%c0_169, %c0_170, %456, %c0_171] : memref<1x1x16x96xf32, #tpu.memory_space<vmem>>, vector<1x1x2x96xf32>
    %458 = vector.shape_cast %457 : vector<1x1x2x96xf32> to vector<2x96xf32>
    %459 = arith.truncf %455 : vector<2x32xf32> to vector<2x32xbf16>
    %c0_172 = arith.constant 0 : index
    %c0_173 = arith.constant 0 : index
    %460 = vector.load %arg7[%c0_172, %c0_173] : memref<32x96xbf16, #tpu.memory_space<vmem>>, vector<32x96xbf16>
    %cst_174 = arith.constant dense<0.000000e+00> : vector<2x96xf32>
    %461 = tpu.matmul %459, %460, %cst_174 {dimension_numbers = #tpu.dot_dimension_numbers<[1], [0], [0], [1], [0, 0, 1, 1], [], []>} : vector<2x32xbf16>, vector<32x96xbf16>, vector<2x96xf32> -> vector<2x96xf32>
    %462 = arith.addf %458, %461 : vector<2x96xf32>
    %463 = arith.truncf %412 : vector<2x32xf32> to vector<2x32xbf16>
    %c0_175 = arith.constant 0 : index
    %c0_176 = arith.constant 0 : index
    %464 = vector.load %arg8[%c0_175, %c0_176] : memref<32x96xbf16, #tpu.memory_space<vmem>>, vector<32x96xbf16>
    %cst_177 = arith.constant dense<0.000000e+00> : vector<2x96xf32>
    %465 = tpu.matmul %463, %464, %cst_177 {dimension_numbers = #tpu.dot_dimension_numbers<[1], [0], [0], [1], [0, 0, 1, 1], [], []>} : vector<2x32xbf16>, vector<32x96xbf16>, vector<2x96xf32> -> vector<2x96xf32>
    %c0_178 = arith.constant 0 : index
    %c0_179 = arith.constant 0 : index
    %466 = vector.load %arg9[%c0_178, %c0_179] : memref<1x96xf32, #tpu.memory_space<vmem>>, vector<1x96xf32>
    %467 = vector.broadcast %466 : vector<1x96xf32> to vector<2x96xf32>
    %468 = arith.addf %465, %467 : vector<2x96xf32>
    %469 = vector.extract_strided_slice %462 {offsets = [0, 0], sizes = [2, 32], strides = [1, 1]} : vector<2x96xf32> to vector<2x32xf32>
    %470 = vector.extract_strided_slice %468 {offsets = [0, 0], sizes = [2, 32], strides = [1, 1]} : vector<2x96xf32> to vector<2x32xf32>
    %471 = arith.addf %469, %470 : vector<2x32xf32>
    %472 = arith.negf %471 : vector<2x32xf32>
    %473 = math.exp %472 : vector<2x32xf32>
    %cst_180 = arith.constant 1.000000e+00 : f32
    %474 = vector.broadcast %cst_180 : f32 to vector<2x32xf32>
    %475 = arith.addf %474, %473 : vector<2x32xf32>
    %476 = arith.divf %474, %475 : vector<2x32xf32>
    %477 = vector.extract_strided_slice %462 {offsets = [0, 32], sizes = [2, 32], strides = [1, 1]} : vector<2x96xf32> to vector<2x32xf32>
    %478 = vector.extract_strided_slice %468 {offsets = [0, 32], sizes = [2, 32], strides = [1, 1]} : vector<2x96xf32> to vector<2x32xf32>
    %479 = arith.addf %477, %478 : vector<2x32xf32>
    %480 = arith.negf %479 : vector<2x32xf32>
    %481 = math.exp %480 : vector<2x32xf32>
    %cst_181 = arith.constant 1.000000e+00 : f32
    %482 = vector.broadcast %cst_181 : f32 to vector<2x32xf32>
    %483 = arith.addf %482, %481 : vector<2x32xf32>
    %484 = arith.divf %482, %483 : vector<2x32xf32>
    %485 = vector.extract_strided_slice %462 {offsets = [0, 64], sizes = [2, 32], strides = [1, 1]} : vector<2x96xf32> to vector<2x32xf32>
    %486 = vector.extract_strided_slice %468 {offsets = [0, 64], sizes = [2, 32], strides = [1, 1]} : vector<2x96xf32> to vector<2x32xf32>
    %487 = arith.mulf %476, %486 : vector<2x32xf32>
    %488 = arith.addf %485, %487 : vector<2x32xf32>
    %489 = math.tanh %488 : vector<2x32xf32>
    %cst_182 = arith.constant 1.000000e+00 : f32
    %490 = vector.broadcast %cst_182 : f32 to vector<2x32xf32>
    %491 = arith.subf %490, %484 : vector<2x32xf32>
    %492 = arith.mulf %491, %489 : vector<2x32xf32>
    %493 = arith.mulf %484, %412 : vector<2x32xf32>
    %494 = arith.addf %492, %493 : vector<2x32xf32>
    %495 = arith.index_cast %416 : i32 to index
    %c0_183 = arith.constant 0 : index
    %496 = vector.load %arg21[%495, %c0_183] : memref<16x32xf32, #tpu.memory_space<vmem>>, vector<2x32xf32>
    tpu.vector_store %arg21[%495, %c0_183], %494 {strides = array<i32>} : memref<16x32xf32, #tpu.memory_space<vmem>>, vector<2x32xf32>,
    %c6_i32 = arith.constant 6 : i32
    %c2_i32_184 = arith.constant 2 : i32
    %497 = arith.muli %c6_i32, %c2_i32_184 : i32
    %498 = tpu.assume_multiple %497, 2 : i32
    %499 = arith.truncf %451 : vector<2x32xf32> to vector<2x32xbf16>
    %c0_185 = arith.constant 0 : index
    %c0_186 = arith.constant 0 : index
    %500 = vector.load %arg5[%c0_185, %c0_186] : memref<32x96xbf16, #tpu.memory_space<vmem>>, vector<32x96xbf16>
    %cst_187 = arith.constant dense<0.000000e+00> : vector<2x96xf32>
    %501 = tpu.matmul %499, %500, %cst_187 {dimension_numbers = #tpu.dot_dimension_numbers<[1], [0], [0], [1], [0, 0, 1, 1], [], []>} : vector<2x32xbf16>, vector<32x96xbf16>, vector<2x96xf32> -> vector<2x96xf32>
    %c0_188 = arith.constant 0 : index
    %c0_189 = arith.constant 0 : index
    %502 = vector.load %arg6[%c0_188, %c0_189] : memref<1x96xf32, #tpu.memory_space<vmem>>, vector<1x96xf32>
    %503 = vector.broadcast %502 : vector<1x96xf32> to vector<2x96xf32>
    %504 = arith.addf %501, %503 : vector<2x96xf32>
    %c0_190 = arith.constant 0 : index
    %c0_191 = arith.constant 0 : index
    %505 = arith.index_cast %498 : i32 to index
    %c0_192 = arith.constant 0 : index
    %506 = vector.load %arg2[%c0_190, %c0_191, %505, %c0_192] : memref<1x1x16x96xf32, #tpu.memory_space<vmem>>, vector<1x1x2x96xf32>
    %507 = vector.shape_cast %506 : vector<1x1x2x96xf32> to vector<2x96xf32>
    %508 = vector.extract_strided_slice %507 {offsets = [0, 0], sizes = [2, 32], strides = [1, 1]} : vector<2x96xf32> to vector<2x32xf32>
    %509 = vector.extract_strided_slice %504 {offsets = [0, 0], sizes = [2, 32], strides = [1, 1]} : vector<2x96xf32> to vector<2x32xf32>
    %510 = arith.addf %508, %509 : vector<2x32xf32>
    %511 = arith.negf %510 : vector<2x32xf32>
    %512 = math.exp %511 : vector<2x32xf32>
    %cst_193 = arith.constant 1.000000e+00 : f32
    %513 = vector.broadcast %cst_193 : f32 to vector<2x32xf32>
    %514 = arith.addf %513, %512 : vector<2x32xf32>
    %515 = arith.divf %513, %514 : vector<2x32xf32>
    %516 = vector.extract_strided_slice %507 {offsets = [0, 32], sizes = [2, 32], strides = [1, 1]} : vector<2x96xf32> to vector<2x32xf32>
    %517 = vector.extract_strided_slice %504 {offsets = [0, 32], sizes = [2, 32], strides = [1, 1]} : vector<2x96xf32> to vector<2x32xf32>
    %518 = arith.addf %516, %517 : vector<2x32xf32>
    %519 = arith.negf %518 : vector<2x32xf32>
    %520 = math.exp %519 : vector<2x32xf32>
    %cst_194 = arith.constant 1.000000e+00 : f32
    %521 = vector.broadcast %cst_194 : f32 to vector<2x32xf32>
    %522 = arith.addf %521, %520 : vector<2x32xf32>
    %523 = arith.divf %521, %522 : vector<2x32xf32>
    %524 = vector.extract_strided_slice %507 {offsets = [0, 64], sizes = [2, 32], strides = [1, 1]} : vector<2x96xf32> to vector<2x32xf32>
    %525 = vector.extract_strided_slice %504 {offsets = [0, 64], sizes = [2, 32], strides = [1, 1]} : vector<2x96xf32> to vector<2x32xf32>
    %526 = arith.mulf %515, %525 : vector<2x32xf32>
    %527 = arith.addf %524, %526 : vector<2x32xf32>
    %528 = math.tanh %527 : vector<2x32xf32>
    %cst_195 = arith.constant 1.000000e+00 : f32
    %529 = vector.broadcast %cst_195 : f32 to vector<2x32xf32>
    %530 = arith.subf %529, %523 : vector<2x32xf32>
    %531 = arith.mulf %530, %528 : vector<2x32xf32>
    %532 = arith.mulf %523, %451 : vector<2x32xf32>
    %533 = arith.addf %531, %532 : vector<2x32xf32>
    %c0_196 = arith.constant 0 : index
    %c0_197 = arith.constant 0 : index
    %534 = arith.index_cast %498 : i32 to index
    %c0_198 = arith.constant 0 : index
    %535 = vector.load %arg4[%c0_196, %c0_197, %534, %c0_198] : memref<1x1x16x32xf32, #tpu.memory_space<vmem>>, vector<1x1x2x32xf32>
    %536 = vector.shape_cast %535 : vector<1x1x2x32xf32> to vector<2x32xf32>
    %537 = arith.addf %533, %536 : vector<2x32xf32>
    %c0_199 = arith.constant 0 : index
    %c0_200 = arith.constant 0 : index
    %538 = arith.index_cast %498 : i32 to index
    %c0_201 = arith.constant 0 : index
    %539 = vector.load %arg3[%c0_199, %c0_200, %538, %c0_201] : memref<1x1x16x96xf32, #tpu.memory_space<vmem>>, vector<1x1x2x96xf32>
    %540 = vector.shape_cast %539 : vector<1x1x2x96xf32> to vector<2x96xf32>
    %541 = arith.truncf %537 : vector<2x32xf32> to vector<2x32xbf16>
    %c0_202 = arith.constant 0 : index
    %c0_203 = arith.constant 0 : index
    %542 = vector.load %arg7[%c0_202, %c0_203] : memref<32x96xbf16, #tpu.memory_space<vmem>>, vector<32x96xbf16>
    %cst_204 = arith.constant dense<0.000000e+00> : vector<2x96xf32>
    %543 = tpu.matmul %541, %542, %cst_204 {dimension_numbers = #tpu.dot_dimension_numbers<[1], [0], [0], [1], [0, 0, 1, 1], [], []>} : vector<2x32xbf16>, vector<32x96xbf16>, vector<2x96xf32> -> vector<2x96xf32>
    %544 = arith.addf %540, %543 : vector<2x96xf32>
    %545 = arith.truncf %494 : vector<2x32xf32> to vector<2x32xbf16>
    %c0_205 = arith.constant 0 : index
    %c0_206 = arith.constant 0 : index
    %546 = vector.load %arg8[%c0_205, %c0_206] : memref<32x96xbf16, #tpu.memory_space<vmem>>, vector<32x96xbf16>
    %cst_207 = arith.constant dense<0.000000e+00> : vector<2x96xf32>
    %547 = tpu.matmul %545, %546, %cst_207 {dimension_numbers = #tpu.dot_dimension_numbers<[1], [0], [0], [1], [0, 0, 1, 1], [], []>} : vector<2x32xbf16>, vector<32x96xbf16>, vector<2x96xf32> -> vector<2x96xf32>
    %c0_208 = arith.constant 0 : index
    %c0_209 = arith.constant 0 : index
    %548 = vector.load %arg9[%c0_208, %c0_209] : memref<1x96xf32, #tpu.memory_space<vmem>>, vector<1x96xf32>
    %549 = vector.broadcast %548 : vector<1x96xf32> to vector<2x96xf32>
    %550 = arith.addf %547, %549 : vector<2x96xf32>
    %551 = vector.extract_strided_slice %544 {offsets = [0, 0], sizes = [2, 32], strides = [1, 1]} : vector<2x96xf32> to vector<2x32xf32>
    %552 = vector.extract_strided_slice %550 {offsets = [0, 0], sizes = [2, 32], strides = [1, 1]} : vector<2x96xf32> to vector<2x32xf32>
    %553 = arith.addf %551, %552 : vector<2x32xf32>
    %554 = arith.negf %553 : vector<2x32xf32>
    %555 = math.exp %554 : vector<2x32xf32>
    %cst_210 = arith.constant 1.000000e+00 : f32
    %556 = vector.broadcast %cst_210 : f32 to vector<2x32xf32>
    %557 = arith.addf %556, %555 : vector<2x32xf32>
    %558 = arith.divf %556, %557 : vector<2x32xf32>
    %559 = vector.extract_strided_slice %544 {offsets = [0, 32], sizes = [2, 32], strides = [1, 1]} : vector<2x96xf32> to vector<2x32xf32>
    %560 = vector.extract_strided_slice %550 {offsets = [0, 32], sizes = [2, 32], strides = [1, 1]} : vector<2x96xf32> to vector<2x32xf32>
    %561 = arith.addf %559, %560 : vector<2x32xf32>
    %562 = arith.negf %561 : vector<2x32xf32>
    %563 = math.exp %562 : vector<2x32xf32>
    %cst_211 = arith.constant 1.000000e+00 : f32
    %564 = vector.broadcast %cst_211 : f32 to vector<2x32xf32>
    %565 = arith.addf %564, %563 : vector<2x32xf32>
    %566 = arith.divf %564, %565 : vector<2x32xf32>
    %567 = vector.extract_strided_slice %544 {offsets = [0, 64], sizes = [2, 32], strides = [1, 1]} : vector<2x96xf32> to vector<2x32xf32>
    %568 = vector.extract_strided_slice %550 {offsets = [0, 64], sizes = [2, 32], strides = [1, 1]} : vector<2x96xf32> to vector<2x32xf32>
    %569 = arith.mulf %558, %568 : vector<2x32xf32>
    %570 = arith.addf %567, %569 : vector<2x32xf32>
    %571 = math.tanh %570 : vector<2x32xf32>
    %cst_212 = arith.constant 1.000000e+00 : f32
    %572 = vector.broadcast %cst_212 : f32 to vector<2x32xf32>
    %573 = arith.subf %572, %566 : vector<2x32xf32>
    %574 = arith.mulf %573, %571 : vector<2x32xf32>
    %575 = arith.mulf %566, %494 : vector<2x32xf32>
    %576 = arith.addf %574, %575 : vector<2x32xf32>
    %577 = arith.index_cast %498 : i32 to index
    %c0_213 = arith.constant 0 : index
    %578 = vector.load %arg21[%577, %c0_213] : memref<16x32xf32, #tpu.memory_space<vmem>>, vector<2x32xf32>
    tpu.vector_store %arg21[%577, %c0_213], %576 {strides = array<i32>} : memref<16x32xf32, #tpu.memory_space<vmem>>, vector<2x32xf32>,
    %c7_i32 = arith.constant 7 : i32
    %c2_i32_214 = arith.constant 2 : i32
    %579 = arith.muli %c7_i32, %c2_i32_214 : i32
    %580 = tpu.assume_multiple %579, 2 : i32
    %581 = arith.truncf %533 : vector<2x32xf32> to vector<2x32xbf16>
    %c0_215 = arith.constant 0 : index
    %c0_216 = arith.constant 0 : index
    %582 = vector.load %arg5[%c0_215, %c0_216] : memref<32x96xbf16, #tpu.memory_space<vmem>>, vector<32x96xbf16>
    %cst_217 = arith.constant dense<0.000000e+00> : vector<2x96xf32>
    %583 = tpu.matmul %581, %582, %cst_217 {dimension_numbers = #tpu.dot_dimension_numbers<[1], [0], [0], [1], [0, 0, 1, 1], [], []>} : vector<2x32xbf16>, vector<32x96xbf16>, vector<2x96xf32> -> vector<2x96xf32>
    %c0_218 = arith.constant 0 : index
    %c0_219 = arith.constant 0 : index
    %584 = vector.load %arg6[%c0_218, %c0_219] : memref<1x96xf32, #tpu.memory_space<vmem>>, vector<1x96xf32>
    %585 = vector.broadcast %584 : vector<1x96xf32> to vector<2x96xf32>
    %586 = arith.addf %583, %585 : vector<2x96xf32>
    %c0_220 = arith.constant 0 : index
    %c0_221 = arith.constant 0 : index
    %587 = arith.index_cast %580 : i32 to index
    %c0_222 = arith.constant 0 : index
    %588 = vector.load %arg2[%c0_220, %c0_221, %587, %c0_222] : memref<1x1x16x96xf32, #tpu.memory_space<vmem>>, vector<1x1x2x96xf32>
    %589 = vector.shape_cast %588 : vector<1x1x2x96xf32> to vector<2x96xf32>
    %590 = vector.extract_strided_slice %589 {offsets = [0, 0], sizes = [2, 32], strides = [1, 1]} : vector<2x96xf32> to vector<2x32xf32>
    %591 = vector.extract_strided_slice %586 {offsets = [0, 0], sizes = [2, 32], strides = [1, 1]} : vector<2x96xf32> to vector<2x32xf32>
    %592 = arith.addf %590, %591 : vector<2x32xf32>
    %593 = arith.negf %592 : vector<2x32xf32>
    %594 = math.exp %593 : vector<2x32xf32>
    %cst_223 = arith.constant 1.000000e+00 : f32
    %595 = vector.broadcast %cst_223 : f32 to vector<2x32xf32>
    %596 = arith.addf %595, %594 : vector<2x32xf32>
    %597 = arith.divf %595, %596 : vector<2x32xf32>
    %598 = vector.extract_strided_slice %589 {offsets = [0, 32], sizes = [2, 32], strides = [1, 1]} : vector<2x96xf32> to vector<2x32xf32>
    %599 = vector.extract_strided_slice %586 {offsets = [0, 32], sizes = [2, 32], strides = [1, 1]} : vector<2x96xf32> to vector<2x32xf32>
    %600 = arith.addf %598, %599 : vector<2x32xf32>
    %601 = arith.negf %600 : vector<2x32xf32>
    %602 = math.exp %601 : vector<2x32xf32>
    %cst_224 = arith.constant 1.000000e+00 : f32
    %603 = vector.broadcast %cst_224 : f32 to vector<2x32xf32>
    %604 = arith.addf %603, %602 : vector<2x32xf32>
    %605 = arith.divf %603, %604 : vector<2x32xf32>
    %606 = vector.extract_strided_slice %589 {offsets = [0, 64], sizes = [2, 32], strides = [1, 1]} : vector<2x96xf32> to vector<2x32xf32>
    %607 = vector.extract_strided_slice %586 {offsets = [0, 64], sizes = [2, 32], strides = [1, 1]} : vector<2x96xf32> to vector<2x32xf32>
    %608 = arith.mulf %597, %607 : vector<2x32xf32>
    %609 = arith.addf %606, %608 : vector<2x32xf32>
    %610 = math.tanh %609 : vector<2x32xf32>
    %cst_225 = arith.constant 1.000000e+00 : f32
    %611 = vector.broadcast %cst_225 : f32 to vector<2x32xf32>
    %612 = arith.subf %611, %605 : vector<2x32xf32>
    %613 = arith.mulf %612, %610 : vector<2x32xf32>
    %614 = arith.mulf %605, %533 : vector<2x32xf32>
    %615 = arith.addf %613, %614 : vector<2x32xf32>
    %c0_226 = arith.constant 0 : index
    %c0_227 = arith.constant 0 : index
    %616 = arith.index_cast %580 : i32 to index
    %c0_228 = arith.constant 0 : index
    %617 = vector.load %arg4[%c0_226, %c0_227, %616, %c0_228] : memref<1x1x16x32xf32, #tpu.memory_space<vmem>>, vector<1x1x2x32xf32>
    %618 = vector.shape_cast %617 : vector<1x1x2x32xf32> to vector<2x32xf32>
    %619 = arith.addf %615, %618 : vector<2x32xf32>
    %c0_229 = arith.constant 0 : index
    %c0_230 = arith.constant 0 : index
    %620 = arith.index_cast %580 : i32 to index
    %c0_231 = arith.constant 0 : index
    %621 = vector.load %arg3[%c0_229, %c0_230, %620, %c0_231] : memref<1x1x16x96xf32, #tpu.memory_space<vmem>>, vector<1x1x2x96xf32>
    %622 = vector.shape_cast %621 : vector<1x1x2x96xf32> to vector<2x96xf32>
    %623 = arith.truncf %619 : vector<2x32xf32> to vector<2x32xbf16>
    %c0_232 = arith.constant 0 : index
    %c0_233 = arith.constant 0 : index
    %624 = vector.load %arg7[%c0_232, %c0_233] : memref<32x96xbf16, #tpu.memory_space<vmem>>, vector<32x96xbf16>
    %cst_234 = arith.constant dense<0.000000e+00> : vector<2x96xf32>
    %625 = tpu.matmul %623, %624, %cst_234 {dimension_numbers = #tpu.dot_dimension_numbers<[1], [0], [0], [1], [0, 0, 1, 1], [], []>} : vector<2x32xbf16>, vector<32x96xbf16>, vector<2x96xf32> -> vector<2x96xf32>
    %626 = arith.addf %622, %625 : vector<2x96xf32>
    %627 = arith.truncf %576 : vector<2x32xf32> to vector<2x32xbf16>
    %c0_235 = arith.constant 0 : index
    %c0_236 = arith.constant 0 : index
    %628 = vector.load %arg8[%c0_235, %c0_236] : memref<32x96xbf16, #tpu.memory_space<vmem>>, vector<32x96xbf16>
    %cst_237 = arith.constant dense<0.000000e+00> : vector<2x96xf32>
    %629 = tpu.matmul %627, %628, %cst_237 {dimension_numbers = #tpu.dot_dimension_numbers<[1], [0], [0], [1], [0, 0, 1, 1], [], []>} : vector<2x32xbf16>, vector<32x96xbf16>, vector<2x96xf32> -> vector<2x96xf32>
    %c0_238 = arith.constant 0 : index
    %c0_239 = arith.constant 0 : index
    %630 = vector.load %arg9[%c0_238, %c0_239] : memref<1x96xf32, #tpu.memory_space<vmem>>, vector<1x96xf32>
    %631 = vector.broadcast %630 : vector<1x96xf32> to vector<2x96xf32>
    %632 = arith.addf %629, %631 : vector<2x96xf32>
    %633 = vector.extract_strided_slice %626 {offsets = [0, 0], sizes = [2, 32], strides = [1, 1]} : vector<2x96xf32> to vector<2x32xf32>
    %634 = vector.extract_strided_slice %632 {offsets = [0, 0], sizes = [2, 32], strides = [1, 1]} : vector<2x96xf32> to vector<2x32xf32>
    %635 = arith.addf %633, %634 : vector<2x32xf32>
    %636 = arith.negf %635 : vector<2x32xf32>
    %637 = math.exp %636 : vector<2x32xf32>
    %cst_240 = arith.constant 1.000000e+00 : f32
    %638 = vector.broadcast %cst_240 : f32 to vector<2x32xf32>
    %639 = arith.addf %638, %637 : vector<2x32xf32>
    %640 = arith.divf %638, %639 : vector<2x32xf32>
    %641 = vector.extract_strided_slice %626 {offsets = [0, 32], sizes = [2, 32], strides = [1, 1]} : vector<2x96xf32> to vector<2x32xf32>
    %642 = vector.extract_strided_slice %632 {offsets = [0, 32], sizes = [2, 32], strides = [1, 1]} : vector<2x96xf32> to vector<2x32xf32>
    %643 = arith.addf %641, %642 : vector<2x32xf32>
    %644 = arith.negf %643 : vector<2x32xf32>
    %645 = math.exp %644 : vector<2x32xf32>
    %cst_241 = arith.constant 1.000000e+00 : f32
    %646 = vector.broadcast %cst_241 : f32 to vector<2x32xf32>
    %647 = arith.addf %646, %645 : vector<2x32xf32>
    %648 = arith.divf %646, %647 : vector<2x32xf32>
    %649 = vector.extract_strided_slice %626 {offsets = [0, 64], sizes = [2, 32], strides = [1, 1]} : vector<2x96xf32> to vector<2x32xf32>
    %650 = vector.extract_strided_slice %632 {offsets = [0, 64], sizes = [2, 32], strides = [1, 1]} : vector<2x96xf32> to vector<2x32xf32>
    %651 = arith.mulf %640, %650 : vector<2x32xf32>
    %652 = arith.addf %649, %651 : vector<2x32xf32>
    %653 = math.tanh %652 : vector<2x32xf32>
    %cst_242 = arith.constant 1.000000e+00 : f32
    %654 = vector.broadcast %cst_242 : f32 to vector<2x32xf32>
    %655 = arith.subf %654, %648 : vector<2x32xf32>
    %656 = arith.mulf %655, %653 : vector<2x32xf32>
    %657 = arith.mulf %648, %576 : vector<2x32xf32>
    %658 = arith.addf %656, %657 : vector<2x32xf32>
    %659 = arith.index_cast %580 : i32 to index
    %c0_243 = arith.constant 0 : index
    %660 = vector.load %arg21[%659, %c0_243] : memref<16x32xf32, #tpu.memory_space<vmem>>, vector<2x32xf32>
    tpu.vector_store %arg21[%659, %c0_243], %658 {strides = array<i32>} : memref<16x32xf32, #tpu.memory_space<vmem>>, vector<2x32xf32>,
    %c8_i32 = arith.constant 8 : i32
    %c0_244 = arith.constant 0 : index
    %c0_245 = arith.constant 0 : index
    %661 = vector.load %arg19[%c0_244, %c0_245] : memref<2x32xf32, #tpu.memory_space<vmem>>, vector<2x32xf32>
    tpu.vector_store %arg19[%c0_244, %c0_245], %615 {strides = array<i32>} : memref<2x32xf32, #tpu.memory_space<vmem>>, vector<2x32xf32>,
    %c0_246 = arith.constant 0 : index
    %c0_247 = arith.constant 0 : index
    %662 = vector.load %arg20[%c0_246, %c0_247] : memref<2x32xf32, #tpu.memory_space<vmem>>, vector<2x32xf32>
    tpu.vector_store %arg20[%c0_246, %c0_247], %658 {strides = array<i32>} : memref<2x32xf32, #tpu.memory_space<vmem>>, vector<2x32xf32>,
    %c0_248 = arith.constant 0 : index
    %c0_249 = arith.constant 0 : index
    %663 = vector.load %arg21[%c0_248, %c0_249] : memref<16x32xf32, #tpu.memory_space<vmem>>, vector<16x32xf32>
    %664 = arith.truncf %663 : vector<16x32xf32> to vector<16x32xbf16>
    %c0_250 = arith.constant 0 : index
    %c0_251 = arith.constant 0 : index
    %665 = vector.load %arg10[%c0_250, %c0_251] : memref<32x16xbf16, #tpu.memory_space<vmem>>, vector<32x16xbf16>
    %cst_252 = arith.constant dense<0.000000e+00> : vector<16x16xf32>
    %666 = tpu.matmul %664, %665, %cst_252 {dimension_numbers = #tpu.dot_dimension_numbers<[1], [0], [0], [1], [0, 0, 1, 1], [], []>} : vector<16x32xbf16>, vector<32x16xbf16>, vector<16x16xf32> -> vector<16x16xf32>
    %c0_253 = arith.constant 0 : index
    %c0_254 = arith.constant 0 : index
    %667 = vector.load %arg11[%c0_253, %c0_254] : memref<1x16xf32, #tpu.memory_space<vmem>>, vector<1x16xf32>
    %668 = vector.broadcast %667 : vector<1x16xf32> to vector<16x16xf32>
    %669 = arith.addf %666, %668 : vector<16x16xf32>
    %670 = math.tanh %669 : vector<16x16xf32>
    %c0_255 = arith.constant 0 : index
    %c0_256 = arith.constant 0 : index
    %671 = vector.load %arg13[%c0_255, %c0_256] : memref<32x16xbf16, #tpu.memory_space<vmem>>, vector<32x16xbf16>
    %cst_257 = arith.constant dense<0.000000e+00> : vector<16x16xf32>
    %672 = tpu.matmul %664, %671, %cst_257 {dimension_numbers = #tpu.dot_dimension_numbers<[1], [0], [0], [1], [0, 0, 1, 1], [], []>} : vector<16x32xbf16>, vector<32x16xbf16>, vector<16x16xf32> -> vector<16x16xf32>
    %c0_258 = arith.constant 0 : index
    %c0_259 = arith.constant 0 : index
    %673 = vector.load %arg14[%c0_258, %c0_259] : memref<1x16xf32, #tpu.memory_space<vmem>>, vector<1x16xf32>
    %674 = vector.broadcast %673 : vector<1x16xf32> to vector<16x16xf32>
    %675 = arith.addf %672, %674 : vector<16x16xf32>
    %676 = math.tanh %675 : vector<16x16xf32>
    %c0_260 = arith.constant 0 : index
    %c0_261 = arith.constant 0 : index
    %677 = vector.load %arg12[%c0_260, %c0_261] : memref<1x16xf32, #tpu.memory_space<vmem>>, vector<1x16xf32>
    %678 = vector.broadcast %677 : vector<1x16xf32> to vector<16x16xf32>
    %679 = arith.mulf %678, %670 : vector<16x16xf32>
    %c0_262 = arith.constant 0 : index
    %c0_263 = arith.constant 0 : index
    %680 = vector.load %arg15[%c0_262, %c0_263] : memref<1x16xf32, #tpu.memory_space<vmem>>, vector<1x16xf32>
    %681 = vector.broadcast %680 : vector<1x16xf32> to vector<16x16xf32>
    %682 = arith.mulf %681, %676 : vector<16x16xf32>
    %683 = arith.addf %679, %682 : vector<16x16xf32>
    %684 = arith.negf %683 : vector<16x16xf32>
    %685 = math.exp %684 : vector<16x16xf32>
    %cst_264 = arith.constant 1.000000e+00 : f32
    %686 = vector.broadcast %cst_264 : f32 to vector<16x16xf32>
    %687 = arith.addf %686, %685 : vector<16x16xf32>
    %688 = arith.divf %686, %687 : vector<16x16xf32>
    %cst_265 = arith.constant 1.000000e-07 : f32
    %cst_266 = arith.constant 0.99999988 : f32
    %689 = vector.broadcast %cst_265 : f32 to vector<16x16xf32>
    %690 = arith.maximumf %689, %688 : vector<16x16xf32>
    %691 = vector.broadcast %cst_266 : f32 to vector<16x16xf32>
    %692 = arith.minimumf %691, %690 : vector<16x16xf32>
    %693 = math.log %692 : vector<16x16xf32>
    %c0_267 = arith.constant 0 : index
    %c0_268 = arith.constant 0 : index
    %694 = vector.load %arg16[%c0_267, %c0_268] : memref<16x16xf32, #tpu.memory_space<vmem>>, vector<16x16xf32>
    %cst_269 = arith.constant dense<0.000000e+00> : vector<16x16xf32>
    %695 = tpu.matmul %693, %694, %cst_269 {dimension_numbers = #tpu.dot_dimension_numbers<[1], [0], [0], [1], [0, 0, 1, 1], [], []>} : vector<16x16xf32>, vector<16x16xf32>, vector<16x16xf32> -> vector<16x16xf32>
    %cst_270 = arith.constant 1.000000e+00 : f32
    %696 = vector.broadcast %cst_270 : f32 to vector<16x16xf32>
    %697 = arith.subf %696, %692 : vector<16x16xf32>
    %698 = math.log %697 : vector<16x16xf32>
    %c0_271 = arith.constant 0 : index
    %c0_272 = arith.constant 0 : index
    %699 = vector.load %arg17[%c0_271, %c0_272] : memref<16x16xf32, #tpu.memory_space<vmem>>, vector<16x16xf32>
    %cst_273 = arith.constant dense<0.000000e+00> : vector<16x16xf32>
    %700 = tpu.matmul %698, %699, %cst_273 {dimension_numbers = #tpu.dot_dimension_numbers<[1], [0], [0], [1], [0, 0, 1, 1], [], []>} : vector<16x16xf32>, vector<16x16xf32>, vector<16x16xf32> -> vector<16x16xf32>
    %701 = arith.addf %695, %700 : vector<16x16xf32>
    %c0_274 = arith.constant 0 : index
    %c0_275 = arith.constant 0 : index
    %c0_276 = arith.constant 0 : index
    %c0_277 = arith.constant 0 : index
    %702 = vector.load %arg18[%c0_274, %c0_275, %c0_276, %c0_277] : memref<1x1x16x16xf32, #tpu.memory_space<vmem>>, vector<1x1x16x16xf32>
    %703 = vector.shape_cast %702 : vector<1x1x16x16xf32> to vector<16x16xf32>
    %704 = vector.shape_cast %701 : vector<16x16xf32> to vector<1x1x16x16xf32>
    tpu.vector_store %arg18[%c0_274, %c0_275, %c0_276, %c0_277], %704 {strides = array<i32>} : memref<1x1x16x16xf32, #tpu.memory_space<vmem>>, vector<1x1x16x16xf32>,
    return
  }
  func.func @transform_0(%arg0: i32, %arg1: i32) -> (i32, i32, i32, i32) {
    %c0_i32 = arith.constant 0 : i32
    %c0_i32_0 = arith.constant 0 : i32
    %c0_i32_1 = arith.constant 0 : i32
    return %arg0, %arg1, %c0_i32, %c0_i32_0 : i32, i32, i32, i32
  }
  func.func @transform_1(%arg0: i32, %arg1: i32) -> (i32, i32, i32, i32) {
    %c0_i32 = arith.constant 0 : i32
    %c0_i32_0 = arith.constant 0 : i32
    %c0_i32_1 = arith.constant 0 : i32
    return %arg0, %arg1, %c0_i32, %c0_i32_0 : i32, i32, i32, i32
  }
  func.func @transform_2(%arg0: i32, %arg1: i32) -> (i32, i32, i32, i32) {
    %c0_i32 = arith.constant 0 : i32
    %c0_i32_0 = arith.constant 0 : i32
    %c0_i32_1 = arith.constant 0 : i32
    return %arg0, %arg1, %c0_i32, %c0_i32_0 : i32, i32, i32, i32
  }
  func.func @transform_3(%arg0: i32, %arg1: i32) -> (i32, i32) {
    %c0_i32 = arith.constant 0 : i32
    %c0_i32_0 = arith.constant 0 : i32
    %c0_i32_1 = arith.constant 0 : i32
    return %c0_i32, %c0_i32_0 : i32, i32
  }
  func.func @transform_4(%arg0: i32, %arg1: i32) -> (i32, i32) {
    %c0_i32 = arith.constant 0 : i32
    %c0_i32_0 = arith.constant 0 : i32
    %c0_i32_1 = arith.constant 0 : i32
    return %c0_i32, %c0_i32_0 : i32, i32
  }
  func.func @transform_5(%arg0: i32, %arg1: i32) -> (i32, i32) {
    %c0_i32 = arith.constant 0 : i32
    %c0_i32_0 = arith.constant 0 : i32
    %c0_i32_1 = arith.constant 0 : i32
    return %c0_i32, %c0_i32_0 : i32, i32
  }
  func.func @transform_6(%arg0: i32, %arg1: i32) -> (i32, i32) {
    %c0_i32 = arith.constant 0 : i32
    %c0_i32_0 = arith.constant 0 : i32
    %c0_i32_1 = arith.constant 0 : i32
    return %c0_i32, %c0_i32_0 : i32, i32
  }
  func.func @transform_7(%arg0: i32, %arg1: i32) -> (i32, i32) {
    %c0_i32 = arith.constant 0 : i32
    %c0_i32_0 = arith.constant 0 : i32
    %c0_i32_1 = arith.constant 0 : i32
    return %c0_i32, %c0_i32_0 : i32, i32
  }
  func.func @transform_8(%arg0: i32, %arg1: i32) -> (i32, i32) {
    %c0_i32 = arith.constant 0 : i32
    %c0_i32_0 = arith.constant 0 : i32
    %c0_i32_1 = arith.constant 0 : i32
    return %c0_i32, %c0_i32_0 : i32, i32
  }
  func.func @transform_9(%arg0: i32, %arg1: i32) -> (i32, i32) {
    %c0_i32 = arith.constant 0 : i32
    %c0_i32_0 = arith.constant 0 : i32
    %c0_i32_1 = arith.constant 0 : i32
    return %c0_i32, %c0_i32_0 : i32, i32
  }
  func.func @transform_10(%arg0: i32, %arg1: i32) -> (i32, i32) {
    %c0_i32 = arith.constant 0 : i32
    %c0_i32_0 = arith.constant 0 : i32
    %c0_i32_1 = arith.constant 0 : i32
    return %c0_i32, %c0_i32_0 : i32, i32
  }
  func.func @transform_11(%arg0: i32, %arg1: i32) -> (i32, i32) {
    %c0_i32 = arith.constant 0 : i32
    %c0_i32_0 = arith.constant 0 : i32
    %c0_i32_1 = arith.constant 0 : i32
    return %c0_i32, %c0_i32_0 : i32, i32
  }
  func.func @transform_12(%arg0: i32, %arg1: i32) -> (i32, i32) {
    %c0_i32 = arith.constant 0 : i32
    %c0_i32_0 = arith.constant 0 : i32
    %c0_i32_1 = arith.constant 0 : i32
    return %c0_i32, %c0_i32_0 : i32, i32
  }
  func.func @transform_13(%arg0: i32, %arg1: i32) -> (i32, i32) {
    %c0_i32 = arith.constant 0 : i32
    %c0_i32_0 = arith.constant 0 : i32
    %c0_i32_1 = arith.constant 0 : i32
    return %c0_i32, %c0_i32_0 : i32, i32
  }
  func.func @transform_14(%arg0: i32, %arg1: i32) -> (i32, i32) {
    %c0_i32 = arith.constant 0 : i32
    %c0_i32_0 = arith.constant 0 : i32
    %c0_i32_1 = arith.constant 0 : i32
    return %c0_i32, %c0_i32_0 : i32, i32
  }
  func.func @transform_15(%arg0: i32, %arg1: i32) -> (i32, i32) {
    %c0_i32 = arith.constant 0 : i32
    %c0_i32_0 = arith.constant 0 : i32
    %c0_i32_1 = arith.constant 0 : i32
    return %c0_i32, %c0_i32_0 : i32, i32
  }
  func.func @transform_16(%arg0: i32, %arg1: i32) -> (i32, i32, i32, i32) {
    %c0_i32 = arith.constant 0 : i32
    %c0_i32_0 = arith.constant 0 : i32
    %c0_i32_1 = arith.constant 0 : i32
    return %arg0, %arg1, %c0_i32, %c0_i32_0 : i32, i32, i32, i32
  }
}

</mosaic_0001>

<llo_original>
// kernel: tpu_custom_call.1
$region0: #{tpu_custom_call.1}
  #allocation0 [shape = 'u32[]', space=smem, size = 0x4, offset = 0x4, fixed_abs, tag = 'smem constant byte address 0x4 - core index']
  #allocation1 [shape = 'u32[144,128]{1,0:T(1,128)}', space=vmem, size = 0x12000, scoped, tag = 'internal scratch']
  #allocation2 [shape = 'f32[2,32]{1,0:T(2,128)}', space=vmem, size = 0x400, scoped, tag = 'scratch operand']
  #allocation3 [shape = 'f32[2,32]{1,0:T(2,128)}', space=vmem, size = 0x400, scoped, tag = 'scratch operand']
  #allocation4 [shape = 'f32[16,32]{1,0:T(8,128)}', space=vmem, size = 0x2000, scoped, tag = 'scratch operand']
  %s0 = inlined_call_operand.hbm [shape: f32[2,2,16,96], index: 0, kind: input, shape index: {}]
  %s1 = inlined_call_operand.hbm [shape: f32[2,2,16,96], index: 1, kind: input, shape index: {}]
  %s2 = inlined_call_operand.hbm [shape: f32[2,2,16,32], index: 2, kind: input, shape index: {}]
  %s3 = inlined_call_operand.hbm [shape: bf16[32,96], index: 3, kind: input, shape index: {}]
  %s4 = inlined_call_operand.hbm [shape: f32[1,96], index: 4, kind: input, shape index: {}]
  %s5 = inlined_call_operand.hbm [shape: bf16[32,96], index: 5, kind: input, shape index: {}]
  %s6 = inlined_call_operand.hbm [shape: bf16[32,96], index: 6, kind: input, shape index: {}]
  %s7 = inlined_call_operand.hbm [shape: f32[1,96], index: 7, kind: input, shape index: {}]
  %s8 = inlined_call_operand.hbm [shape: bf16[32,16], index: 8, kind: input, shape index: {}]
  %s9 = inlined_call_operand.hbm [shape: f32[1,16], index: 9, kind: input, shape index: {}]
  %s10 = inlined_call_operand.hbm [shape: f32[1,16], index: 10, kind: input, shape index: {}]
  %s11 = inlined_call_operand.hbm [shape: bf16[32,16], index: 11, kind: input, shape index: {}]
  %s12 = inlined_call_operand.hbm [shape: f32[1,16], index: 12, kind: input, shape index: {}]
  %s13 = inlined_call_operand.hbm [shape: f32[1,16], index: 13, kind: input, shape index: {}]
  %s14 = inlined_call_operand.hbm [shape: f32[16,16], index: 14, kind: input, shape index: {}]
  %s15 = inlined_call_operand.hbm [shape: f32[16,16], index: 15, kind: input, shape index: {}]
  %s16 = inlined_call_operand.hbm [shape: f32[2,2,16,16], index: 16, kind: output, shape index: {}]
  %s17 = sld [smem:[#allocation0]]
  $region165: #{tpu_custom_call.1} parent=0
    _
  %s19 = ssub.s32 1, %s17
  %s20 = scalar_select 0, %s19, %s17
  $region1: #{tpu_custom_call.1} parent=0
    #allocation5 [shape = 'u8[16384]{0}', space=vmem, size = 0x4000, scoped, tag = 'input window, operand 0']
    #allocation6 [shape = 's32[2]{0}', space=sflag, size = 0x8, scoped, tag = 'scoped memory for tpu_custom_call.1']
    #allocation7 [shape = 's32[2]{0}', space=sflag, size = 0x8, scoped, tag = 'scoped memory for tpu_custom_call.1']
    #allocation8 [shape = 'u8[16384]{0}', space=vmem, size = 0x4000, scoped, tag = 'input window, operand 1']
    #allocation9 [shape = 's32[2]{0}', space=sflag, size = 0x8, scoped, tag = 'scoped memory for tpu_custom_call.1']
    #allocation10 [shape = 'u8[16384]{0}', space=vmem, size = 0x4000, scoped, tag = 'input window, operand 2']
    #allocation11 [shape = 'u8[8192]{0}', space=vmem, size = 0x2000, scoped, tag = 'input window, operand 3, single buffered']
    #allocation12 [shape = 's32[1]{0}', space=sflag, size = 0x4, scoped, tag = 'scoped memory for tpu_custom_call.1']
    #allocation13 [shape = 'u8[512]{0}', space=vmem, size = 0x400, scoped, tag = 'input window, operand 4, single buffered']
    #allocation14 [shape = 'u8[8192]{0}', space=vmem, size = 0x2000, scoped, tag = 'input window, operand 5, single buffered']
    #allocation15 [shape = 's32[1]{0}', space=sflag, size = 0x4, scoped, tag = 'scoped memory for tpu_custom_call.1']
    #allocation16 [shape = 'u8[8192]{0}', space=vmem, size = 0x2000, scoped, tag = 'input window, operand 6, single buffered']
    #allocation17 [shape = 'u8[512]{0}', space=vmem, size = 0x400, scoped, tag = 'input window, operand 7, single buffered']
    #allocation18 [shape = 's32[1]{0}', space=sflag, size = 0x4, scoped, tag = 'scoped memory for tpu_custom_call.1']
    #allocation19 [shape = 'u8[8192]{0}', space=vmem, size = 0x2000, scoped, tag = 'input window, operand 8, single buffered']
    #allocation20 [shape = 'u8[512]{0}', space=vmem, size = 0x400, scoped, tag = 'input window, operand 9, single buffered']
    #allocation21 [shape = 's32[1]{0}', space=sflag, size = 0x4, scoped, tag = 'scoped memory for tpu_custom_call.1']
    #allocation22 [shape = 'u8[512]{0}', space=vmem, size = 0x400, scoped, tag = 'input window, operand 10, single buffered']
    #allocation23 [shape = 'u8[8192]{0}', space=vmem, size = 0x2000, scoped, tag = 'input window, operand 11, single buffered']
    #allocation24 [shape = 's32[1]{0}', space=sflag, size = 0x4, scoped, tag = 'scoped memory for tpu_custom_call.1']
    #allocation25 [shape = 'u8[512]{0}', space=vmem, size = 0x400, scoped, tag = 'input window, operand 12, single buffered']
    #allocation26 [shape = 'u8[512]{0}', space=vmem, size = 0x400, scoped, tag = 'input window, operand 13, single buffered']
    #allocation27 [shape = 's32[1]{0}', space=sflag, size = 0x4, scoped, tag = 'scoped memory for tpu_custom_call.1']
    #allocation28 [shape = 'u8[8192]{0}', space=vmem, size = 0x2000, scoped, tag = 'input window, operand 14, single buffered']
    #allocation29 [shape = 'u8[8192]{0}', space=vmem, size = 0x2000, scoped, tag = 'input window, operand 15, single buffered']
    #allocation30 [shape = 's32[1]{0}', space=sflag, size = 0x4, scoped, tag = 'scoped memory for tpu_custom_call.1']
    #allocation31 [shape = 'u8[16384]{0}', space=vmem, size = 0x4000, scoped, tag = 'output window, operand 0']
    %21 = vsyncpa [#allocation6], 0
    %s22 = scalar_lea.sflag [#allocation6], 1
    %23 = vsyncpa %s22, 0
    %24 = vsyncpa [#allocation9], 0
    %s25 = scalar_lea.sflag [#allocation9], 1
    %26 = vsyncpa %s25, 0
    %27 = vsyncpa [#allocation12], 0
    %28 = vsyncpa [#allocation15], 0
    %29 = vsyncpa [#allocation18], 0
    %30 = vsyncpa [#allocation21], 0
    %31 = vsyncpa [#allocation24], 0
    %32 = vsyncpa [#allocation27], 0
    %33 = vsyncpa [#allocation30], 0
    %34 = vsyncpa [#allocation7], 0
    %s35 = scalar_lea.sflag [#allocation7], 1
    %36 = vsyncpa %s35, 0
    loop: start=0, step=1, limit=6
    $region2: #{tpu_custom_call.1} parent=1 // loop_pre_header
      _
    $region3: #{tpu_custom_call.1} parent=1 // loop_header
      %s38 = sphi 0, %s42
      %p39 = scmp.ge.s32.totalorder %s38, 6
      %s45 = sphi 0, %s57
      %s46 = sphi 0, %s53
      %s47 = sphi 0, %s45
      %s48 = sphi 0, %s46
      %s49 = sphi 0, %s47
      %s50 = sphi 0, %s48
      %s62 = sphi 0, %s64
      %s65 = sphi 0, %s62
      %s66 = sphi 0, %s65
      %s82 = sphi 0, %s66
      %s90 = sphi 0, %s92
      %s93 = sphi 0, %s90
      %s94 = sphi 0, %s93
      %s110 = sphi 0, %s94
      %s118 = sphi 0, %s120
      %s121 = sphi 0, %s118
      %s122 = sphi 0, %s121
      %s138 = sphi 0, %s122
      %s142 = sphi 0, %s142
      %s144 = sphi 0, %s142
      %s145 = sphi 0, %s144
      %s159 = sphi 0, %s145
      %s163 = sphi 0, %s163
      %s165 = sphi 0, %s163
      %s166 = sphi 0, %s165
      %s180 = sphi 0, %s166
      %s184 = sphi 0, %s184
      %s186 = sphi 0, %s184
      %s187 = sphi 0, %s186
      %s201 = sphi 0, %s187
      %s205 = sphi 0, %s205
      %s207 = sphi 0, %s205
      %s208 = sphi 0, %s207
      %s222 = sphi 0, %s208
      %s226 = sphi 0, %s226
      %s228 = sphi 0, %s226
      %s229 = sphi 0, %s228
      %s243 = sphi 0, %s229
      %s247 = sphi 0, %s247
      %s249 = sphi 0, %s247
      %s250 = sphi 0, %s249
      %s264 = sphi 0, %s250
      %s268 = sphi 0, %s268
      %s270 = sphi 0, %s268
      %s271 = sphi 0, %s270
      %s285 = sphi 0, %s271
      %s289 = sphi 0, %s289
      %s291 = sphi 0, %s289
      %s292 = sphi 0, %s291
      %s306 = sphi 0, %s292
      %s310 = sphi 0, %s310
      %s312 = sphi 0, %s310
      %s313 = sphi 0, %s312
      %s327 = sphi 0, %s313
      %s331 = sphi 0, %s331
      %s333 = sphi 0, %s331
      %s334 = sphi 0, %s333
      %s348 = sphi 0, %s334
      %s352 = sphi 0, %s352
      %s354 = sphi 0, %s352
      %s355 = sphi 0, %s354
      %s369 = sphi 0, %s355
      %s373 = sphi 0, %s373
      %s375 = sphi 0, %s373
      %s376 = sphi 0, %s375
      %s390 = sphi 0, %s376
      %s394 = sphi 0, %s394
      %s396 = sphi 0, %s394
      %s397 = sphi 0, %s396
      %s411 = sphi 0, %s397
      %s419 = sphi 0, %s421
      %s422 = sphi 0, %s419
      %s423 = sphi 0, %s422
      %s439 = sphi 0, %s423
    $region4: #{tpu_custom_call.1} parent=1 // loop_header_branch
      %41 = sbr.rel (%p39) target = $region8
    $region5: #{tpu_custom_call.1} parent=1 // loop_body
      %s43 = ssub.s32 %s38, 1
      %s44 = ssub.s32 %s38, 2
      %s51 = sadd.s32 1, %s46
      %p52 = scmp.ge.s32.totalorder %s51, 2
      %s53 = scalar_select %p52, 0, %s51
      %s54 = sadd.s32 1, %s45
      %s55 = scalar_select %p52, %s54, %s45
      %p56 = scmp.ge.s32.totalorder %s55, 2
      %s57 = scalar_select %p56, 0, %s55
      %s58 = ssub.s32 %s45, %s57
      %s59 = ssub.s32 %s46, %s53
      %s60 = sor.u32 %s58, %s59
      %p61 = scmp.eq.s32.totalorder %s60, 0
      %s63 = sadd.s32 %s62, 1
      %s64 = scalar_select %p61, %s62, %s63
      %p67 = pneg %p61
      %p68 = scmp.eq.s32.totalorder %s38, 3
      %p69 = por %p67, %p68
      %p70 = scmp.ne.s32.totalorder %s62, %s65
      %p71 = scmp.eq.s32.totalorder %s38, 0
      %p72 = por %p70, %p71
      %p73 = scmp.ne.s32.totalorder %s62, %s65
      %p74 = scmp.eq.s32.totalorder %s43, 3
      %p75 = por %p73, %p74
      %p76 = scmp.ne.s32.totalorder %s65, %s66
      %p77 = scmp.eq.s32.totalorder %s43, 0
      %p78 = por %p76, %p77
      %p79 = scmp.ne.s32.totalorder %s65, %s66
      %p80 = scmp.eq.s32.totalorder %s44, 3
      %p81 = por %p79, %p80
      %p83 = scmp.ne.s32.totalorder %s66, %s82
      %p84 = scmp.eq.s32.totalorder %s44, 0
      %p85 = por %p83, %p84
      %s86 = ssub.s32 %s45, %s57
      %s87 = ssub.s32 %s46, %s53
      %s88 = sor.u32 %s86, %s87
      %p89 = scmp.eq.s32.totalorder %s88, 0
      %s91 = sadd.s32 %s90, 1
      %s92 = scalar_select %p89, %s90, %s91
      %p95 = pneg %p89
      %p96 = scmp.eq.s32.totalorder %s38, 3
      %p97 = por %p95, %p96
      %p98 = scmp.ne.s32.totalorder %s90, %s93
      %p99 = scmp.eq.s32.totalorder %s38, 0
      %p100 = por %p98, %p99
      %p101 = scmp.ne.s32.totalorder %s90, %s93
      %p102 = scmp.eq.s32.totalorder %s43, 3
      %p103 = por %p101, %p102
      %p104 = scmp.ne.s32.totalorder %s93, %s94
      %p105 = scmp.eq.s32.totalorder %s43, 0
      %p106 = por %p104, %p105
      %p107 = scmp.ne.s32.totalorder %s93, %s94
      %p108 = scmp.eq.s32.totalorder %s44, 3
      %p109 = por %p107, %p108
      %p111 = scmp.ne.s32.totalorder %s94, %s110
      %p112 = scmp.eq.s32.totalorder %s44, 0
      %p113 = por %p111, %p112
      %s114 = ssub.s32 %s45, %s57
      %s115 = ssub.s32 %s46, %s53
      %s116 = sor.u32 %s114, %s115
      %p117 = scmp.eq.s32.totalorder %s116, 0
      %s119 = sadd.s32 %s118, 1
      %s120 = scalar_select %p117, %s118, %s119
      %p123 = pneg %p117
      %p124 = scmp.eq.s32.totalorder %s38, 3
      %p125 = por %p123, %p124
      %p126 = scmp.ne.s32.totalorder %s118, %s121
      %p127 = scmp.eq.s32.totalorder %s38, 0
      %p128 = por %p126, %p127
      %p129 = scmp.ne.s32.totalorder %s118, %s121
      %p130 = scmp.eq.s32.totalorder %s43, 3
      %p131 = por %p129, %p130
      %p132 = scmp.ne.s32.totalorder %s121, %s122
      %p133 = scmp.eq.s32.totalorder %s43, 0
      %p134 = por %p132, %p133
      %p135 = scmp.ne.s32.totalorder %s121, %s122
      %p136 = scmp.eq.s32.totalorder %s44, 3
      %p137 = por %p135, %p136
      %p139 = scmp.ne.s32.totalorder %s122, %s138
      %p140 = scmp.eq.s32.totalorder %s44, 0
      %p141 = por %p139, %p140
      %s143 = sadd.s32 %s142, 1
      %p146 = scmp.eq.s32.totalorder %s38, 3
      %p147 = scmp.ne.s32.totalorder %s142, %s144
      %p148 = scmp.eq.s32.totalorder %s38, 0
      %p149 = por %p147, %p148
      %p150 = scmp.ne.s32.totalorder %s142, %s144
      %p151 = scmp.eq.s32.totalorder %s43, 3
      %p152 = por %p150, %p151
      %p153 = scmp.ne.s32.totalorder %s144, %s145
      %p154 = scmp.eq.s32.totalorder %s43, 0
      %p155 = por %p153, %p154
      %p156 = scmp.ne.s32.totalorder %s144, %s145
      %p157 = scmp.eq.s32.totalorder %s44, 3
      %p158 = por %p156, %p157
      %p160 = scmp.ne.s32.totalorder %s145, %s159
      %p161 = scmp.eq.s32.totalorder %s44, 0
      %p162 = por %p160, %p161
      %s164 = sadd.s32 %s163, 1
      %p167 = scmp.eq.s32.totalorder %s38, 3
      %p168 = scmp.ne.s32.totalorder %s163, %s165
      %p169 = scmp.eq.s32.totalorder %s38, 0
      %p170 = por %p168, %p169
      %p171 = scmp.ne.s32.totalorder %s163, %s165
      %p172 = scmp.eq.s32.totalorder %s43, 3
      %p173 = por %p171, %p172
      %p174 = scmp.ne.s32.totalorder %s165, %s166
      %p175 = scmp.eq.s32.totalorder %s43, 0
      %p176 = por %p174, %p175
      %p177 = scmp.ne.s32.totalorder %s165, %s166
      %p178 = scmp.eq.s32.totalorder %s44, 3
      %p179 = por %p177, %p178
      %p181 = scmp.ne.s32.totalorder %s166, %s180
      %p182 = scmp.eq.s32.totalorder %s44, 0
      %p183 = por %p181, %p182
      %s185 = sadd.s32 %s184, 1
      %p188 = scmp.eq.s32.totalorder %s38, 3
      %p189 = scmp.ne.s32.totalorder %s184, %s186
      %p190 = scmp.eq.s32.totalorder %s38, 0
      %p191 = por %p189, %p190
      %p192 = scmp.ne.s32.totalorder %s184, %s186
      %p193 = scmp.eq.s32.totalorder %s43, 3
      %p194 = por %p192, %p193
      %p195 = scmp.ne.s32.totalorder %s186, %s187
      %p196 = scmp.eq.s32.totalorder %s43, 0
      %p197 = por %p195, %p196
      %p198 = scmp.ne.s32.totalorder %s186, %s187
      %p199 = scmp.eq.s32.totalorder %s44, 3
      %p200 = por %p198, %p199
      %p202 = scmp.ne.s32.totalorder %s187, %s201
      %p203 = scmp.eq.s32.totalorder %s44, 0
      %p204 = por %p202, %p203
      %s206 = sadd.s32 %s205, 1
      %p209 = scmp.eq.s32.totalorder %s38, 3
      %p210 = scmp.ne.s32.totalorder %s205, %s207
      %p211 = scmp.eq.s32.totalorder %s38, 0
      %p212 = por %p210, %p211
      %p213 = scmp.ne.s32.totalorder %s205, %s207
      %p214 = scmp.eq.s32.totalorder %s43, 3
      %p215 = por %p213, %p214
      %p216 = scmp.ne.s32.totalorder %s207, %s208
      %p217 = scmp.eq.s32.totalorder %s43, 0
      %p218 = por %p216, %p217
      %p219 = scmp.ne.s32.totalorder %s207, %s208
      %p220 = scmp.eq.s32.totalorder %s44, 3
      %p221 = por %p219, %p220
      %p223 = scmp.ne.s32.totalorder %s208, %s222
      %p224 = scmp.eq.s32.totalorder %s44, 0
      %p225 = por %p223, %p224
      %s227 = sadd.s32 %s226, 1
      %p230 = scmp.eq.s32.totalorder %s38, 3
      %p231 = scmp.ne.s32.totalorder %s226, %s228
      %p232 = scmp.eq.s32.totalorder %s38, 0
      %p233 = por %p231, %p232
      %p234 = scmp.ne.s32.totalorder %s226, %s228
      %p235 = scmp.eq.s32.totalorder %s43, 3
      %p236 = por %p234, %p235
      %p237 = scmp.ne.s32.totalorder %s228, %s229
      %p238 = scmp.eq.s32.totalorder %s43, 0
      %p239 = por %p237, %p238
      %p240 = scmp.ne.s32.totalorder %s228, %s229
      %p241 = scmp.eq.s32.totalorder %s44, 3
      %p242 = por %p240, %p241
      %p244 = scmp.ne.s32.totalorder %s229, %s243
      %p245 = scmp.eq.s32.totalorder %s44, 0
      %p246 = por %p244, %p245
      %s248 = sadd.s32 %s247, 1
      %p251 = scmp.eq.s32.totalorder %s38, 3
      %p252 = scmp.ne.s32.totalorder %s247, %s249
      %p253 = scmp.eq.s32.totalorder %s38, 0
      %p254 = por %p252, %p253
      %p255 = scmp.ne.s32.totalorder %s247, %s249
      %p256 = scmp.eq.s32.totalorder %s43, 3
      %p257 = por %p255, %p256
      %p258 = scmp.ne.s32.totalorder %s249, %s250
      %p259 = scmp.eq.s32.totalorder %s43, 0
      %p260 = por %p258, %p259
      %p261 = scmp.ne.s32.totalorder %s249, %s250
      %p262 = scmp.eq.s32.totalorder %s44, 3
      %p263 = por %p261, %p262
      %p265 = scmp.ne.s32.totalorder %s250, %s264
      %p266 = scmp.eq.s32.totalorder %s44, 0
      %p267 = por %p265, %p266
      %s269 = sadd.s32 %s268, 1
      %p272 = scmp.eq.s32.totalorder %s38, 3
      %p273 = scmp.ne.s32.totalorder %s268, %s270
      %p274 = scmp.eq.s32.totalorder %s38, 0
      %p275 = por %p273, %p274
      %p276 = scmp.ne.s32.totalorder %s268, %s270
      %p277 = scmp.eq.s32.totalorder %s43, 3
      %p278 = por %p276, %p277
      %p279 = scmp.ne.s32.totalorder %s270, %s271
      %p280 = scmp.eq.s32.totalorder %s43, 0
      %p281 = por %p279, %p280
      %p282 = scmp.ne.s32.totalorder %s270, %s271
      %p283 = scmp.eq.s32.totalorder %s44, 3
      %p284 = por %p282, %p283
      %p286 = scmp.ne.s32.totalorder %s271, %s285
      %p287 = scmp.eq.s32.totalorder %s44, 0
      %p288 = por %p286, %p287
      %s290 = sadd.s32 %s289, 1
      %p293 = scmp.eq.s32.totalorder %s38, 3
      %p294 = scmp.ne.s32.totalorder %s289, %s291
      %p295 = scmp.eq.s32.totalorder %s38, 0
      %p296 = por %p294, %p295
      %p297 = scmp.ne.s32.totalorder %s289, %s291
      %p298 = scmp.eq.s32.totalorder %s43, 3
      %p299 = por %p297, %p298
      %p300 = scmp.ne.s32.totalorder %s291, %s292
      %p301 = scmp.eq.s32.totalorder %s43, 0
      %p302 = por %p300, %p301
      %p303 = scmp.ne.s32.totalorder %s291, %s292
      %p304 = scmp.eq.s32.totalorder %s44, 3
      %p305 = por %p303, %p304
      %p307 = scmp.ne.s32.totalorder %s292, %s306
      %p308 = scmp.eq.s32.totalorder %s44, 0
      %p309 = por %p307, %p308
      %s311 = sadd.s32 %s310, 1
      %p314 = scmp.eq.s32.totalorder %s38, 3
      %p315 = scmp.ne.s32.totalorder %s310, %s312
      %p316 = scmp.eq.s32.totalorder %s38, 0
      %p317 = por %p315, %p316
      %p318 = scmp.ne.s32.totalorder %s310, %s312
      %p319 = scmp.eq.s32.totalorder %s43, 3
      %p320 = por %p318, %p319
      %p321 = scmp.ne.s32.totalorder %s312, %s313
      %p322 = scmp.eq.s32.totalorder %s43, 0
      %p323 = por %p321, %p322
      %p324 = scmp.ne.s32.totalorder %s312, %s313
      %p325 = scmp.eq.s32.totalorder %s44, 3
      %p326 = por %p324, %p325
      %p328 = scmp.ne.s32.totalorder %s313, %s327
      %p329 = scmp.eq.s32.totalorder %s44, 0
      %p330 = por %p328, %p329
      %s332 = sadd.s32 %s331, 1
      %p335 = scmp.eq.s32.totalorder %s38, 3
      %p336 = scmp.ne.s32.totalorder %s331, %s333
      %p337 = scmp.eq.s32.totalorder %s38, 0
      %p338 = por %p336, %p337
      %p339 = scmp.ne.s32.totalorder %s331, %s333
      %p340 = scmp.eq.s32.totalorder %s43, 3
      %p341 = por %p339, %p340
      %p342 = scmp.ne.s32.totalorder %s333, %s334
      %p343 = scmp.eq.s32.totalorder %s43, 0
      %p344 = por %p342, %p343
      %p345 = scmp.ne.s32.totalorder %s333, %s334
      %p346 = scmp.eq.s32.totalorder %s44, 3
      %p347 = por %p345, %p346
      %p349 = scmp.ne.s32.totalorder %s334, %s348
      %p350 = scmp.eq.s32.totalorder %s44, 0
      %p351 = por %p349, %p350
      %s353 = sadd.s32 %s352, 1
      %p356 = scmp.eq.s32.totalorder %s38, 3
      %p357 = scmp.ne.s32.totalorder %s352, %s354
      %p358 = scmp.eq.s32.totalorder %s38, 0
      %p359 = por %p357, %p358
      %p360 = scmp.ne.s32.totalorder %s352, %s354
      %p361 = scmp.eq.s32.totalorder %s43, 3
      %p362 = por %p360, %p361
      %p363 = scmp.ne.s32.totalorder %s354, %s355
      %p364 = scmp.eq.s32.totalorder %s43, 0
      %p365 = por %p363, %p364
      %p366 = scmp.ne.s32.totalorder %s354, %s355
      %p367 = scmp.eq.s32.totalorder %s44, 3
      %p368 = por %p366, %p367
      %p370 = scmp.ne.s32.totalorder %s355, %s369
      %p371 = scmp.eq.s32.totalorder %s44, 0
      %p372 = por %p370, %p371
      %s374 = sadd.s32 %s373, 1
      %p377 = scmp.eq.s32.totalorder %s38, 3
      %p378 = scmp.ne.s32.totalorder %s373, %s375
      %p379 = scmp.eq.s32.totalorder %s38, 0
      %p380 = por %p378, %p379
      %p381 = scmp.ne.s32.totalorder %s373, %s375
      %p382 = scmp.eq.s32.totalorder %s43, 3
      %p383 = por %p381, %p382
      %p384 = scmp.ne.s32.totalorder %s375, %s376
      %p385 = scmp.eq.s32.totalorder %s43, 0
      %p386 = por %p384, %p385
      %p387 = scmp.ne.s32.totalorder %s375, %s376
      %p388 = scmp.eq.s32.totalorder %s44, 3
      %p389 = por %p387, %p388
      %p391 = scmp.ne.s32.totalorder %s376, %s390
      %p392 = scmp.eq.s32.totalorder %s44, 0
      %p393 = por %p391, %p392
      %s395 = sadd.s32 %s394, 1
      %p398 = scmp.eq.s32.totalorder %s38, 3
      %p399 = scmp.ne.s32.totalorder %s394, %s396
      %p400 = scmp.eq.s32.totalorder %s38, 0
      %p401 = por %p399, %p400
      %p402 = scmp.ne.s32.totalorder %s394, %s396
      %p403 = scmp.eq.s32.totalorder %s43, 3
      %p404 = por %p402, %p403
      %p405 = scmp.ne.s32.totalorder %s396, %s397
      %p406 = scmp.eq.s32.totalorder %s43, 0
      %p407 = por %p405, %p406
      %p408 = scmp.ne.s32.totalorder %s396, %s397
      %p409 = scmp.eq.s32.totalorder %s44, 3
      %p410 = por %p408, %p409
      %p412 = scmp.ne.s32.totalorder %s397, %s411
      %p413 = scmp.eq.s32.totalorder %s44, 0
      %p414 = por %p412, %p413
      %s415 = ssub.s32 %s45, %s57
      %s416 = ssub.s32 %s46, %s53
      %s417 = sor.u32 %s415, %s416
      %p418 = scmp.eq.s32.totalorder %s417, 0
      %s420 = sadd.s32 %s419, 1
      %s421 = scalar_select %p418, %s419, %s420
      %p424 = pneg %p418
      %p425 = scmp.eq.s32.totalorder %s38, 3
      %p426 = por %p424, %p425
      %p427 = scmp.ne.s32.totalorder %s419, %s422
      %p428 = scmp.eq.s32.totalorder %s38, 0
      %p429 = por %p427, %p428
      %p430 = scmp.ne.s32.totalorder %s419, %s422
      %p431 = scmp.eq.s32.totalorder %s43, 3
      %p432 = por %p430, %p431
      %p433 = scmp.ne.s32.totalorder %s422, %s423
      %p434 = scmp.eq.s32.totalorder %s43, 0
      %p435 = por %p433, %p434
      %p436 = scmp.ne.s32.totalorder %s422, %s423
      %p437 = scmp.eq.s32.totalorder %s44, 3
      %p438 = por %p436, %p437
      %p440 = scmp.ne.s32.totalorder %s423, %s439
      %p441 = scmp.eq.s32.totalorder %s44, 0
      %p442 = por %p440, %p441
      %p443 = scmp.le.s32.totalorder 1, %s38
      %p444 = scmp.lt.s32.totalorder %s38, 5
      %p445 = pnand %p443, %p444
      %p446 = pneg %p445
      // Predicated region
      $region9: #{tpu_custom_call.1} parent=5 // pred_check
        _
      $region10: #{tpu_custom_call.1} parent=5 // pred_check_branch
        %448 = sbr.rel (%p445) target = $region12
      $region11: #{tpu_custom_call.1} parent=5 // pred_region
        %s449 = ssub.s32 %s38, 1
        // Predicated region
        $region13: #{tpu_custom_call.1} parent=11 // pred_check
          %p450 = pneg %p155
        $region14: #{tpu_custom_call.1} parent=11 // pred_check_branch
          %452 = sbr.rel (%p450) target = $region16
        $region15: #{tpu_custom_call.1} parent=11 // pred_region
          %s454 = ssub.s32 256, 256
          %455 = vsyncadd [#allocation12], %s454
          %s456 = sshll.u32 [#allocation11], 4
          %s457 = int_to_ptr.vmem [resolvable:$true] %s456
          %462 = dma.hbm_to_vmem [thread:$0]  %s3, 256, %s457, [#allocation12], 64, 64, 4
        $region16: #{tpu_custom_call.1} parent=11 // pred_fallthru
          _
        // Predicated region
        $region17: #{tpu_custom_call.1} parent=11 // pred_check
          %p463 = pneg %p176
        $region18: #{tpu_custom_call.1} parent=11 // pred_check_branch
          %465 = sbr.rel (%p463) target = $region20
        $region19: #{tpu_custom_call.1} parent=11 // pred_region
          %s467 = ssub.s32 16, 16
          %468 = vsyncadd [#allocation12], %s467
          %s470 = sshll.u32 [#allocation13], 4
          %s471 = int_to_ptr.vmem [resolvable:$true] %s470
          %473 = dma.hbm_to_vmem [thread:$0]  %s4, 16, %s471, [#allocation12]
        $region20: #{tpu_custom_call.1} parent=11 // pred_fallthru
          _
        // Predicated region
        $region21: #{tpu_custom_call.1} parent=11 // pred_check
          %p474 = pneg %p197
        $region22: #{tpu_custom_call.1} parent=11 // pred_check_branch
          %476 = sbr.rel (%p474) target = $region24
        $region23: #{tpu_custom_call.1} parent=11 // pred_region
          %s478 = ssub.s32 256, 256
          %479 = vsyncadd [#allocation15], %s478
          %s480 = sshll.u32 [#allocation14], 4
          %s481 = int_to_ptr.vmem [resolvable:$true] %s480
          %486 = dma.hbm_to_vmem [thread:$0]  %s5, 256, %s481, [#allocation15], 64, 64, 4
        $region24: #{tpu_custom_call.1} parent=11 // pred_fallthru
          _
        // Predicated region
        $region25: #{tpu_custom_call.1} parent=11 // pred_check
          %p487 = pneg %p218
        $region26: #{tpu_custom_call.1} parent=11 // pred_check_branch
          %489 = sbr.rel (%p487) target = $region28
        $region27: #{tpu_custom_call.1} parent=11 // pred_region
          %s491 = ssub.s32 256, 256
          %492 = vsyncadd [#allocation15], %s491
          %s493 = sshll.u32 [#allocation16], 4
          %s494 = int_to_ptr.vmem [resolvable:$true] %s493
          %499 = dma.hbm_to_vmem [thread:$0]  %s6, 256, %s494, [#allocation15], 64, 64, 4
        $region28: #{tpu_custom_call.1} parent=11 // pred_fallthru
          _
        // Predicated region
        $region29: #{tpu_custom_call.1} parent=11 // pred_check
          %p500 = pneg %p239
        $region30: #{tpu_custom_call.1} parent=11 // pred_check_branch
          %502 = sbr.rel (%p500) target = $region32
        $region31: #{tpu_custom_call.1} parent=11 // pred_region
          %s504 = ssub.s32 16, 16
          %505 = vsyncadd [#allocation18], %s504
          %s507 = sshll.u32 [#allocation17], 4
          %s508 = int_to_ptr.vmem [resolvable:$true] %s507
          %510 = dma.hbm_to_vmem [thread:$0]  %s7, 16, %s508, [#allocation18]
        $region32: #{tpu_custom_call.1} parent=11 // pred_fallthru
          _
        // Predicated region
        $region33: #{tpu_custom_call.1} parent=11 // pred_check
          %p511 = pneg %p260
        $region34: #{tpu_custom_call.1} parent=11 // pred_check_branch
          %513 = sbr.rel (%p511) target = $region36
        $region35: #{tpu_custom_call.1} parent=11 // pred_region
          %s515 = ssub.s32 256, 256
          %516 = vsyncadd [#allocation18], %s515
          %s517 = sshll.u32 [#allocation19], 4
          %s518 = int_to_ptr.vmem [resolvable:$true] %s517
          %523 = dma.hbm_to_vmem [thread:$0]  %s8, 256, %s518, [#allocation18], 64, 64, 4
        $region36: #{tpu_custom_call.1} parent=11 // pred_fallthru
          _
        // Predicated region
        $region37: #{tpu_custom_call.1} parent=11 // pred_check
          %p524 = pneg %p281
        $region38: #{tpu_custom_call.1} parent=11 // pred_check_branch
          %526 = sbr.rel (%p524) target = $region40
        $region39: #{tpu_custom_call.1} parent=11 // pred_region
          %s528 = ssub.s32 16, 16
          %529 = vsyncadd [#allocation21], %s528
          %s531 = sshll.u32 [#allocation20], 4
          %s532 = int_to_ptr.vmem [resolvable:$true] %s531
          %534 = dma.hbm_to_vmem [thread:$0]  %s9, 16, %s532, [#allocation21]
        $region40: #{tpu_custom_call.1} parent=11 // pred_fallthru
          _
        // Predicated region
        $region41: #{tpu_custom_call.1} parent=11 // pred_check
          %p535 = pneg %p302
        $region42: #{tpu_custom_call.1} parent=11 // pred_check_branch
          %537 = sbr.rel (%p535) target = $region44
        $region43: #{tpu_custom_call.1} parent=11 // pred_region
          %s539 = ssub.s32 16, 16
          %540 = vsyncadd [#allocation21], %s539
          %s542 = sshll.u32 [#allocation22], 4
          %s543 = int_to_ptr.vmem [resolvable:$true] %s542
          %545 = dma.hbm_to_vmem [thread:$0]  %s10, 16, %s543, [#allocation21]
        $region44: #{tpu_custom_call.1} parent=11 // pred_fallthru
          _
        // Predicated region
        $region45: #{tpu_custom_call.1} parent=11 // pred_check
          %p546 = pneg %p323
        $region46: #{tpu_custom_call.1} parent=11 // pred_check_branch
          %548 = sbr.rel (%p546) target = $region48
        $region47: #{tpu_custom_call.1} parent=11 // pred_region
          %s550 = ssub.s32 256, 256
          %551 = vsyncadd [#allocation24], %s550
          %s552 = sshll.u32 [#allocation23], 4
          %s553 = int_to_ptr.vmem [resolvable:$true] %s552
          %558 = dma.hbm_to_vmem [thread:$0]  %s11, 256, %s553, [#allocation24], 64, 64, 4
        $region48: #{tpu_custom_call.1} parent=11 // pred_fallthru
          _
        // Predicated region
        $region49: #{tpu_custom_call.1} parent=11 // pred_check
          %p559 = pneg %p344
        $region50: #{tpu_custom_call.1} parent=11 // pred_check_branch
          %561 = sbr.rel (%p559) target = $region52
        $region51: #{tpu_custom_call.1} parent=11 // pred_region
          %s563 = ssub.s32 16, 16
          %564 = vsyncadd [#allocation24], %s563
          %s566 = sshll.u32 [#allocation25], 4
          %s567 = int_to_ptr.vmem [resolvable:$true] %s566
          %569 = dma.hbm_to_vmem [thread:$0]  %s12, 16, %s567, [#allocation24]
        $region52: #{tpu_custom_call.1} parent=11 // pred_fallthru
          _
        // Predicated region
        $region53: #{tpu_custom_call.1} parent=11 // pred_check
          %p570 = pneg %p365
        $region54: #{tpu_custom_call.1} parent=11 // pred_check_branch
          %572 = sbr.rel (%p570) target = $region56
        $region55: #{tpu_custom_call.1} parent=11 // pred_region
          %s574 = ssub.s32 16, 16
          %575 = vsyncadd [#allocation27], %s574
          %s577 = sshll.u32 [#allocation26], 4
          %s578 = int_to_ptr.vmem [resolvable:$true] %s577
          %580 = dma.hbm_to_vmem [thread:$0]  %s13, 16, %s578, [#allocation27]
        $region56: #{tpu_custom_call.1} parent=11 // pred_fallthru
          _
        // Predicated region
        $region57: #{tpu_custom_call.1} parent=11 // pred_check
          %p581 = pneg %p386
        $region58: #{tpu_custom_call.1} parent=11 // pred_check_branch
          %583 = sbr.rel (%p581) target = $region60
        $region59: #{tpu_custom_call.1} parent=11 // pred_region
          %s585 = ssub.s32 256, 256
          %586 = vsyncadd [#allocation27], %s585
          %s587 = sshll.u32 [#allocation28], 4
          %s588 = int_to_ptr.vmem [resolvable:$true] %s587
          %593 = dma.hbm_to_vmem [thread:$0]  %s14, 256, %s588, [#allocation27], 128, 128, 8
        $region60: #{tpu_custom_call.1} parent=11 // pred_fallthru
          _
        // Predicated region
        $region61: #{tpu_custom_call.1} parent=11 // pred_check
          %p594 = pneg %p407
        $region62: #{tpu_custom_call.1} parent=11 // pred_check_branch
          %596 = sbr.rel (%p594) target = $region64
        $region63: #{tpu_custom_call.1} parent=11 // pred_region
          %s598 = ssub.s32 256, 256
          %599 = vsyncadd [#allocation30], %s598
          %s600 = sshll.u32 [#allocation29], 4
          %s601 = int_to_ptr.vmem [resolvable:$true] %s600
          %606 = dma.hbm_to_vmem [thread:$0]  %s15, 256, %s601, [#allocation30], 128, 128, 8
        $region64: #{tpu_custom_call.1} parent=11 // pred_fallthru
          _
      $region12: #{tpu_custom_call.1} parent=5 // pred_fallthru
        _
      %p607 = scmp.lt.s32.totalorder %s38, 4
      // Predicated region
      $region65: #{tpu_custom_call.1} parent=5 // pred_check
        %p608 = pneg %p607
      $region66: #{tpu_custom_call.1} parent=5 // pred_check_branch
        %610 = sbr.rel (%p608) target = $region68
      $region67: #{tpu_custom_call.1} parent=5 // pred_region
        // Predicated region
        $region69: #{tpu_custom_call.1} parent=67 // pred_check
          %p611 = pneg %p72
        $region70: #{tpu_custom_call.1} parent=67 // pred_check_branch
          %613 = sbr.rel (%p611) target = $region72
        $region71: #{tpu_custom_call.1} parent=67 // pred_region
          %s614 = sand.u32 %s62, 1
          %s615 = scalar_lea.sflag [#allocation6], %s614
          %s616 = sand.u32 %s62, 1
          %s617 = smul.addr %s616, 16
          %s618 = scalar_lea.vmem [#allocation5], %s617
          %s620 = ssub.s32 256, 256
          %621 = vsyncadd %s615, %s620
          %s622 = smul.addr %s46, 2
          %s623 = smul.addr %s45, 4
          %s624 = sadd.s32 %s622, %s623
          %s625 = smul.addr %s624, 128
          %s626 = scalar_lea.hbm %s0, %s625
          %s627 = sshll.u32 %s618, 4
          %s628 = int_to_ptr.vmem [resolvable:$true] %s627
          %633 = dma.hbm_to_vmem [thread:$0]  %s626, 256, %s628, %s615, 128, 128, 8
        $region72: #{tpu_custom_call.1} parent=67 // pred_fallthru
          _
        // Predicated region
        $region73: #{tpu_custom_call.1} parent=67 // pred_check
          %p634 = pneg %p100
        $region74: #{tpu_custom_call.1} parent=67 // pred_check_branch
          %636 = sbr.rel (%p634) target = $region76
        $region75: #{tpu_custom_call.1} parent=67 // pred_region
          %s637 = sand.u32 %s38, 1
          %s638 = scalar_lea.sflag [#allocation9], %s637
          %s639 = sand.u32 %s90, 1
          %s640 = smul.addr %s639, 16
          %s641 = scalar_lea.vmem [#allocation8], %s640
          %s643 = ssub.s32 256, 256
          %644 = vsyncadd %s638, %s643
          %s645 = smul.addr %s46, 2
          %s646 = smul.addr %s45, 4
          %s647 = sadd.s32 %s645, %s646
          %s648 = smul.addr %s647, 128
          %s649 = scalar_lea.hbm %s1, %s648
          %s650 = sshll.u32 %s641, 4
          %s651 = int_to_ptr.vmem [resolvable:$true] %s650
          %656 = dma.hbm_to_vmem [thread:$0]  %s649, 256, %s651, %s638, 128, 128, 8
        $region76: #{tpu_custom_call.1} parent=67 // pred_fallthru
          _
        // Predicated region
        $region77: #{tpu_custom_call.1} parent=67 // pred_check
          %p657 = pneg %p128
        $region78: #{tpu_custom_call.1} parent=67 // pred_check_branch
          %659 = sbr.rel (%p657) target = $region80
        $region79: #{tpu_custom_call.1} parent=67 // pred_region
          %s660 = sand.u32 %s38, 1
          %s661 = scalar_lea.sflag [#allocation9], %s660
          %s662 = sand.u32 %s118, 1
          %s663 = smul.addr %s662, 16
          %s664 = scalar_lea.vmem [#allocation10], %s663
          %s666 = ssub.s32 256, 256
          %667 = vsyncadd %s661, %s666
          %s668 = smul.addr %s46, 2
          %s669 = smul.addr %s45, 4
          %s670 = sadd.s32 %s668, %s669
          %s671 = smul.addr %s670, 128
          %s672 = scalar_lea.hbm %s2, %s671
          %s673 = sshll.u32 %s664, 4
          %s674 = int_to_ptr.vmem [resolvable:$true] %s673
          %679 = dma.hbm_to_vmem [thread:$0]  %s672, 256, %s674, %s661, 128, 128, 8
        $region80: #{tpu_custom_call.1} parent=67 // pred_fallthru
          _
      $region68: #{tpu_custom_call.1} parent=5 // pred_fallthru
        _
      %p680 = scmp.le.s32.totalorder 1, %s38
      %p681 = scmp.lt.s32.totalorder %s38, 5
      %p682 = pnand %p680, %p681
      %p683 = pneg %p682
      // Predicated region
      $region81: #{tpu_custom_call.1} parent=5 // pred_check
        _
      $region82: #{tpu_custom_call.1} parent=5 // pred_check_branch
        %685 = sbr.rel (%p682) target = $region84
      $region83: #{tpu_custom_call.1} parent=5 // pred_region
        %s686 = ssub.s32 %s38, 1
        %s687 = sand.u32 %s65, 1
        %s688 = scalar_lea.sflag [#allocation6], %s687
        %s689 = sand.u32 %s65, 1
        %s690 = smul.addr %s689, 16
        %s691 = scalar_lea.vmem [#allocation5], %s690
        // Predicated region
        $region85: #{tpu_custom_call.1} parent=83 // pred_check
          %p692 = pneg %p78
        $region86: #{tpu_custom_call.1} parent=83 // pred_check_branch
          %694 = sbr.rel (%p692) target = $region88
        $region87: #{tpu_custom_call.1} parent=83 // pred_region
          %695 = dma.done %s688, 256
        $region88: #{tpu_custom_call.1} parent=83 // pred_fallthru
          _
        %s696 = sand.u32 %s43, 1
        %s697 = scalar_lea.sflag [#allocation9], %s696
        %s698 = sand.u32 %s93, 1
        %s699 = smul.addr %s698, 16
        %s700 = scalar_lea.vmem [#allocation8], %s699
        // Predicated region
        $region89: #{tpu_custom_call.1} parent=83 // pred_check
          %p701 = pneg %p106
        $region90: #{tpu_custom_call.1} parent=83 // pred_check_branch
          %703 = sbr.rel (%p701) target = $region92
        $region91: #{tpu_custom_call.1} parent=83 // pred_region
          %704 = dma.done %s697, 256
        $region92: #{tpu_custom_call.1} parent=83 // pred_fallthru
          _
        %s705 = sand.u32 %s43, 1
        %s706 = scalar_lea.sflag [#allocation9], %s705
        %s707 = sand.u32 %s121, 1
        %s708 = smul.addr %s707, 16
        %s709 = scalar_lea.vmem [#allocation10], %s708
        // Predicated region
        $region93: #{tpu_custom_call.1} parent=83 // pred_check
          %p710 = pneg %p134
        $region94: #{tpu_custom_call.1} parent=83 // pred_check_branch
          %712 = sbr.rel (%p710) target = $region96
        $region95: #{tpu_custom_call.1} parent=83 // pred_region
          %713 = dma.done %s706, 256
        $region96: #{tpu_custom_call.1} parent=83 // pred_fallthru
          _
        // Predicated region
        $region97: #{tpu_custom_call.1} parent=83 // pred_check
          %p714 = pneg %p155
        $region98: #{tpu_custom_call.1} parent=83 // pred_check_branch
          %716 = sbr.rel (%p714) target = $region100
        $region99: #{tpu_custom_call.1} parent=83 // pred_region
          %717 = dma.done [#allocation12], 256
        $region100: #{tpu_custom_call.1} parent=83 // pred_fallthru
          _
        // Predicated region
        $region101: #{tpu_custom_call.1} parent=83 // pred_check
          %p718 = pneg %p176
        $region102: #{tpu_custom_call.1} parent=83 // pred_check_branch
          %720 = sbr.rel (%p718) target = $region104
        $region103: #{tpu_custom_call.1} parent=83 // pred_region
          %721 = dma.done [#allocation12], 16
        $region104: #{tpu_custom_call.1} parent=83 // pred_fallthru
          _
        // Predicated region
        $region105: #{tpu_custom_call.1} parent=83 // pred_check
          %p722 = pneg %p197
        $region106: #{tpu_custom_call.1} parent=83 // pred_check_branch
          %724 = sbr.rel (%p722) target = $region108
        $region107: #{tpu_custom_call.1} parent=83 // pred_region
          %725 = dma.done [#allocation15], 256
        $region108: #{tpu_custom_call.1} parent=83 // pred_fallthru
          _
        // Predicated region
        $region109: #{tpu_custom_call.1} parent=83 // pred_check
          %p726 = pneg %p218
        $region110: #{tpu_custom_call.1} parent=83 // pred_check_branch
          %728 = sbr.rel (%p726) target = $region112
        $region111: #{tpu_custom_call.1} parent=83 // pred_region
          %729 = dma.done [#allocation15], 256
        $region112: #{tpu_custom_call.1} parent=83 // pred_fallthru
          _
        // Predicated region
        $region113: #{tpu_custom_call.1} parent=83 // pred_check
          %p730 = pneg %p239
        $region114: #{tpu_custom_call.1} parent=83 // pred_check_branch
          %732 = sbr.rel (%p730) target = $region116
        $region115: #{tpu_custom_call.1} parent=83 // pred_region
          %733 = dma.done [#allocation18], 16
        $region116: #{tpu_custom_call.1} parent=83 // pred_fallthru
          _
        // Predicated region
        $region117: #{tpu_custom_call.1} parent=83 // pred_check
          %p734 = pneg %p260
        $region118: #{tpu_custom_call.1} parent=83 // pred_check_branch
          %736 = sbr.rel (%p734) target = $region120
        $region119: #{tpu_custom_call.1} parent=83 // pred_region
          %737 = dma.done [#allocation18], 256
        $region120: #{tpu_custom_call.1} parent=83 // pred_fallthru
          _
        // Predicated region
        $region121: #{tpu_custom_call.1} parent=83 // pred_check
          %p738 = pneg %p281
        $region122: #{tpu_custom_call.1} parent=83 // pred_check_branch
          %740 = sbr.rel (%p738) target = $region124
        $region123: #{tpu_custom_call.1} parent=83 // pred_region
          %741 = dma.done [#allocation21], 16
        $region124: #{tpu_custom_call.1} parent=83 // pred_fallthru
          _
        // Predicated region
        $region125: #{tpu_custom_call.1} parent=83 // pred_check
          %p742 = pneg %p302
        $region126: #{tpu_custom_call.1} parent=83 // pred_check_branch
          %744 = sbr.rel (%p742) target = $region128
        $region127: #{tpu_custom_call.1} parent=83 // pred_region
          %745 = dma.done [#allocation21], 16
        $region128: #{tpu_custom_call.1} parent=83 // pred_fallthru
          _
        // Predicated region
        $region129: #{tpu_custom_call.1} parent=83 // pred_check
          %p746 = pneg %p323
        $region130: #{tpu_custom_call.1} parent=83 // pred_check_branch
          %748 = sbr.rel (%p746) target = $region132
        $region131: #{tpu_custom_call.1} parent=83 // pred_region
          %749 = dma.done [#allocation24], 256
        $region132: #{tpu_custom_call.1} parent=83 // pred_fallthru
          _
        // Predicated region
        $region133: #{tpu_custom_call.1} parent=83 // pred_check
          %p750 = pneg %p344
        $region134: #{tpu_custom_call.1} parent=83 // pred_check_branch
          %752 = sbr.rel (%p750) target = $region136
        $region135: #{tpu_custom_call.1} parent=83 // pred_region
          %753 = dma.done [#allocation24], 16
        $region136: #{tpu_custom_call.1} parent=83 // pred_fallthru
          _
        // Predicated region
        $region137: #{tpu_custom_call.1} parent=83 // pred_check
          %p754 = pneg %p365
        $region138: #{tpu_custom_call.1} parent=83 // pred_check_branch
          %756 = sbr.rel (%p754) target = $region140
        $region139: #{tpu_custom_call.1} parent=83 // pred_region
          %757 = dma.done [#allocation27], 16
        $region140: #{tpu_custom_call.1} parent=83 // pred_fallthru
          _
        // Predicated region
        $region141: #{tpu_custom_call.1} parent=83 // pred_check
          %p758 = pneg %p386
        $region142: #{tpu_custom_call.1} parent=83 // pred_check_branch
          %760 = sbr.rel (%p758) target = $region144
        $region143: #{tpu_custom_call.1} parent=83 // pred_region
          %761 = dma.done [#allocation27], 256
        $region144: #{tpu_custom_call.1} parent=83 // pred_fallthru
          _
        // Predicated region
        $region145: #{tpu_custom_call.1} parent=83 // pred_check
          %p762 = pneg %p407
        $region146: #{tpu_custom_call.1} parent=83 // pred_check_branch
          %764 = sbr.rel (%p762) target = $region148
        $region147: #{tpu_custom_call.1} parent=83 // pred_region
          %765 = dma.done [#allocation30], 256
        $region148: #{tpu_custom_call.1} parent=83 // pred_fallthru
          _
        %s766 = sand.u32 %s65, 1
        %s767 = scalar_lea.sflag [#allocation6], %s766
        %s768 = sand.u32 %s65, 1
        %s769 = smul.addr %s768, 16
        %s770 = scalar_lea.vmem [#allocation5], %s769
        %p771 = pneg %p78
        %p772 = pneg %p75
        %s773 = sand.u32 %s43, 1
        %s774 = scalar_lea.sflag [#allocation9], %s773
        %s775 = sand.u32 %s93, 1
        %s776 = smul.addr %s775, 16
        %s777 = scalar_lea.vmem [#allocation8], %s776
        %p778 = pneg %p106
        %p779 = pneg %p103
        %s780 = sand.u32 %s43, 1
        %s781 = scalar_lea.sflag [#allocation9], %s780
        %s782 = sand.u32 %s121, 1
        %s783 = smul.addr %s782, 16
        %s784 = scalar_lea.vmem [#allocation10], %s783
        %p785 = pneg %p134
        %p786 = pneg %p131
        %p787 = pneg %p155
        %p788 = pneg %p152
        %p789 = pneg %p176
        %p790 = pneg %p173
        %p791 = pneg %p197
        %p792 = pneg %p194
        %p793 = pneg %p218
        %p794 = pneg %p215
        %p795 = pneg %p239
        %p796 = pneg %p236
        %p797 = pneg %p260
        %p798 = pneg %p257
        %p799 = pneg %p281
        %p800 = pneg %p278
        %p801 = pneg %p302
        %p802 = pneg %p299
        %p803 = pneg %p323
        %p804 = pneg %p320
        %p805 = pneg %p344
        %p806 = pneg %p341
        %p807 = pneg %p365
        %p808 = pneg %p362
        %p809 = pneg %p386
        %p810 = pneg %p383
        %p811 = pneg %p407
        %p812 = pneg %p404
        %p813 = pneg %p435
        %p814 = pneg %p432
        %s815 = sand.u32 %s422, 1
        %s816 = scalar_lea.sflag [#allocation7], %s815
        %s817 = sand.u32 %s422, 1
        %s818 = smul.addr %s817, 16
        %s819 = scalar_lea.vmem [#allocation31], %s818
        %p821 = scmp.eq.s32.totalorder %s48, 0
        // Predicated region
        $region149: #{tpu_custom_call.1} parent=83 // pred_check
          %p822 = pneg %p821
        $region150: #{tpu_custom_call.1} parent=83 // pred_check_branch
          %824 = sbr.rel (%p822) target = $region152
        $region151: #{tpu_custom_call.1} parent=83 // pred_region
          %vm825 = vcmask 254976
          %826 = vst.msk [vmem:[#allocation2] sm:$0x3] %vm825, 0.0
          %827 = vst.msk [vmem:[#allocation3] sm:$0x3] %vm825, 0.0
        $region152: #{tpu_custom_call.1} parent=83 // pred_fallthru
          _
        %v828 = vld [vmem:[#allocation2] sm:$0x3]
        %v829 = vld [vmem:[#allocation3] sm:$0x3]
        %v830 = vpack.c.bf16 %v828, %v828
        %v831 = vld [vmem:[#allocation11] sm:$0xf]
        %v832 = vld [vmem:[#allocation11 + $0x4] sm:$0xf]
        %v833 = vld [vmem:[#allocation11 + $0x8] sm:$0xf]
        %v834 = vld [vmem:[#allocation11 + $0xc] sm:$0xf]
        %v835 = vld [vmem:[#allocation13] sm:$0x1]
        %v837 = vlaneseq
        %v838 = vshrl.u32 %v837, 7
        %v839 = vsub.s32 0, %v838
        %v840 = vrot.slane %v835, %v839
        %v846 = vunpack.c.l.b16 %v831
        %v847 = vunpack.c.l.b16 %v832
        %v848 = vunpack.c.l.b16 %v833
        %v849 = vunpack.c.l.b16 %v834
        %v850 = vpack.c.b16 %v847, %v846
        %v851 = vpack.c.b16 %v849, %v848
        %vm854 = vcmask 261120
        %v856 = vsel %vm854, %v830, 0
        %858 = vmatprep.subr.bf16.mxu0 0
        %859 = vmatpush1.bf16.msra.mxu0 %v850
        %860 = vmatprep.subr.bf16.mxu0 0
        %861 = vmatpush1.bf16.msra.mxu0 %v851
        %862 = vmatprep.subr.bf16.mxu0 0
        %863 = vmatpush1.bf16.msra.mxu0 0
        %864 = vmatprep.subr.bf16.mxu0 0
        %865 = vmatpush1.bf16.msra.mxu0 0
        %866 = vmatprep.subr.bf16.mxu0 0
        %867 = vmatpush1.bf16.msra.mxu0 0
        %868 = vmatprep.subr.bf16.mxu0 0
        %869 = vmatpush1.bf16.msra.mxu0 0
        %870 = vmatprep.subr.bf16.mxu0 0
        %871 = vmatpush1.bf16.msra.mxu0 0
        %872 = vmatprep.subr.bf16.mxu0 0
        %873 = vmatpush1.bf16.msra.mxu0 0
        %874 = vmatprep.subr.bf16.mxu0 0
        %875 = vmatpush1.bf16.msra.mxu0 0
        %876 = vmatprep.subr.bf16.mxu0 0
        %877 = vmatpush1.bf16.msra.mxu0 0
        %878 = vmatprep.subr.bf16.mxu0 0
        %879 = vmatpush1.bf16.msra.mxu0 0
        %880 = vmatprep.subr.bf16.mxu0 0
        %881 = vmatpush1.bf16.msra.mxu0 0
        %882 = vmatprep.subr.bf16.mxu0 0
        %883 = vmatpush1.bf16.msra.mxu0 0
        %884 = vmatprep.subr.bf16.mxu0 0
        %885 = vmatpush1.bf16.msra.mxu0 0
        %886 = vmatprep.subr.bf16.mxu0 0
        %887 = vmatpush1.bf16.msra.mxu0 0
        %888 = vmatprep.subr.bf16.mxu0 0
        %889 = vmatpush1.bf16.msra.mxu0 0
        %890 = vmatprep.mubr.bf16.mxu0 0
        %891 = vmatmul.mubr.bf16.gmra.mrb[0].mxu0 %v856
        %v892 = vpop.f32.mrb[0].mxu0
        %v893 = vadd.f32 %v840, %v892
        %v894 = vpop.f32.mrb[0].mxu0
        %v895 = vpop.f32.mrb[0].mxu0
        %v896 = vpop.f32.mrb[0].mxu0
        %897 = vdwg.mxu0
        %v898 = vld [vmem:[%s691] sm:$0x3]
        %v899 = vadd.f32 %v898, %v893
        %v900 = vxor.u32 %v899, 2147483648
        %v901 = vmul.f32 %v900, 1.442695
        %v902 = vpow.pop %v901
        %v903 = vadd.f32 %v902, 1.0
        %v904 = vrcp.pop %v903
        %v905 = vmul.f32 1.0, %v904
        %907 = vrot.lane.b32.xlu0 %v893, 64
        %v908 = vpop.permute.xlu0 %907
        %v910 = vmul.f32 %v905, %v908
        %912 = vrot.lane.b32.xlu0 %v910, 64
        %v913 = vpop.permute.xlu0 %912
        %v915 = vadd.f32 %v898, %v913
        %v916 = vtanh.pop %v915
        %v917 = vsub.f32 1.0, %v905
        %919 = vrot.lane.b32.xlu0 %v916, 96
        %v920 = vpop.permute.xlu0 %919
        %v922 = vmul.f32 %v917, %v920
        %924 = vrot.lane.b32.xlu0 %v828, 32
        %v925 = vpop.permute.xlu0 %924
        %v927 = vmul.f32 %v905, %v925
        %v928 = vadd.f32 %v922, %v927
        %v929 = vld [vmem:[%s709] sm:$0x3]
        %931 = vrot.lane.b32.xlu0 %v929, 32
        %v932 = vpop.permute.xlu0 %931
        %v934 = vadd.f32 %v928, %v932
        %v935 = vld [vmem:[%s700] sm:$0x3]
        %v936 = vpack.c.bf16 %v934, %v934
        %v937 = vld [vmem:[#allocation14] sm:$0xf]
        %v938 = vld [vmem:[#allocation14 + $0x4] sm:$0xf]
        %v939 = vld [vmem:[#allocation14 + $0x8] sm:$0xf]
        %v940 = vld [vmem:[#allocation14 + $0xc] sm:$0xf]
        %942 = vrot.lane.b32.xlu0 %v936, 96
        %v943 = vpop.permute.xlu0 %942
        %v948 = vunpack.c.l.b16 %v937
        %v949 = vunpack.c.l.b16 %v938
        %v950 = vunpack.c.l.b16 %v939
        %v951 = vunpack.c.l.b16 %v940
        %v952 = vpack.c.b16 %v949, %v948
        %v953 = vpack.c.b16 %v951, %v950
        %v957 = vsel %vm854, %v943, 0
        %959 = vmatprep.subr.bf16.mxu0 0
        %960 = vmatpush1.bf16.msra.mxu0 %v952
        %961 = vmatprep.subr.bf16.mxu0 0
        %962 = vmatpush1.bf16.msra.mxu0 %v953
        %963 = vmatprep.subr.bf16.mxu0 0
        %964 = vmatpush1.bf16.msra.mxu0 0
        %965 = vmatprep.subr.bf16.mxu0 0
        %966 = vmatpush1.bf16.msra.mxu0 0
        %967 = vmatprep.subr.bf16.mxu0 0
        %968 = vmatpush1.bf16.msra.mxu0 0
        %969 = vmatprep.subr.bf16.mxu0 0
        %970 = vmatpush1.bf16.msra.mxu0 0
        %971 = vmatprep.subr.bf16.mxu0 0
        %972 = vmatpush1.bf16.msra.mxu0 0
        %973 = vmatprep.subr.bf16.mxu0 0
        %974 = vmatpush1.bf16.msra.mxu0 0
        %975 = vmatprep.subr.bf16.mxu0 0
        %976 = vmatpush1.bf16.msra.mxu0 0
        %977 = vmatprep.subr.bf16.mxu0 0
        %978 = vmatpush1.bf16.msra.mxu0 0
        %979 = vmatprep.subr.bf16.mxu0 0
        %980 = vmatpush1.bf16.msra.mxu0 0
        %981 = vmatprep.subr.bf16.mxu0 0
        %982 = vmatpush1.bf16.msra.mxu0 0
        %983 = vmatprep.subr.bf16.mxu0 0
        %984 = vmatpush1.bf16.msra.mxu0 0
        %985 = vmatprep.subr.bf16.mxu0 0
        %986 = vmatpush1.bf16.msra.mxu0 0
        %987 = vmatprep.subr.bf16.mxu0 0
        %988 = vmatpush1.bf16.msra.mxu0 0
        %989 = vmatprep.subr.bf16.mxu0 0
        %990 = vmatpush1.bf16.msra.mxu0 0
        %991 = vmatprep.mubr.bf16.mxu0 0
        %992 = vmatmul.mubr.bf16.gmra.mrb[0].mxu0 %v957
        %v993 = vpop.f32.mrb[0].mxu0
        %v994 = vadd.f32 0.0, %v993
        %v995 = vpop.f32.mrb[0].mxu0
        %v996 = vpop.f32.mrb[0].mxu0
        %v997 = vpop.f32.mrb[0].mxu0
        %998 = vdwg.mxu0
        %v999 = vadd.f32 %v935, %v994
        %v1000 = vpack.c.bf16 %v829, %v829
        %v1001 = vld [vmem:[#allocation16] sm:$0xf]
        %v1002 = vld [vmem:[#allocation16 + $0x4] sm:$0xf]
        %v1003 = vld [vmem:[#allocation16 + $0x8] sm:$0xf]
        %v1004 = vld [vmem:[#allocation16 + $0xc] sm:$0xf]
        %v1005 = vld [vmem:[#allocation17] sm:$0x1]
        %v1007 = vlaneseq
        %v1008 = vshrl.u32 %v1007, 7
        %v1009 = vsub.s32 0, %v1008
        %v1010 = vrot.slane %v1005, %v1009
        %v1016 = vunpack.c.l.b16 %v1001
        %v1017 = vunpack.c.l.b16 %v1002
        %v1018 = vunpack.c.l.b16 %v1003
        %v1019 = vunpack.c.l.b16 %v1004
        %v1020 = vpack.c.b16 %v1017, %v1016
        %v1021 = vpack.c.b16 %v1019, %v1018
        %v1025 = vsel %vm854, %v1000, 0
        %1027 = vmatprep.subr.bf16.mxu0 0
        %1028 = vmatpush1.bf16.msra.mxu0 %v1020
        %1029 = vmatprep.subr.bf16.mxu0 0
        %1030 = vmatpush1.bf16.msra.mxu0 %v1021
        %1031 = vmatprep.subr.bf16.mxu0 0
        %1032 = vmatpush1.bf16.msra.mxu0 0
        %1033 = vmatprep.subr.bf16.mxu0 0
        %1034 = vmatpush1.bf16.msra.mxu0 0
        %1035 = vmatprep.subr.bf16.mxu0 0
        %1036 = vmatpush1.bf16.msra.mxu0 0
        %1037 = vmatprep.subr.bf16.mxu0 0
        %1038 = vmatpush1.bf16.msra.mxu0 0
        %1039 = vmatprep.subr.bf16.mxu0 0
        %1040 = vmatpush1.bf16.msra.mxu0 0
        %1041 = vmatprep.subr.bf16.mxu0 0
        %1042 = vmatpush1.bf16.msra.mxu0 0
        %1043 = vmatprep.subr.bf16.mxu0 0
        %1044 = vmatpush1.bf16.msra.mxu0 0
        %1045 = vmatprep.subr.bf16.mxu0 0
        %1046 = vmatpush1.bf16.msra.mxu0 0
        %1047 = vmatprep.subr.bf16.mxu0 0
        %1048 = vmatpush1.bf16.msra.mxu0 0
        %1049 = vmatprep.subr.bf16.mxu0 0
        %1050 = vmatpush1.bf16.msra.mxu0 0
        %1051 = vmatprep.subr.bf16.mxu0 0
        %1052 = vmatpush1.bf16.msra.mxu0 0
        %1053 = vmatprep.subr.bf16.mxu0 0
        %1054 = vmatpush1.bf16.msra.mxu0 0
        %1055 = vmatprep.subr.bf16.mxu0 0
        %1056 = vmatpush1.bf16.msra.mxu0 0
        %1057 = vmatprep.subr.bf16.mxu0 0
        %1058 = vmatpush1.bf16.msra.mxu0 0
        %1059 = vmatprep.mubr.bf16.mxu0 0
        %1060 = vmatmul.mubr.bf16.gmra.mrb[0].mxu0 %v1025
        %v1061 = vpop.f32.mrb[0].mxu0
        %v1062 = vadd.f32 %v1010, %v1061
        %v1063 = vpop.f32.mrb[0].mxu0
        %v1064 = vpop.f32.mrb[0].mxu0
        %v1065 = vpop.f32.mrb[0].mxu0
        %1066 = vdwg.mxu0
        %v1067 = vadd.f32 %v999, %v1062
        %v1068 = vxor.u32 %v1067, 2147483648
        %v1069 = vmul.f32 %v1068, 1.442695
        %v1070 = vpow.pop %v1069
        %v1071 = vadd.f32 %v1070, 1.0
        %v1072 = vrcp.pop %v1071
        %v1073 = vmul.f32 1.0, %v1072
        %1075 = vrot.lane.b32.xlu0 %v1062, 64
        %v1076 = vpop.permute.xlu0 %1075
        %v1078 = vmul.f32 %v1073, %v1076
        %1080 = vrot.lane.b32.xlu0 %v1078, 64
        %v1081 = vpop.permute.xlu0 %1080
        %v1083 = vadd.f32 %v999, %v1081
        %v1084 = vtanh.pop %v1083
        %v1085 = vsub.f32 1.0, %v1073
        %1087 = vrot.lane.b32.xlu0 %v1084, 96
        %v1088 = vpop.permute.xlu0 %1087
        %v1090 = vmul.f32 %v1085, %v1088
        %1092 = vrot.lane.b32.xlu0 %v829, 32
        %v1093 = vpop.permute.xlu0 %1092
        %v1095 = vmul.f32 %v1073, %v1093
        %v1096 = vadd.f32 %v1090, %v1095
        %1098 = vrot.lane.b32.xlu0 %v1096, 96
        %v1099 = vpop.permute.xlu0 %1098
        %vm1101 = vcmask 254976
        %1102 = vst.msk [vmem:[#allocation4] sm:$0x3] %vm1101, %v1099
        %v1103 = vpack.c.bf16 %v928, %v928
        %v1104 = vld [vmem:[#allocation11] sm:$0xf]
        %v1105 = vld [vmem:[#allocation11 + $0x4] sm:$0xf]
        %v1106 = vld [vmem:[#allocation11 + $0x8] sm:$0xf]
        %v1107 = vld [vmem:[#allocation11 + $0xc] sm:$0xf]
        %v1108 = vld [vmem:[#allocation13] sm:$0x1]
        %v1110 = vlaneseq
        %v1111 = vshrl.u32 %v1110, 7
        %v1112 = vsub.s32 0, %v1111
        %v1113 = vrot.slane %v1108, %v1112
        %1116 = vrot.lane.b32.xlu0 %v1103, 96
        %v1117 = vpop.permute.xlu0 %1116
        %v1122 = vunpack.c.l.b16 %v1104
        %v1123 = vunpack.c.l.b16 %v1105
        %v1124 = vunpack.c.l.b16 %v1106
        %v1125 = vunpack.c.l.b16 %v1107
        %v1126 = vpack.c.b16 %v1123, %v1122
        %v1127 = vpack.c.b16 %v1125, %v1124
        %v1131 = vsel %vm854, %v1117, 0
        %1133 = vmatprep.subr.bf16.mxu0 0
        %1134 = vmatpush1.bf16.msra.mxu0 %v1126
        %1135 = vmatprep.subr.bf16.mxu0 0
        %1136 = vmatpush1.bf16.msra.mxu0 %v1127
        %1137 = vmatprep.subr.bf16.mxu0 0
        %1138 = vmatpush1.bf16.msra.mxu0 0
        %1139 = vmatprep.subr.bf16.mxu0 0
        %1140 = vmatpush1.bf16.msra.mxu0 0
        %1141 = vmatprep.subr.bf16.mxu0 0
        %1142 = vmatpush1.bf16.msra.mxu0 0
        %1143 = vmatprep.subr.bf16.mxu0 0
        %1144 = vmatpush1.bf16.msra.mxu0 0
        %1145 = vmatprep.subr.bf16.mxu0 0
        %1146 = vmatpush1.bf16.msra.mxu0 0
        %1147 = vmatprep.subr.bf16.mxu0 0
        %1148 = vmatpush1.bf16.msra.mxu0 0
        %1149 = vmatprep.subr.bf16.mxu0 0
        %1150 = vmatpush1.bf16.msra.mxu0 0
        %1151 = vmatprep.subr.bf16.mxu0 0
        %1152 = vmatpush1.bf16.msra.mxu0 0
        %1153 = vmatprep.subr.bf16.mxu0 0
        %1154 = vmatpush1.bf16.msra.mxu0 0
        %1155 = vmatprep.subr.bf16.mxu0 0
        %1156 = vmatpush1.bf16.msra.mxu0 0
        %1157 = vmatprep.subr.bf16.mxu0 0
        %1158 = vmatpush1.bf16.msra.mxu0 0
        %1159 = vmatprep.subr.bf16.mxu0 0
        %1160 = vmatpush1.bf16.msra.mxu0 0
        %1161 = vmatprep.subr.bf16.mxu0 0
        %1162 = vmatpush1.bf16.msra.mxu0 0
        %1163 = vmatprep.subr.bf16.mxu0 0
        %1164 = vmatpush1.bf16.msra.mxu0 0
        %1165 = vmatprep.mubr.bf16.mxu0 0
        %1166 = vmatmul.mubr.bf16.gmra.mrb[0].mxu0 %v1131
        %v1167 = vpop.f32.mrb[0].mxu0
        %v1168 = vadd.f32 %v1113, %v1167
        %v1169 = vpop.f32.mrb[0].mxu0
        %v1170 = vpop.f32.mrb[0].mxu0
        %v1171 = vpop.f32.mrb[0].mxu0
        %1172 = vdwg.mxu0
        %s1173 = scalar_lea.vmem %s691, 2 [#allocation5]
        %v1174 = vld [vmem:[%s1173] sm:$0x3]
        %v1175 = vadd.f32 %v1174, %v1168
        %v1176 = vxor.u32 %v1175, 2147483648
        %v1177 = vmul.f32 %v1176, 1.442695
        %v1178 = vpow.pop %v1177
        %v1179 = vadd.f32 %v1178, 1.0
        %v1180 = vrcp.pop %v1179
        %v1181 = vmul.f32 1.0, %v1180
        %1183 = vrot.lane.b32.xlu0 %v1168, 64
        %v1184 = vpop.permute.xlu0 %1183
        %v1186 = vmul.f32 %v1181, %v1184
        %1188 = vrot.lane.b32.xlu0 %v1186, 64
        %v1189 = vpop.permute.xlu0 %1188
        %v1191 = vadd.f32 %v1174, %v1189
        %v1192 = vtanh.pop %v1191
        %v1193 = vsub.f32 1.0, %v1181
        %1195 = vrot.lane.b32.xlu0 %v1192, 96
        %v1196 = vpop.permute.xlu0 %1195
        %v1198 = vmul.f32 %v1193, %v1196
        %v1199 = vmul.f32 %v1181, %v928
        %v1200 = vadd.f32 %v1198, %v1199
        %s1201 = scalar_lea.vmem %s709, 2 [#allocation10]
        %v1202 = vld [vmem:[%s1201] sm:$0x3]
        %1204 = vrot.lane.b32.xlu0 %v1202, 32
        %v1205 = vpop.permute.xlu0 %1204
        %v1207 = vadd.f32 %v1200, %v1205
        %s1208 = scalar_lea.vmem %s700, 2 [#allocation8]
        %v1209 = vld [vmem:[%s1208] sm:$0x3]
        %v1210 = vpack.c.bf16 %v1207, %v1207
        %v1211 = vld [vmem:[#allocation14] sm:$0xf]
        %v1212 = vld [vmem:[#allocation14 + $0x4] sm:$0xf]
        %v1213 = vld [vmem:[#allocation14 + $0x8] sm:$0xf]
        %v1214 = vld [vmem:[#allocation14 + $0xc] sm:$0xf]
        %1216 = vrot.lane.b32.xlu0 %v1210, 96
        %v1217 = vpop.permute.xlu0 %1216
        %v1222 = vunpack.c.l.b16 %v1211
        %v1223 = vunpack.c.l.b16 %v1212
        %v1224 = vunpack.c.l.b16 %v1213
        %v1225 = vunpack.c.l.b16 %v1214
        %v1226 = vpack.c.b16 %v1223, %v1222
        %v1227 = vpack.c.b16 %v1225, %v1224
        %v1231 = vsel %vm854, %v1217, 0
        %1233 = vmatprep.subr.bf16.mxu0 0
        %1234 = vmatpush1.bf16.msra.mxu0 %v1226
        %1235 = vmatprep.subr.bf16.mxu0 0
        %1236 = vmatpush1.bf16.msra.mxu0 %v1227
        %1237 = vmatprep.subr.bf16.mxu0 0
        %1238 = vmatpush1.bf16.msra.mxu0 0
        %1239 = vmatprep.subr.bf16.mxu0 0
        %1240 = vmatpush1.bf16.msra.mxu0 0
        %1241 = vmatprep.subr.bf16.mxu0 0
        %1242 = vmatpush1.bf16.msra.mxu0 0
        %1243 = vmatprep.subr.bf16.mxu0 0
        %1244 = vmatpush1.bf16.msra.mxu0 0
        %1245 = vmatprep.subr.bf16.mxu0 0
        %1246 = vmatpush1.bf16.msra.mxu0 0
        %1247 = vmatprep.subr.bf16.mxu0 0
        %1248 = vmatpush1.bf16.msra.mxu0 0
        %1249 = vmatprep.subr.bf16.mxu0 0
        %1250 = vmatpush1.bf16.msra.mxu0 0
        %1251 = vmatprep.subr.bf16.mxu0 0
        %1252 = vmatpush1.bf16.msra.mxu0 0
        %1253 = vmatprep.subr.bf16.mxu0 0
        %1254 = vmatpush1.bf16.msra.mxu0 0
        %1255 = vmatprep.subr.bf16.mxu0 0
        %1256 = vmatpush1.bf16.msra.mxu0 0
        %1257 = vmatprep.subr.bf16.mxu0 0
        %1258 = vmatpush1.bf16.msra.mxu0 0
        %1259 = vmatprep.subr.bf16.mxu0 0
        %1260 = vmatpush1.bf16.msra.mxu0 0
        %1261 = vmatprep.subr.bf16.mxu0 0
        %1262 = vmatpush1.bf16.msra.mxu0 0
        %1263 = vmatprep.subr.bf16.mxu0 0
        %1264 = vmatpush1.bf16.msra.mxu0 0
        %1265 = vmatprep.mubr.bf16.mxu0 0
        %1266 = vmatmul.mubr.bf16.gmra.mrb[0].mxu0 %v1231
        %v1267 = vpop.f32.mrb[0].mxu0
        %v1268 = vadd.f32 0.0, %v1267
        %v1269 = vpop.f32.mrb[0].mxu0
        %v1270 = vpop.f32.mrb[0].mxu0
        %v1271 = vpop.f32.mrb[0].mxu0
        %1272 = vdwg.mxu0
        %v1273 = vadd.f32 %v1209, %v1268
        %v1274 = vpack.c.bf16 %v1096, %v1096
        %v1275 = vld [vmem:[#allocation16] sm:$0xf]
        %v1276 = vld [vmem:[#allocation16 + $0x4] sm:$0xf]
        %v1277 = vld [vmem:[#allocation16 + $0x8] sm:$0xf]
        %v1278 = vld [vmem:[#allocation16 + $0xc] sm:$0xf]
        %v1279 = vld [vmem:[#allocation17] sm:$0x1]
        %v1281 = vlaneseq
        %v1282 = vshrl.u32 %v1281, 7
        %v1283 = vsub.s32 0, %v1282
        %v1284 = vrot.slane %v1279, %v1283
        %1287 = vrot.lane.b32.xlu0 %v1274, 96
        %v1288 = vpop.permute.xlu0 %1287
        %v1293 = vunpack.c.l.b16 %v1275
        %v1294 = vunpack.c.l.b16 %v1276
        %v1295 = vunpack.c.l.b16 %v1277
        %v1296 = vunpack.c.l.b16 %v1278
        %v1297 = vpack.c.b16 %v1294, %v1293
        %v1298 = vpack.c.b16 %v1296, %v1295
        %v1302 = vsel %vm854, %v1288, 0
        %1304 = vmatprep.subr.bf16.mxu0 0
        %1305 = vmatpush1.bf16.msra.mxu0 %v1297
        %1306 = vmatprep.subr.bf16.mxu0 0
        %1307 = vmatpush1.bf16.msra.mxu0 %v1298
        %1308 = vmatprep.subr.bf16.mxu0 0
        %1309 = vmatpush1.bf16.msra.mxu0 0
        %1310 = vmatprep.subr.bf16.mxu0 0
        %1311 = vmatpush1.bf16.msra.mxu0 0
        %1312 = vmatprep.subr.bf16.mxu0 0
        %1313 = vmatpush1.bf16.msra.mxu0 0
        %1314 = vmatprep.subr.bf16.mxu0 0
        %1315 = vmatpush1.bf16.msra.mxu0 0
        %1316 = vmatprep.subr.bf16.mxu0 0
        %1317 = vmatpush1.bf16.msra.mxu0 0
        %1318 = vmatprep.subr.bf16.mxu0 0
        %1319 = vmatpush1.bf16.msra.mxu0 0
        %1320 = vmatprep.subr.bf16.mxu0 0
        %1321 = vmatpush1.bf16.msra.mxu0 0
        %1322 = vmatprep.subr.bf16.mxu0 0
        %1323 = vmatpush1.bf16.msra.mxu0 0
        %1324 = vmatprep.subr.bf16.mxu0 0
        %1325 = vmatpush1.bf16.msra.mxu0 0
        %1326 = vmatprep.subr.bf16.mxu0 0
        %1327 = vmatpush1.bf16.msra.mxu0 0
        %1328 = vmatprep.subr.bf16.mxu0 0
        %1329 = vmatpush1.bf16.msra.mxu0 0
        %1330 = vmatprep.subr.bf16.mxu0 0
        %1331 = vmatpush1.bf16.msra.mxu0 0
        %1332 = vmatprep.subr.bf16.mxu0 0
        %1333 = vmatpush1.bf16.msra.mxu0 0
        %1334 = vmatprep.subr.bf16.mxu0 0
        %1335 = vmatpush1.bf16.msra.mxu0 0
        %1336 = vmatprep.mubr.bf16.mxu0 0
        %1337 = vmatmul.mubr.bf16.gmra.mrb[0].mxu0 %v1302
        %v1338 = vpop.f32.mrb[0].mxu0
        %v1339 = vadd.f32 %v1284, %v1338
        %v1340 = vpop.f32.mrb[0].mxu0
        %v1341 = vpop.f32.mrb[0].mxu0
        %v1342 = vpop.f32.mrb[0].mxu0
        %1343 = vdwg.mxu0
        %v1344 = vadd.f32 %v1273, %v1339
        %v1345 = vxor.u32 %v1344, 2147483648
        %v1346 = vmul.f32 %v1345, 1.442695
        %v1347 = vpow.pop %v1346
        %v1348 = vadd.f32 %v1347, 1.0
        %v1349 = vrcp.pop %v1348
        %v1350 = vmul.f32 1.0, %v1349
        %1352 = vrot.lane.b32.xlu0 %v1339, 64
        %v1353 = vpop.permute.xlu0 %1352
        %v1355 = vmul.f32 %v1350, %v1353
        %1357 = vrot.lane.b32.xlu0 %v1355, 64
        %v1358 = vpop.permute.xlu0 %1357
        %v1360 = vadd.f32 %v1273, %v1358
        %v1361 = vtanh.pop %v1360
        %v1362 = vsub.f32 1.0, %v1350
        %1364 = vrot.lane.b32.xlu0 %v1361, 96
        %v1365 = vpop.permute.xlu0 %1364
        %v1367 = vmul.f32 %v1362, %v1365
        %v1368 = vmul.f32 %v1350, %v1096
        %v1369 = vadd.f32 %v1367, %v1368
        %1371 = vrot.lane.b32.xlu0 %v1369, 96
        %v1372 = vpop.permute.xlu0 %1371
        %s1374 = scalar_lea.vmem [#allocation4], 2
        %1375 = vst.msk [vmem:[%s1374] sm:$0x3] %vm1101, %v1372
        %v1376 = vpack.c.bf16 %v1200, %v1200
        %v1377 = vld [vmem:[#allocation11] sm:$0xf]
        %v1378 = vld [vmem:[#allocation11 + $0x4] sm:$0xf]
        %v1379 = vld [vmem:[#allocation11 + $0x8] sm:$0xf]
        %v1380 = vld [vmem:[#allocation11 + $0xc] sm:$0xf]
        %v1381 = vld [vmem:[#allocation13] sm:$0x1]
        %v1383 = vlaneseq
        %v1384 = vshrl.u32 %v1383, 7
        %v1385 = vsub.s32 0, %v1384
        %v1386 = vrot.slane %v1381, %v1385
        %1389 = vrot.lane.b32.xlu0 %v1376, 96
        %v1390 = vpop.permute.xlu0 %1389
        %v1395 = vunpack.c.l.b16 %v1377
        %v1396 = vunpack.c.l.b16 %v1378
        %v1397 = vunpack.c.l.b16 %v1379
        %v1398 = vunpack.c.l.b16 %v1380
        %v1399 = vpack.c.b16 %v1396, %v1395
        %v1400 = vpack.c.b16 %v1398, %v1397
        %v1404 = vsel %vm854, %v1390, 0
        %1406 = vmatprep.subr.bf16.mxu0 0
        %1407 = vmatpush1.bf16.msra.mxu0 %v1399
        %1408 = vmatprep.subr.bf16.mxu0 0
        %1409 = vmatpush1.bf16.msra.mxu0 %v1400
        %1410 = vmatprep.subr.bf16.mxu0 0
        %1411 = vmatpush1.bf16.msra.mxu0 0
        %1412 = vmatprep.subr.bf16.mxu0 0
        %1413 = vmatpush1.bf16.msra.mxu0 0
        %1414 = vmatprep.subr.bf16.mxu0 0
        %1415 = vmatpush1.bf16.msra.mxu0 0
        %1416 = vmatprep.subr.bf16.mxu0 0
        %1417 = vmatpush1.bf16.msra.mxu0 0
        %1418 = vmatprep.subr.bf16.mxu0 0
        %1419 = vmatpush1.bf16.msra.mxu0 0
        %1420 = vmatprep.subr.bf16.mxu0 0
        %1421 = vmatpush1.bf16.msra.mxu0 0
        %1422 = vmatprep.subr.bf16.mxu0 0
        %1423 = vmatpush1.bf16.msra.mxu0 0
        %1424 = vmatprep.subr.bf16.mxu0 0
        %1425 = vmatpush1.bf16.msra.mxu0 0
        %1426 = vmatprep.subr.bf16.mxu0 0
        %1427 = vmatpush1.bf16.msra.mxu0 0
        %1428 = vmatprep.subr.bf16.mxu0 0
        %1429 = vmatpush1.bf16.msra.mxu0 0
        %1430 = vmatprep.subr.bf16.mxu0 0
        %1431 = vmatpush1.bf16.msra.mxu0 0
        %1432 = vmatprep.subr.bf16.mxu0 0
        %1433 = vmatpush1.bf16.msra.mxu0 0
        %1434 = vmatprep.subr.bf16.mxu0 0
        %1435 = vmatpush1.bf16.msra.mxu0 0
        %1436 = vmatprep.subr.bf16.mxu0 0
        %1437 = vmatpush1.bf16.msra.mxu0 0
        %1438 = vmatprep.mubr.bf16.mxu0 0
        %1439 = vmatmul.mubr.bf16.gmra.mrb[0].mxu0 %v1404
        %v1440 = vpop.f32.mrb[0].mxu0
        %v1441 = vadd.f32 %v1386, %v1440
        %v1442 = vpop.f32.mrb[0].mxu0
        %v1443 = vpop.f32.mrb[0].mxu0
        %v1444 = vpop.f32.mrb[0].mxu0
        %1445 = vdwg.mxu0
        %s1446 = scalar_lea.vmem %s691, 4 [#allocation5]
        %v1447 = vld [vmem:[%s1446] sm:$0x3]
        %v1448 = vadd.f32 %v1447, %v1441
        %v1449 = vxor.u32 %v1448, 2147483648
        %v1450 = vmul.f32 %v1449, 1.442695
        %v1451 = vpow.pop %v1450
        %v1452 = vadd.f32 %v1451, 1.0
        %v1453 = vrcp.pop %v1452
        %v1454 = vmul.f32 1.0, %v1453
        %1456 = vrot.lane.b32.xlu0 %v1441, 64
        %v1457 = vpop.permute.xlu0 %1456
        %v1459 = vmul.f32 %v1454, %v1457
        %1461 = vrot.lane.b32.xlu0 %v1459, 64
        %v1462 = vpop.permute.xlu0 %1461
        %v1464 = vadd.f32 %v1447, %v1462
        %v1465 = vtanh.pop %v1464
        %v1466 = vsub.f32 1.0, %v1454
        %1468 = vrot.lane.b32.xlu0 %v1465, 96
        %v1469 = vpop.permute.xlu0 %1468
        %v1471 = vmul.f32 %v1466, %v1469
        %v1472 = vmul.f32 %v1454, %v1200
        %v1473 = vadd.f32 %v1471, %v1472
        %s1474 = scalar_lea.vmem %s709, 4 [#allocation10]
        %v1475 = vld [vmem:[%s1474] sm:$0x3]
        %1477 = vrot.lane.b32.xlu0 %v1475, 32
        %v1478 = vpop.permute.xlu0 %1477
        %v1480 = vadd.f32 %v1473, %v1478
        %s1481 = scalar_lea.vmem %s700, 4 [#allocation8]
        %v1482 = vld [vmem:[%s1481] sm:$0x3]
        %v1483 = vpack.c.bf16 %v1480, %v1480
        %v1484 = vld [vmem:[#allocation14] sm:$0xf]
        %v1485 = vld [vmem:[#allocation14 + $0x4] sm:$0xf]
        %v1486 = vld [vmem:[#allocation14 + $0x8] sm:$0xf]
        %v1487 = vld [vmem:[#allocation14 + $0xc] sm:$0xf]
        %1489 = vrot.lane.b32.xlu0 %v1483, 96
        %v1490 = vpop.permute.xlu0 %1489
        %v1495 = vunpack.c.l.b16 %v1484
        %v1496 = vunpack.c.l.b16 %v1485
        %v1497 = vunpack.c.l.b16 %v1486
        %v1498 = vunpack.c.l.b16 %v1487
        %v1499 = vpack.c.b16 %v1496, %v1495
        %v1500 = vpack.c.b16 %v1498, %v1497
        %v1504 = vsel %vm854, %v1490, 0
        %1506 = vmatprep.subr.bf16.mxu0 0
        %1507 = vmatpush1.bf16.msra.mxu0 %v1499
        %1508 = vmatprep.subr.bf16.mxu0 0
        %1509 = vmatpush1.bf16.msra.mxu0 %v1500
        %1510 = vmatprep.subr.bf16.mxu0 0
        %1511 = vmatpush1.bf16.msra.mxu0 0
        %1512 = vmatprep.subr.bf16.mxu0 0
        %1513 = vmatpush1.bf16.msra.mxu0 0
        %1514 = vmatprep.subr.bf16.mxu0 0
        %1515 = vmatpush1.bf16.msra.mxu0 0
        %1516 = vmatprep.subr.bf16.mxu0 0
        %1517 = vmatpush1.bf16.msra.mxu0 0
        %1518 = vmatprep.subr.bf16.mxu0 0
        %1519 = vmatpush1.bf16.msra.mxu0 0
        %1520 = vmatprep.subr.bf16.mxu0 0
        %1521 = vmatpush1.bf16.msra.mxu0 0
        %1522 = vmatprep.subr.bf16.mxu0 0
        %1523 = vmatpush1.bf16.msra.mxu0 0
        %1524 = vmatprep.subr.bf16.mxu0 0
        %1525 = vmatpush1.bf16.msra.mxu0 0
        %1526 = vmatprep.subr.bf16.mxu0 0
        %1527 = vmatpush1.bf16.msra.mxu0 0
        %1528 = vmatprep.subr.bf16.mxu0 0
        %1529 = vmatpush1.bf16.msra.mxu0 0
        %1530 = vmatprep.subr.bf16.mxu0 0
        %1531 = vmatpush1.bf16.msra.mxu0 0
        %1532 = vmatprep.subr.bf16.mxu0 0
        %1533 = vmatpush1.bf16.msra.mxu0 0
        %1534 = vmatprep.subr.bf16.mxu0 0
        %1535 = vmatpush1.bf16.msra.mxu0 0
        %1536 = vmatprep.subr.bf16.mxu0 0
        %1537 = vmatpush1.bf16.msra.mxu0 0
        %1538 = vmatprep.mubr.bf16.mxu0 0
        %1539 = vmatmul.mubr.bf16.gmra.mrb[0].mxu0 %v1504
        %v1540 = vpop.f32.mrb[0].mxu0
        %v1541 = vadd.f32 0.0, %v1540
        %v1542 = vpop.f32.mrb[0].mxu0
        %v1543 = vpop.f32.mrb[0].mxu0
        %v1544 = vpop.f32.mrb[0].mxu0
        %1545 = vdwg.mxu0
        %v1546 = vadd.f32 %v1482, %v1541
        %v1547 = vpack.c.bf16 %v1369, %v1369
        %v1548 = vld [vmem:[#allocation16] sm:$0xf]
        %v1549 = vld [vmem:[#allocation16 + $0x4] sm:$0xf]
        %v1550 = vld [vmem:[#allocation16 + $0x8] sm:$0xf]
        %v1551 = vld [vmem:[#allocation16 + $0xc] sm:$0xf]
        %v1552 = vld [vmem:[#allocation17] sm:$0x1]
        %v1554 = vlaneseq
        %v1555 = vshrl.u32 %v1554, 7
        %v1556 = vsub.s32 0, %v1555
        %v1557 = vrot.slane %v1552, %v1556
        %1560 = vrot.lane.b32.xlu0 %v1547, 96
        %v1561 = vpop.permute.xlu0 %1560
        %v1566 = vunpack.c.l.b16 %v1548
        %v1567 = vunpack.c.l.b16 %v1549
        %v1568 = vunpack.c.l.b16 %v1550
        %v1569 = vunpack.c.l.b16 %v1551
        %v1570 = vpack.c.b16 %v1567, %v1566
        %v1571 = vpack.c.b16 %v1569, %v1568
        %v1575 = vsel %vm854, %v1561, 0
        %1577 = vmatprep.subr.bf16.mxu0 0
        %1578 = vmatpush1.bf16.msra.mxu0 %v1570
        %1579 = vmatprep.subr.bf16.mxu0 0
        %1580 = vmatpush1.bf16.msra.mxu0 %v1571
        %1581 = vmatprep.subr.bf16.mxu0 0
        %1582 = vmatpush1.bf16.msra.mxu0 0
        %1583 = vmatprep.subr.bf16.mxu0 0
        %1584 = vmatpush1.bf16.msra.mxu0 0
        %1585 = vmatprep.subr.bf16.mxu0 0
        %1586 = vmatpush1.bf16.msra.mxu0 0
        %1587 = vmatprep.subr.bf16.mxu0 0
        %1588 = vmatpush1.bf16.msra.mxu0 0
        %1589 = vmatprep.subr.bf16.mxu0 0
        %1590 = vmatpush1.bf16.msra.mxu0 0
        %1591 = vmatprep.subr.bf16.mxu0 0
        %1592 = vmatpush1.bf16.msra.mxu0 0
        %1593 = vmatprep.subr.bf16.mxu0 0
        %1594 = vmatpush1.bf16.msra.mxu0 0
        %1595 = vmatprep.subr.bf16.mxu0 0
        %1596 = vmatpush1.bf16.msra.mxu0 0
        %1597 = vmatprep.subr.bf16.mxu0 0
        %1598 = vmatpush1.bf16.msra.mxu0 0
        %1599 = vmatprep.subr.bf16.mxu0 0
        %1600 = vmatpush1.bf16.msra.mxu0 0
        %1601 = vmatprep.subr.bf16.mxu0 0
        %1602 = vmatpush1.bf16.msra.mxu0 0
        %1603 = vmatprep.subr.bf16.mxu0 0
        %1604 = vmatpush1.bf16.msra.mxu0 0
        %1605 = vmatprep.subr.bf16.mxu0 0
        %1606 = vmatpush1.bf16.msra.mxu0 0
        %1607 = vmatprep.subr.bf16.mxu0 0
        %1608 = vmatpush1.bf16.msra.mxu0 0
        %1609 = vmatprep.mubr.bf16.mxu0 0
        %1610 = vmatmul.mubr.bf16.gmra.mrb[0].mxu0 %v1575
        %v1611 = vpop.f32.mrb[0].mxu0
        %v1612 = vadd.f32 %v1557, %v1611
        %v1613 = vpop.f32.mrb[0].mxu0
        %v1614 = vpop.f32.mrb[0].mxu0
        %v1615 = vpop.f32.mrb[0].mxu0
        %1616 = vdwg.mxu0
        %v1617 = vadd.f32 %v1546, %v1612
        %v1618 = vxor.u32 %v1617, 2147483648
        %v1619 = vmul.f32 %v1618, 1.442695
        %v1620 = vpow.pop %v1619
        %v1621 = vadd.f32 %v1620, 1.0
        %v1622 = vrcp.pop %v1621
        %v1623 = vmul.f32 1.0, %v1622
        %1625 = vrot.lane.b32.xlu0 %v1612, 64
        %v1626 = vpop.permute.xlu0 %1625
        %v1628 = vmul.f32 %v1623, %v1626
        %1630 = vrot.lane.b32.xlu0 %v1628, 64
        %v1631 = vpop.permute.xlu0 %1630
        %v1633 = vadd.f32 %v1546, %v1631
        %v1634 = vtanh.pop %v1633
        %v1635 = vsub.f32 1.0, %v1623
        %1637 = vrot.lane.b32.xlu0 %v1634, 96
        %v1638 = vpop.permute.xlu0 %1637
        %v1640 = vmul.f32 %v1635, %v1638
        %v1641 = vmul.f32 %v1623, %v1369
        %v1642 = vadd.f32 %v1640, %v1641
        %1644 = vrot.lane.b32.xlu0 %v1642, 96
        %v1645 = vpop.permute.xlu0 %1644
        %s1647 = scalar_lea.vmem [#allocation4], 4
        %1648 = vst.msk [vmem:[%s1647] sm:$0x3] %vm1101, %v1645
        %v1649 = vpack.c.bf16 %v1473, %v1473
        %v1650 = vld [vmem:[#allocation11] sm:$0xf]
        %v1651 = vld [vmem:[#allocation11 + $0x4] sm:$0xf]
        %v1652 = vld [vmem:[#allocation11 + $0x8] sm:$0xf]
        %v1653 = vld [vmem:[#allocation11 + $0xc] sm:$0xf]
        %v1654 = vld [vmem:[#allocation13] sm:$0x1]
        %v1656 = vlaneseq
        %v1657 = vshrl.u32 %v1656, 7
        %v1658 = vsub.s32 0, %v1657
        %v1659 = vrot.slane %v1654, %v1658
        %1662 = vrot.lane.b32.xlu0 %v1649, 96
        %v1663 = vpop.permute.xlu0 %1662
        %v1668 = vunpack.c.l.b16 %v1650
        %v1669 = vunpack.c.l.b16 %v1651
        %v1670 = vunpack.c.l.b16 %v1652
        %v1671 = vunpack.c.l.b16 %v1653
        %v1672 = vpack.c.b16 %v1669, %v1668
        %v1673 = vpack.c.b16 %v1671, %v1670
        %v1677 = vsel %vm854, %v1663, 0
        %1679 = vmatprep.subr.bf16.mxu0 0
        %1680 = vmatpush1.bf16.msra.mxu0 %v1672
        %1681 = vmatprep.subr.bf16.mxu0 0
        %1682 = vmatpush1.bf16.msra.mxu0 %v1673
        %1683 = vmatprep.subr.bf16.mxu0 0
        %1684 = vmatpush1.bf16.msra.mxu0 0
        %1685 = vmatprep.subr.bf16.mxu0 0
        %1686 = vmatpush1.bf16.msra.mxu0 0
        %1687 = vmatprep.subr.bf16.mxu0 0
        %1688 = vmatpush1.bf16.msra.mxu0 0
        %1689 = vmatprep.subr.bf16.mxu0 0
        %1690 = vmatpush1.bf16.msra.mxu0 0
        %1691 = vmatprep.subr.bf16.mxu0 0
        %1692 = vmatpush1.bf16.msra.mxu0 0
        %1693 = vmatprep.subr.bf16.mxu0 0
        %1694 = vmatpush1.bf16.msra.mxu0 0
        %1695 = vmatprep.subr.bf16.mxu0 0
        %1696 = vmatpush1.bf16.msra.mxu0 0
        %1697 = vmatprep.subr.bf16.mxu0 0
        %1698 = vmatpush1.bf16.msra.mxu0 0
        %1699 = vmatprep.subr.bf16.mxu0 0
        %1700 = vmatpush1.bf16.msra.mxu0 0
        %1701 = vmatprep.subr.bf16.mxu0 0
        %1702 = vmatpush1.bf16.msra.mxu0 0
        %1703 = vmatprep.subr.bf16.mxu0 0
        %1704 = vmatpush1.bf16.msra.mxu0 0
        %1705 = vmatprep.subr.bf16.mxu0 0
        %1706 = vmatpush1.bf16.msra.mxu0 0
        %1707 = vmatprep.subr.bf16.mxu0 0
        %1708 = vmatpush1.bf16.msra.mxu0 0
        %1709 = vmatprep.subr.bf16.mxu0 0
        %1710 = vmatpush1.bf16.msra.mxu0 0
        %1711 = vmatprep.mubr.bf16.mxu0 0
        %1712 = vmatmul.mubr.bf16.gmra.mrb[0].mxu0 %v1677
        %v1713 = vpop.f32.mrb[0].mxu0
        %v1714 = vadd.f32 %v1659, %v1713
        %v1715 = vpop.f32.mrb[0].mxu0
        %v1716 = vpop.f32.mrb[0].mxu0
        %v1717 = vpop.f32.mrb[0].mxu0
        %1718 = vdwg.mxu0
        %s1719 = scalar_lea.vmem %s691, 6 [#allocation5]
        %v1720 = vld [vmem:[%s1719] sm:$0x3]
        %v1721 = vadd.f32 %v1720, %v1714
        %v1722 = vxor.u32 %v1721, 2147483648
        %v1723 = vmul.f32 %v1722, 1.442695
        %v1724 = vpow.pop %v1723
        %v1725 = vadd.f32 %v1724, 1.0
        %v1726 = vrcp.pop %v1725
        %v1727 = vmul.f32 1.0, %v1726
        %1729 = vrot.lane.b32.xlu0 %v1714, 64
        %v1730 = vpop.permute.xlu0 %1729
        %v1732 = vmul.f32 %v1727, %v1730
        %1734 = vrot.lane.b32.xlu0 %v1732, 64
        %v1735 = vpop.permute.xlu0 %1734
        %v1737 = vadd.f32 %v1720, %v1735
        %v1738 = vtanh.pop %v1737
        %v1739 = vsub.f32 1.0, %v1727
        %1741 = vrot.lane.b32.xlu0 %v1738, 96
        %v1742 = vpop.permute.xlu0 %1741
        %v1744 = vmul.f32 %v1739, %v1742
        %v1745 = vmul.f32 %v1727, %v1473
        %v1746 = vadd.f32 %v1744, %v1745
        %s1747 = scalar_lea.vmem %s709, 6 [#allocation10]
        %v1748 = vld [vmem:[%s1747] sm:$0x3]
        %1750 = vrot.lane.b32.xlu0 %v1748, 32
        %v1751 = vpop.permute.xlu0 %1750
        %v1753 = vadd.f32 %v1746, %v1751
        %s1754 = scalar_lea.vmem %s700, 6 [#allocation8]
        %v1755 = vld [vmem:[%s1754] sm:$0x3]
        %v1756 = vpack.c.bf16 %v1753, %v1753
        %v1757 = vld [vmem:[#allocation14] sm:$0xf]
        %v1758 = vld [vmem:[#allocation14 + $0x4] sm:$0xf]
        %v1759 = vld [vmem:[#allocation14 + $0x8] sm:$0xf]
        %v1760 = vld [vmem:[#allocation14 + $0xc] sm:$0xf]
        %1762 = vrot.lane.b32.xlu0 %v1756, 96
        %v1763 = vpop.permute.xlu0 %1762
        %v1768 = vunpack.c.l.b16 %v1757
        %v1769 = vunpack.c.l.b16 %v1758
        %v1770 = vunpack.c.l.b16 %v1759
        %v1771 = vunpack.c.l.b16 %v1760
        %v1772 = vpack.c.b16 %v1769, %v1768
        %v1773 = vpack.c.b16 %v1771, %v1770
        %v1777 = vsel %vm854, %v1763, 0
        %1779 = vmatprep.subr.bf16.mxu0 0
        %1780 = vmatpush1.bf16.msra.mxu0 %v1772
        %1781 = vmatprep.subr.bf16.mxu0 0
        %1782 = vmatpush1.bf16.msra.mxu0 %v1773
        %1783 = vmatprep.subr.bf16.mxu0 0
        %1784 = vmatpush1.bf16.msra.mxu0 0
        %1785 = vmatprep.subr.bf16.mxu0 0
        %1786 = vmatpush1.bf16.msra.mxu0 0
        %1787 = vmatprep.subr.bf16.mxu0 0
        %1788 = vmatpush1.bf16.msra.mxu0 0
        %1789 = vmatprep.subr.bf16.mxu0 0
        %1790 = vmatpush1.bf16.msra.mxu0 0
        %1791 = vmatprep.subr.bf16.mxu0 0
        %1792 = vmatpush1.bf16.msra.mxu0 0
        %1793 = vmatprep.subr.bf16.mxu0 0
        %1794 = vmatpush1.bf16.msra.mxu0 0
        %1795 = vmatprep.subr.bf16.mxu0 0
        %1796 = vmatpush1.bf16.msra.mxu0 0
        %1797 = vmatprep.subr.bf16.mxu0 0
        %1798 = vmatpush1.bf16.msra.mxu0 0
        %1799 = vmatprep.subr.bf16.mxu0 0
        %1800 = vmatpush1.bf16.msra.mxu0 0
        %1801 = vmatprep.subr.bf16.mxu0 0
        %1802 = vmatpush1.bf16.msra.mxu0 0
        %1803 = vmatprep.subr.bf16.mxu0 0
        %1804 = vmatpush1.bf16.msra.mxu0 0
        %1805 = vmatprep.subr.bf16.mxu0 0
        %1806 = vmatpush1.bf16.msra.mxu0 0
        %1807 = vmatprep.subr.bf16.mxu0 0
        %1808 = vmatpush1.bf16.msra.mxu0 0
        %1809 = vmatprep.subr.bf16.mxu0 0
        %1810 = vmatpush1.bf16.msra.mxu0 0
        %1811 = vmatprep.mubr.bf16.mxu0 0
        %1812 = vmatmul.mubr.bf16.gmra.mrb[0].mxu0 %v1777
        %v1813 = vpop.f32.mrb[0].mxu0
        %v1814 = vadd.f32 0.0, %v1813
        %v1815 = vpop.f32.mrb[0].mxu0
        %v1816 = vpop.f32.mrb[0].mxu0
        %v1817 = vpop.f32.mrb[0].mxu0
        %1818 = vdwg.mxu0
        %v1819 = vadd.f32 %v1755, %v1814
        %v1820 = vpack.c.bf16 %v1642, %v1642
        %v1821 = vld [vmem:[#allocation16] sm:$0xf]
        %v1822 = vld [vmem:[#allocation16 + $0x4] sm:$0xf]
        %v1823 = vld [vmem:[#allocation16 + $0x8] sm:$0xf]
        %v1824 = vld [vmem:[#allocation16 + $0xc] sm:$0xf]
        %v1825 = vld [vmem:[#allocation17] sm:$0x1]
        %v1827 = vlaneseq
        %v1828 = vshrl.u32 %v1827, 7
        %v1829 = vsub.s32 0, %v1828
        %v1830 = vrot.slane %v1825, %v1829
        %1833 = vrot.lane.b32.xlu0 %v1820, 96
        %v1834 = vpop.permute.xlu0 %1833
        %v1839 = vunpack.c.l.b16 %v1821
        %v1840 = vunpack.c.l.b16 %v1822
        %v1841 = vunpack.c.l.b16 %v1823
        %v1842 = vunpack.c.l.b16 %v1824
        %v1843 = vpack.c.b16 %v1840, %v1839
        %v1844 = vpack.c.b16 %v1842, %v1841
        %v1848 = vsel %vm854, %v1834, 0
        %1850 = vmatprep.subr.bf16.mxu0 0
        %1851 = vmatpush1.bf16.msra.mxu0 %v1843
        %1852 = vmatprep.subr.bf16.mxu0 0
        %1853 = vmatpush1.bf16.msra.mxu0 %v1844
        %1854 = vmatprep.subr.bf16.mxu0 0
        %1855 = vmatpush1.bf16.msra.mxu0 0
        %1856 = vmatprep.subr.bf16.mxu0 0
        %1857 = vmatpush1.bf16.msra.mxu0 0
        %1858 = vmatprep.subr.bf16.mxu0 0
        %1859 = vmatpush1.bf16.msra.mxu0 0
        %1860 = vmatprep.subr.bf16.mxu0 0
        %1861 = vmatpush1.bf16.msra.mxu0 0
        %1862 = vmatprep.subr.bf16.mxu0 0
        %1863 = vmatpush1.bf16.msra.mxu0 0
        %1864 = vmatprep.subr.bf16.mxu0 0
        %1865 = vmatpush1.bf16.msra.mxu0 0
        %1866 = vmatprep.subr.bf16.mxu0 0
        %1867 = vmatpush1.bf16.msra.mxu0 0
        %1868 = vmatprep.subr.bf16.mxu0 0
        %1869 = vmatpush1.bf16.msra.mxu0 0
        %1870 = vmatprep.subr.bf16.mxu0 0
        %1871 = vmatpush1.bf16.msra.mxu0 0
        %1872 = vmatprep.subr.bf16.mxu0 0
        %1873 = vmatpush1.bf16.msra.mxu0 0
        %1874 = vmatprep.subr.bf16.mxu0 0
        %1875 = vmatpush1.bf16.msra.mxu0 0
        %1876 = vmatprep.subr.bf16.mxu0 0
        %1877 = vmatpush1.bf16.msra.mxu0 0
        %1878 = vmatprep.subr.bf16.mxu0 0
        %1879 = vmatpush1.bf16.msra.mxu0 0
        %1880 = vmatprep.subr.bf16.mxu0 0
        %1881 = vmatpush1.bf16.msra.mxu0 0
        %1882 = vmatprep.mubr.bf16.mxu0 0
        %1883 = vmatmul.mubr.bf16.gmra.mrb[0].mxu0 %v1848
        %v1884 = vpop.f32.mrb[0].mxu0
        %v1885 = vadd.f32 %v1830, %v1884
        %v1886 = vpop.f32.mrb[0].mxu0
        %v1887 = vpop.f32.mrb[0].mxu0
        %v1888 = vpop.f32.mrb[0].mxu0
        %1889 = vdwg.mxu0
        %v1890 = vadd.f32 %v1819, %v1885
        %v1891 = vxor.u32 %v1890, 2147483648
        %v1892 = vmul.f32 %v1891, 1.442695
        %v1893 = vpow.pop %v1892
        %v1894 = vadd.f32 %v1893, 1.0
        %v1895 = vrcp.pop %v1894
        %v1896 = vmul.f32 1.0, %v1895
        %1898 = vrot.lane.b32.xlu0 %v1885, 64
        %v1899 = vpop.permute.xlu0 %1898
        %v1901 = vmul.f32 %v1896, %v1899
        %1903 = vrot.lane.b32.xlu0 %v1901, 64
        %v1904 = vpop.permute.xlu0 %1903
        %v1906 = vadd.f32 %v1819, %v1904
        %v1907 = vtanh.pop %v1906
        %v1908 = vsub.f32 1.0, %v1896
        %1910 = vrot.lane.b32.xlu0 %v1907, 96
        %v1911 = vpop.permute.xlu0 %1910
        %v1913 = vmul.f32 %v1908, %v1911
        %v1914 = vmul.f32 %v1896, %v1642
        %v1915 = vadd.f32 %v1913, %v1914
        %1917 = vrot.lane.b32.xlu0 %v1915, 96
        %v1918 = vpop.permute.xlu0 %1917
        %s1920 = scalar_lea.vmem [#allocation4], 6
        %1921 = vst.msk [vmem:[%s1920] sm:$0x3] %vm1101, %v1918
        %v1922 = vpack.c.bf16 %v1746, %v1746
        %v1923 = vld [vmem:[#allocation11] sm:$0xf]
        %v1924 = vld [vmem:[#allocation11 + $0x4] sm:$0xf]
        %v1925 = vld [vmem:[#allocation11 + $0x8] sm:$0xf]
        %v1926 = vld [vmem:[#allocation11 + $0xc] sm:$0xf]
        %v1927 = vld [vmem:[#allocation13] sm:$0x1]
        %v1929 = vlaneseq
        %v1930 = vshrl.u32 %v1929, 7
        %v1931 = vsub.s32 0, %v1930
        %v1932 = vrot.slane %v1927, %v1931
        %1935 = vrot.lane.b32.xlu0 %v1922, 96
        %v1936 = vpop.permute.xlu0 %1935
        %v1941 = vunpack.c.l.b16 %v1923
        %v1942 = vunpack.c.l.b16 %v1924
        %v1943 = vunpack.c.l.b16 %v1925
        %v1944 = vunpack.c.l.b16 %v1926
        %v1945 = vpack.c.b16 %v1942, %v1941
        %v1946 = vpack.c.b16 %v1944, %v1943
        %v1950 = vsel %vm854, %v1936, 0
        %1952 = vmatprep.subr.bf16.mxu0 0
        %1953 = vmatpush1.bf16.msra.mxu0 %v1945
        %1954 = vmatprep.subr.bf16.mxu0 0
        %1955 = vmatpush1.bf16.msra.mxu0 %v1946
        %1956 = vmatprep.subr.bf16.mxu0 0
        %1957 = vmatpush1.bf16.msra.mxu0 0
        %1958 = vmatprep.subr.bf16.mxu0 0
        %1959 = vmatpush1.bf16.msra.mxu0 0
        %1960 = vmatprep.subr.bf16.mxu0 0
        %1961 = vmatpush1.bf16.msra.mxu0 0
        %1962 = vmatprep.subr.bf16.mxu0 0
        %1963 = vmatpush1.bf16.msra.mxu0 0
        %1964 = vmatprep.subr.bf16.mxu0 0
        %1965 = vmatpush1.bf16.msra.mxu0 0
        %1966 = vmatprep.subr.bf16.mxu0 0
        %1967 = vmatpush1.bf16.msra.mxu0 0
        %1968 = vmatprep.subr.bf16.mxu0 0
        %1969 = vmatpush1.bf16.msra.mxu0 0
        %1970 = vmatprep.subr.bf16.mxu0 0
        %1971 = vmatpush1.bf16.msra.mxu0 0
        %1972 = vmatprep.subr.bf16.mxu0 0
        %1973 = vmatpush1.bf16.msra.mxu0 0
        %1974 = vmatprep.subr.bf16.mxu0 0
        %1975 = vmatpush1.bf16.msra.mxu0 0
        %1976 = vmatprep.subr.bf16.mxu0 0
        %1977 = vmatpush1.bf16.msra.mxu0 0
        %1978 = vmatprep.subr.bf16.mxu0 0
        %1979 = vmatpush1.bf16.msra.mxu0 0
        %1980 = vmatprep.subr.bf16.mxu0 0
        %1981 = vmatpush1.bf16.msra.mxu0 0
        %1982 = vmatprep.subr.bf16.mxu0 0
        %1983 = vmatpush1.bf16.msra.mxu0 0
        %1984 = vmatprep.mubr.bf16.mxu0 0
        %1985 = vmatmul.mubr.bf16.gmra.mrb[0].mxu0 %v1950
        %v1986 = vpop.f32.mrb[0].mxu0
        %v1987 = vadd.f32 %v1932, %v1986
        %v1988 = vpop.f32.mrb[0].mxu0
        %v1989 = vpop.f32.mrb[0].mxu0
        %v1990 = vpop.f32.mrb[0].mxu0
        %1991 = vdwg.mxu0
        %s1992 = scalar_lea.vmem %s691, 8 [#allocation5]
        %v1993 = vld [vmem:[%s1992] sm:$0x3]
        %v1994 = vadd.f32 %v1993, %v1987
        %v1995 = vxor.u32 %v1994, 2147483648
        %v1996 = vmul.f32 %v1995, 1.442695
        %v1997 = vpow.pop %v1996
        %v1998 = vadd.f32 %v1997, 1.0
        %v1999 = vrcp.pop %v1998
        %v2000 = vmul.f32 1.0, %v1999
        %2002 = vrot.lane.b32.xlu0 %v1987, 64
        %v2003 = vpop.permute.xlu0 %2002
        %v2005 = vmul.f32 %v2000, %v2003
        %2007 = vrot.lane.b32.xlu0 %v2005, 64
        %v2008 = vpop.permute.xlu0 %2007
        %v2010 = vadd.f32 %v1993, %v2008
        %v2011 = vtanh.pop %v2010
        %v2012 = vsub.f32 1.0, %v2000
        %2014 = vrot.lane.b32.xlu0 %v2011, 96
        %v2015 = vpop.permute.xlu0 %2014
        %v2017 = vmul.f32 %v2012, %v2015
        %v2018 = vmul.f32 %v2000, %v1746
        %v2019 = vadd.f32 %v2017, %v2018
        %s2020 = scalar_lea.vmem %s709, 8 [#allocation10]
        %v2021 = vld [vmem:[%s2020] sm:$0x3]
        %2023 = vrot.lane.b32.xlu0 %v2021, 32
        %v2024 = vpop.permute.xlu0 %2023
        %v2026 = vadd.f32 %v2019, %v2024
        %s2027 = scalar_lea.vmem %s700, 8 [#allocation8]
        %v2028 = vld [vmem:[%s2027] sm:$0x3]
        %v2029 = vpack.c.bf16 %v2026, %v2026
        %v2030 = vld [vmem:[#allocation14] sm:$0xf]
        %v2031 = vld [vmem:[#allocation14 + $0x4] sm:$0xf]
        %v2032 = vld [vmem:[#allocation14 + $0x8] sm:$0xf]
        %v2033 = vld [vmem:[#allocation14 + $0xc] sm:$0xf]
        %2035 = vrot.lane.b32.xlu0 %v2029, 96
        %v2036 = vpop.permute.xlu0 %2035
        %v2041 = vunpack.c.l.b16 %v2030
        %v2042 = vunpack.c.l.b16 %v2031
        %v2043 = vunpack.c.l.b16 %v2032
        %v2044 = vunpack.c.l.b16 %v2033
        %v2045 = vpack.c.b16 %v2042, %v2041
        %v2046 = vpack.c.b16 %v2044, %v2043
        %v2050 = vsel %vm854, %v2036, 0
        %2052 = vmatprep.subr.bf16.mxu0 0
        %2053 = vmatpush1.bf16.msra.mxu0 %v2045
        %2054 = vmatprep.subr.bf16.mxu0 0
        %2055 = vmatpush1.bf16.msra.mxu0 %v2046
        %2056 = vmatprep.subr.bf16.mxu0 0
        %2057 = vmatpush1.bf16.msra.mxu0 0
        %2058 = vmatprep.subr.bf16.mxu0 0
        %2059 = vmatpush1.bf16.msra.mxu0 0
        %2060 = vmatprep.subr.bf16.mxu0 0
        %2061 = vmatpush1.bf16.msra.mxu0 0
        %2062 = vmatprep.subr.bf16.mxu0 0
        %2063 = vmatpush1.bf16.msra.mxu0 0
        %2064 = vmatprep.subr.bf16.mxu0 0
        %2065 = vmatpush1.bf16.msra.mxu0 0
        %2066 = vmatprep.subr.bf16.mxu0 0
        %2067 = vmatpush1.bf16.msra.mxu0 0
        %2068 = vmatprep.subr.bf16.mxu0 0
        %2069 = vmatpush1.bf16.msra.mxu0 0
        %2070 = vmatprep.subr.bf16.mxu0 0
        %2071 = vmatpush1.bf16.msra.mxu0 0
        %2072 = vmatprep.subr.bf16.mxu0 0
        %2073 = vmatpush1.bf16.msra.mxu0 0
        %2074 = vmatprep.subr.bf16.mxu0 0
        %2075 = vmatpush1.bf16.msra.mxu0 0
        %2076 = vmatprep.subr.bf16.mxu0 0
        %2077 = vmatpush1.bf16.msra.mxu0 0
        %2078 = vmatprep.subr.bf16.mxu0 0
        %2079 = vmatpush1.bf16.msra.mxu0 0
        %2080 = vmatprep.subr.bf16.mxu0 0
        %2081 = vmatpush1.bf16.msra.mxu0 0
        %2082 = vmatprep.subr.bf16.mxu0 0
        %2083 = vmatpush1.bf16.msra.mxu0 0
        %2084 = vmatprep.mubr.bf16.mxu0 0
        %2085 = vmatmul.mubr.bf16.gmra.mrb[0].mxu0 %v2050
        %v2086 = vpop.f32.mrb[0].mxu0
        %v2087 = vadd.f32 0.0, %v2086
        %v2088 = vpop.f32.mrb[0].mxu0
        %v2089 = vpop.f32.mrb[0].mxu0
        %v2090 = vpop.f32.mrb[0].mxu0
        %2091 = vdwg.mxu0
        %v2092 = vadd.f32 %v2028, %v2087
        %v2093 = vpack.c.bf16 %v1915, %v1915
        %v2094 = vld [vmem:[#allocation16] sm:$0xf]
        %v2095 = vld [vmem:[#allocation16 + $0x4] sm:$0xf]
        %v2096 = vld [vmem:[#allocation16 + $0x8] sm:$0xf]
        %v2097 = vld [vmem:[#allocation16 + $0xc] sm:$0xf]
        %v2098 = vld [vmem:[#allocation17] sm:$0x1]
        %v2100 = vlaneseq
        %v2101 = vshrl.u32 %v2100, 7
        %v2102 = vsub.s32 0, %v2101
        %v2103 = vrot.slane %v2098, %v2102
        %2106 = vrot.lane.b32.xlu0 %v2093, 96
        %v2107 = vpop.permute.xlu0 %2106
        %v2112 = vunpack.c.l.b16 %v2094
        %v2113 = vunpack.c.l.b16 %v2095
        %v2114 = vunpack.c.l.b16 %v2096
        %v2115 = vunpack.c.l.b16 %v2097
        %v2116 = vpack.c.b16 %v2113, %v2112
        %v2117 = vpack.c.b16 %v2115, %v2114
        %v2121 = vsel %vm854, %v2107, 0
        %2123 = vmatprep.subr.bf16.mxu0 0
        %2124 = vmatpush1.bf16.msra.mxu0 %v2116
        %2125 = vmatprep.subr.bf16.mxu0 0
        %2126 = vmatpush1.bf16.msra.mxu0 %v2117
        %2127 = vmatprep.subr.bf16.mxu0 0
        %2128 = vmatpush1.bf16.msra.mxu0 0
        %2129 = vmatprep.subr.bf16.mxu0 0
        %2130 = vmatpush1.bf16.msra.mxu0 0
        %2131 = vmatprep.subr.bf16.mxu0 0
        %2132 = vmatpush1.bf16.msra.mxu0 0
        %2133 = vmatprep.subr.bf16.mxu0 0
        %2134 = vmatpush1.bf16.msra.mxu0 0
        %2135 = vmatprep.subr.bf16.mxu0 0
        %2136 = vmatpush1.bf16.msra.mxu0 0
        %2137 = vmatprep.subr.bf16.mxu0 0
        %2138 = vmatpush1.bf16.msra.mxu0 0
        %2139 = vmatprep.subr.bf16.mxu0 0
        %2140 = vmatpush1.bf16.msra.mxu0 0
        %2141 = vmatprep.subr.bf16.mxu0 0
        %2142 = vmatpush1.bf16.msra.mxu0 0
        %2143 = vmatprep.subr.bf16.mxu0 0
        %2144 = vmatpush1.bf16.msra.mxu0 0
        %2145 = vmatprep.subr.bf16.mxu0 0
        %2146 = vmatpush1.bf16.msra.mxu0 0
        %2147 = vmatprep.subr.bf16.mxu0 0
        %2148 = vmatpush1.bf16.msra.mxu0 0
        %2149 = vmatprep.subr.bf16.mxu0 0
        %2150 = vmatpush1.bf16.msra.mxu0 0
        %2151 = vmatprep.subr.bf16.mxu0 0
        %2152 = vmatpush1.bf16.msra.mxu0 0
        %2153 = vmatprep.subr.bf16.mxu0 0
        %2154 = vmatpush1.bf16.msra.mxu0 0
        %2155 = vmatprep.mubr.bf16.mxu0 0
        %2156 = vmatmul.mubr.bf16.gmra.mrb[0].mxu0 %v2121
        %v2157 = vpop.f32.mrb[0].mxu0
        %v2158 = vadd.f32 %v2103, %v2157
        %v2159 = vpop.f32.mrb[0].mxu0
        %v2160 = vpop.f32.mrb[0].mxu0
        %v2161 = vpop.f32.mrb[0].mxu0
        %2162 = vdwg.mxu0
        %v2163 = vadd.f32 %v2092, %v2158
        %v2164 = vxor.u32 %v2163, 2147483648
        %v2165 = vmul.f32 %v2164, 1.442695
        %v2166 = vpow.pop %v2165
        %v2167 = vadd.f32 %v2166, 1.0
        %v2168 = vrcp.pop %v2167
        %v2169 = vmul.f32 1.0, %v2168
        %2171 = vrot.lane.b32.xlu0 %v2158, 64
        %v2172 = vpop.permute.xlu0 %2171
        %v2174 = vmul.f32 %v2169, %v2172
        %2176 = vrot.lane.b32.xlu0 %v2174, 64
        %v2177 = vpop.permute.xlu0 %2176
        %v2179 = vadd.f32 %v2092, %v2177
        %v2180 = vtanh.pop %v2179
        %v2181 = vsub.f32 1.0, %v2169
        %2183 = vrot.lane.b32.xlu0 %v2180, 96
        %v2184 = vpop.permute.xlu0 %2183
        %v2186 = vmul.f32 %v2181, %v2184
        %v2187 = vmul.f32 %v2169, %v1915
        %v2188 = vadd.f32 %v2186, %v2187
        %2190 = vrot.lane.b32.xlu0 %v2188, 96
        %v2191 = vpop.permute.xlu0 %2190
        %s2193 = scalar_lea.vmem [#allocation4], 8
        %2194 = vst.msk [vmem:[%s2193] sm:$0x3] %vm1101, %v2191
        %v2195 = vpack.c.bf16 %v2019, %v2019
        %v2196 = vld [vmem:[#allocation11] sm:$0xf]
        %v2197 = vld [vmem:[#allocation11 + $0x4] sm:$0xf]
        %v2198 = vld [vmem:[#allocation11 + $0x8] sm:$0xf]
        %v2199 = vld [vmem:[#allocation11 + $0xc] sm:$0xf]
        %v2200 = vld [vmem:[#allocation13] sm:$0x1]
        %v2202 = vlaneseq
        %v2203 = vshrl.u32 %v2202, 7
        %v2204 = vsub.s32 0, %v2203
        %v2205 = vrot.slane %v2200, %v2204
        %2208 = vrot.lane.b32.xlu0 %v2195, 96
        %v2209 = vpop.permute.xlu0 %2208
        %v2214 = vunpack.c.l.b16 %v2196
        %v2215 = vunpack.c.l.b16 %v2197
        %v2216 = vunpack.c.l.b16 %v2198
        %v2217 = vunpack.c.l.b16 %v2199
        %v2218 = vpack.c.b16 %v2215, %v2214
        %v2219 = vpack.c.b16 %v2217, %v2216
        %v2223 = vsel %vm854, %v2209, 0
        %2225 = vmatprep.subr.bf16.mxu0 0
        %2226 = vmatpush1.bf16.msra.mxu0 %v2218
        %2227 = vmatprep.subr.bf16.mxu0 0
        %2228 = vmatpush1.bf16.msra.mxu0 %v2219
        %2229 = vmatprep.subr.bf16.mxu0 0
        %2230 = vmatpush1.bf16.msra.mxu0 0
        %2231 = vmatprep.subr.bf16.mxu0 0
        %2232 = vmatpush1.bf16.msra.mxu0 0
        %2233 = vmatprep.subr.bf16.mxu0 0
        %2234 = vmatpush1.bf16.msra.mxu0 0
        %2235 = vmatprep.subr.bf16.mxu0 0
        %2236 = vmatpush1.bf16.msra.mxu0 0
        %2237 = vmatprep.subr.bf16.mxu0 0
        %2238 = vmatpush1.bf16.msra.mxu0 0
        %2239 = vmatprep.subr.bf16.mxu0 0
        %2240 = vmatpush1.bf16.msra.mxu0 0
        %2241 = vmatprep.subr.bf16.mxu0 0
        %2242 = vmatpush1.bf16.msra.mxu0 0
        %2243 = vmatprep.subr.bf16.mxu0 0
        %2244 = vmatpush1.bf16.msra.mxu0 0
        %2245 = vmatprep.subr.bf16.mxu0 0
        %2246 = vmatpush1.bf16.msra.mxu0 0
        %2247 = vmatprep.subr.bf16.mxu0 0
        %2248 = vmatpush1.bf16.msra.mxu0 0
        %2249 = vmatprep.subr.bf16.mxu0 0
        %2250 = vmatpush1.bf16.msra.mxu0 0
        %2251 = vmatprep.subr.bf16.mxu0 0
        %2252 = vmatpush1.bf16.msra.mxu0 0
        %2253 = vmatprep.subr.bf16.mxu0 0
        %2254 = vmatpush1.bf16.msra.mxu0 0
        %2255 = vmatprep.subr.bf16.mxu0 0
        %2256 = vmatpush1.bf16.msra.mxu0 0
        %2257 = vmatprep.mubr.bf16.mxu0 0
        %2258 = vmatmul.mubr.bf16.gmra.mrb[0].mxu0 %v2223
        %v2259 = vpop.f32.mrb[0].mxu0
        %v2260 = vadd.f32 %v2205, %v2259
        %v2261 = vpop.f32.mrb[0].mxu0
        %v2262 = vpop.f32.mrb[0].mxu0
        %v2263 = vpop.f32.mrb[0].mxu0
        %2264 = vdwg.mxu0
        %s2265 = scalar_lea.vmem %s691, 10 [#allocation5]
        %v2266 = vld [vmem:[%s2265] sm:$0x3]
        %v2267 = vadd.f32 %v2266, %v2260
        %v2268 = vxor.u32 %v2267, 2147483648
        %v2269 = vmul.f32 %v2268, 1.442695
        %v2270 = vpow.pop %v2269
        %v2271 = vadd.f32 %v2270, 1.0
        %v2272 = vrcp.pop %v2271
        %v2273 = vmul.f32 1.0, %v2272
        %2275 = vrot.lane.b32.xlu0 %v2260, 64
        %v2276 = vpop.permute.xlu0 %2275
        %v2278 = vmul.f32 %v2273, %v2276
        %2280 = vrot.lane.b32.xlu0 %v2278, 64
        %v2281 = vpop.permute.xlu0 %2280
        %v2283 = vadd.f32 %v2266, %v2281
        %v2284 = vtanh.pop %v2283
        %v2285 = vsub.f32 1.0, %v2273
        %2287 = vrot.lane.b32.xlu0 %v2284, 96
        %v2288 = vpop.permute.xlu0 %2287
        %v2290 = vmul.f32 %v2285, %v2288
        %v2291 = vmul.f32 %v2273, %v2019
        %v2292 = vadd.f32 %v2290, %v2291
        %s2293 = scalar_lea.vmem %s709, 10 [#allocation10]
        %v2294 = vld [vmem:[%s2293] sm:$0x3]
        %2296 = vrot.lane.b32.xlu0 %v2294, 32
        %v2297 = vpop.permute.xlu0 %2296
        %v2299 = vadd.f32 %v2292, %v2297
        %s2300 = scalar_lea.vmem %s700, 10 [#allocation8]
        %v2301 = vld [vmem:[%s2300] sm:$0x3]
        %v2302 = vpack.c.bf16 %v2299, %v2299
        %v2303 = vld [vmem:[#allocation14] sm:$0xf]
        %v2304 = vld [vmem:[#allocation14 + $0x4] sm:$0xf]
        %v2305 = vld [vmem:[#allocation14 + $0x8] sm:$0xf]
        %v2306 = vld [vmem:[#allocation14 + $0xc] sm:$0xf]
        %2308 = vrot.lane.b32.xlu0 %v2302, 96
        %v2309 = vpop.permute.xlu0 %2308
        %v2314 = vunpack.c.l.b16 %v2303
        %v2315 = vunpack.c.l.b16 %v2304
        %v2316 = vunpack.c.l.b16 %v2305
        %v2317 = vunpack.c.l.b16 %v2306
        %v2318 = vpack.c.b16 %v2315, %v2314
        %v2319 = vpack.c.b16 %v2317, %v2316
        %v2323 = vsel %vm854, %v2309, 0
        %2325 = vmatprep.subr.bf16.mxu0 0
        %2326 = vmatpush1.bf16.msra.mxu0 %v2318
        %2327 = vmatprep.subr.bf16.mxu0 0
        %2328 = vmatpush1.bf16.msra.mxu0 %v2319
        %2329 = vmatprep.subr.bf16.mxu0 0
        %2330 = vmatpush1.bf16.msra.mxu0 0
        %2331 = vmatprep.subr.bf16.mxu0 0
        %2332 = vmatpush1.bf16.msra.mxu0 0
        %2333 = vmatprep.subr.bf16.mxu0 0
        %2334 = vmatpush1.bf16.msra.mxu0 0
        %2335 = vmatprep.subr.bf16.mxu0 0
        %2336 = vmatpush1.bf16.msra.mxu0 0
        %2337 = vmatprep.subr.bf16.mxu0 0
        %2338 = vmatpush1.bf16.msra.mxu0 0
        %2339 = vmatprep.subr.bf16.mxu0 0
        %2340 = vmatpush1.bf16.msra.mxu0 0
        %2341 = vmatprep.subr.bf16.mxu0 0
        %2342 = vmatpush1.bf16.msra.mxu0 0
        %2343 = vmatprep.subr.bf16.mxu0 0
        %2344 = vmatpush1.bf16.msra.mxu0 0
        %2345 = vmatprep.subr.bf16.mxu0 0
        %2346 = vmatpush1.bf16.msra.mxu0 0
        %2347 = vmatprep.subr.bf16.mxu0 0
        %2348 = vmatpush1.bf16.msra.mxu0 0
        %2349 = vmatprep.subr.bf16.mxu0 0
        %2350 = vmatpush1.bf16.msra.mxu0 0
        %2351 = vmatprep.subr.bf16.mxu0 0
        %2352 = vmatpush1.bf16.msra.mxu0 0
        %2353 = vmatprep.subr.bf16.mxu0 0
        %2354 = vmatpush1.bf16.msra.mxu0 0
        %2355 = vmatprep.subr.bf16.mxu0 0
        %2356 = vmatpush1.bf16.msra.mxu0 0
        %2357 = vmatprep.mubr.bf16.mxu0 0
        %2358 = vmatmul.mubr.bf16.gmra.mrb[0].mxu0 %v2323
        %v2359 = vpop.f32.mrb[0].mxu0
        %v2360 = vadd.f32 0.0, %v2359
        %v2361 = vpop.f32.mrb[0].mxu0
        %v2362 = vpop.f32.mrb[0].mxu0
        %v2363 = vpop.f32.mrb[0].mxu0
        %2364 = vdwg.mxu0
        %v2365 = vadd.f32 %v2301, %v2360
        %v2366 = vpack.c.bf16 %v2188, %v2188
        %v2367 = vld [vmem:[#allocation16] sm:$0xf]
        %v2368 = vld [vmem:[#allocation16 + $0x4] sm:$0xf]
        %v2369 = vld [vmem:[#allocation16 + $0x8] sm:$0xf]
        %v2370 = vld [vmem:[#allocation16 + $0xc] sm:$0xf]
        %v2371 = vld [vmem:[#allocation17] sm:$0x1]
        %v2373 = vlaneseq
        %v2374 = vshrl.u32 %v2373, 7
        %v2375 = vsub.s32 0, %v2374
        %v2376 = vrot.slane %v2371, %v2375
        %2379 = vrot.lane.b32.xlu0 %v2366, 96
        %v2380 = vpop.permute.xlu0 %2379
        %v2385 = vunpack.c.l.b16 %v2367
        %v2386 = vunpack.c.l.b16 %v2368
        %v2387 = vunpack.c.l.b16 %v2369
        %v2388 = vunpack.c.l.b16 %v2370
        %v2389 = vpack.c.b16 %v2386, %v2385
        %v2390 = vpack.c.b16 %v2388, %v2387
        %v2394 = vsel %vm854, %v2380, 0
        %2396 = vmatprep.subr.bf16.mxu0 0
        %2397 = vmatpush1.bf16.msra.mxu0 %v2389
        %2398 = vmatprep.subr.bf16.mxu0 0
        %2399 = vmatpush1.bf16.msra.mxu0 %v2390
        %2400 = vmatprep.subr.bf16.mxu0 0
        %2401 = vmatpush1.bf16.msra.mxu0 0
        %2402 = vmatprep.subr.bf16.mxu0 0
        %2403 = vmatpush1.bf16.msra.mxu0 0
        %2404 = vmatprep.subr.bf16.mxu0 0
        %2405 = vmatpush1.bf16.msra.mxu0 0
        %2406 = vmatprep.subr.bf16.mxu0 0
        %2407 = vmatpush1.bf16.msra.mxu0 0
        %2408 = vmatprep.subr.bf16.mxu0 0
        %2409 = vmatpush1.bf16.msra.mxu0 0
        %2410 = vmatprep.subr.bf16.mxu0 0
        %2411 = vmatpush1.bf16.msra.mxu0 0
        %2412 = vmatprep.subr.bf16.mxu0 0
        %2413 = vmatpush1.bf16.msra.mxu0 0
        %2414 = vmatprep.subr.bf16.mxu0 0
        %2415 = vmatpush1.bf16.msra.mxu0 0
        %2416 = vmatprep.subr.bf16.mxu0 0
        %2417 = vmatpush1.bf16.msra.mxu0 0
        %2418 = vmatprep.subr.bf16.mxu0 0
        %2419 = vmatpush1.bf16.msra.mxu0 0
        %2420 = vmatprep.subr.bf16.mxu0 0
        %2421 = vmatpush1.bf16.msra.mxu0 0
        %2422 = vmatprep.subr.bf16.mxu0 0
        %2423 = vmatpush1.bf16.msra.mxu0 0
        %2424 = vmatprep.subr.bf16.mxu0 0
        %2425 = vmatpush1.bf16.msra.mxu0 0
        %2426 = vmatprep.subr.bf16.mxu0 0
        %2427 = vmatpush1.bf16.msra.mxu0 0
        %2428 = vmatprep.mubr.bf16.mxu0 0
        %2429 = vmatmul.mubr.bf16.gmra.mrb[0].mxu0 %v2394
        %v2430 = vpop.f32.mrb[0].mxu0
        %v2431 = vadd.f32 %v2376, %v2430
        %v2432 = vpop.f32.mrb[0].mxu0
        %v2433 = vpop.f32.mrb[0].mxu0
        %v2434 = vpop.f32.mrb[0].mxu0
        %2435 = vdwg.mxu0
        %v2436 = vadd.f32 %v2365, %v2431
        %v2437 = vxor.u32 %v2436, 2147483648
        %v2438 = vmul.f32 %v2437, 1.442695
        %v2439 = vpow.pop %v2438
        %v2440 = vadd.f32 %v2439, 1.0
        %v2441 = vrcp.pop %v2440
        %v2442 = vmul.f32 1.0, %v2441
        %2444 = vrot.lane.b32.xlu0 %v2431, 64
        %v2445 = vpop.permute.xlu0 %2444
        %v2447 = vmul.f32 %v2442, %v2445
        %2449 = vrot.lane.b32.xlu0 %v2447, 64
        %v2450 = vpop.permute.xlu0 %2449
        %v2452 = vadd.f32 %v2365, %v2450
        %v2453 = vtanh.pop %v2452
        %v2454 = vsub.f32 1.0, %v2442
        %2456 = vrot.lane.b32.xlu0 %v2453, 96
        %v2457 = vpop.permute.xlu0 %2456
        %v2459 = vmul.f32 %v2454, %v2457
        %v2460 = vmul.f32 %v2442, %v2188
        %v2461 = vadd.f32 %v2459, %v2460
        %2463 = vrot.lane.b32.xlu0 %v2461, 96
        %v2464 = vpop.permute.xlu0 %2463
        %s2466 = scalar_lea.vmem [#allocation4], 10
        %2467 = vst.msk [vmem:[%s2466] sm:$0x3] %vm1101, %v2464
        %v2468 = vpack.c.bf16 %v2292, %v2292
        %v2469 = vld [vmem:[#allocation11] sm:$0xf]
        %v2470 = vld [vmem:[#allocation11 + $0x4] sm:$0xf]
        %v2471 = vld [vmem:[#allocation11 + $0x8] sm:$0xf]
        %v2472 = vld [vmem:[#allocation11 + $0xc] sm:$0xf]
        %v2473 = vld [vmem:[#allocation13] sm:$0x1]
        %v2475 = vlaneseq
        %v2476 = vshrl.u32 %v2475, 7
        %v2477 = vsub.s32 0, %v2476
        %v2478 = vrot.slane %v2473, %v2477
        %2481 = vrot.lane.b32.xlu0 %v2468, 96
        %v2482 = vpop.permute.xlu0 %2481
        %v2487 = vunpack.c.l.b16 %v2469
        %v2488 = vunpack.c.l.b16 %v2470
        %v2489 = vunpack.c.l.b16 %v2471
        %v2490 = vunpack.c.l.b16 %v2472
        %v2491 = vpack.c.b16 %v2488, %v2487
        %v2492 = vpack.c.b16 %v2490, %v2489
        %v2496 = vsel %vm854, %v2482, 0
        %2498 = vmatprep.subr.bf16.mxu0 0
        %2499 = vmatpush1.bf16.msra.mxu0 %v2491
        %2500 = vmatprep.subr.bf16.mxu0 0
        %2501 = vmatpush1.bf16.msra.mxu0 %v2492
        %2502 = vmatprep.subr.bf16.mxu0 0
        %2503 = vmatpush1.bf16.msra.mxu0 0
        %2504 = vmatprep.subr.bf16.mxu0 0
        %2505 = vmatpush1.bf16.msra.mxu0 0
        %2506 = vmatprep.subr.bf16.mxu0 0
        %2507 = vmatpush1.bf16.msra.mxu0 0
        %2508 = vmatprep.subr.bf16.mxu0 0
        %2509 = vmatpush1.bf16.msra.mxu0 0
        %2510 = vmatprep.subr.bf16.mxu0 0
        %2511 = vmatpush1.bf16.msra.mxu0 0
        %2512 = vmatprep.subr.bf16.mxu0 0
        %2513 = vmatpush1.bf16.msra.mxu0 0
        %2514 = vmatprep.subr.bf16.mxu0 0
        %2515 = vmatpush1.bf16.msra.mxu0 0
        %2516 = vmatprep.subr.bf16.mxu0 0
        %2517 = vmatpush1.bf16.msra.mxu0 0
        %2518 = vmatprep.subr.bf16.mxu0 0
        %2519 = vmatpush1.bf16.msra.mxu0 0
        %2520 = vmatprep.subr.bf16.mxu0 0
        %2521 = vmatpush1.bf16.msra.mxu0 0
        %2522 = vmatprep.subr.bf16.mxu0 0
        %2523 = vmatpush1.bf16.msra.mxu0 0
        %2524 = vmatprep.subr.bf16.mxu0 0
        %2525 = vmatpush1.bf16.msra.mxu0 0
        %2526 = vmatprep.subr.bf16.mxu0 0
        %2527 = vmatpush1.bf16.msra.mxu0 0
        %2528 = vmatprep.subr.bf16.mxu0 0
        %2529 = vmatpush1.bf16.msra.mxu0 0
        %2530 = vmatprep.mubr.bf16.mxu0 0
        %2531 = vmatmul.mubr.bf16.gmra.mrb[0].mxu0 %v2496
        %v2532 = vpop.f32.mrb[0].mxu0
        %v2533 = vadd.f32 %v2478, %v2532
        %v2534 = vpop.f32.mrb[0].mxu0
        %v2535 = vpop.f32.mrb[0].mxu0
        %v2536 = vpop.f32.mrb[0].mxu0
        %2537 = vdwg.mxu0
        %s2538 = scalar_lea.vmem %s691, 12 [#allocation5]
        %v2539 = vld [vmem:[%s2538] sm:$0x3]
        %v2540 = vadd.f32 %v2539, %v2533
        %v2541 = vxor.u32 %v2540, 2147483648
        %v2542 = vmul.f32 %v2541, 1.442695
        %v2543 = vpow.pop %v2542
        %v2544 = vadd.f32 %v2543, 1.0
        %v2545 = vrcp.pop %v2544
        %v2546 = vmul.f32 1.0, %v2545
        %2548 = vrot.lane.b32.xlu0 %v2533, 64
        %v2549 = vpop.permute.xlu0 %2548
        %v2551 = vmul.f32 %v2546, %v2549
        %2553 = vrot.lane.b32.xlu0 %v2551, 64
        %v2554 = vpop.permute.xlu0 %2553
        %v2556 = vadd.f32 %v2539, %v2554
        %v2557 = vtanh.pop %v2556
        %v2558 = vsub.f32 1.0, %v2546
        %2560 = vrot.lane.b32.xlu0 %v2557, 96
        %v2561 = vpop.permute.xlu0 %2560
        %v2563 = vmul.f32 %v2558, %v2561
        %v2564 = vmul.f32 %v2546, %v2292
        %v2565 = vadd.f32 %v2563, %v2564
        %s2566 = scalar_lea.vmem %s709, 12 [#allocation10]
        %v2567 = vld [vmem:[%s2566] sm:$0x3]
        %2569 = vrot.lane.b32.xlu0 %v2567, 32
        %v2570 = vpop.permute.xlu0 %2569
        %v2572 = vadd.f32 %v2565, %v2570
        %s2573 = scalar_lea.vmem %s700, 12 [#allocation8]
        %v2574 = vld [vmem:[%s2573] sm:$0x3]
        %v2575 = vpack.c.bf16 %v2572, %v2572
        %v2576 = vld [vmem:[#allocation14] sm:$0xf]
        %v2577 = vld [vmem:[#allocation14 + $0x4] sm:$0xf]
        %v2578 = vld [vmem:[#allocation14 + $0x8] sm:$0xf]
        %v2579 = vld [vmem:[#allocation14 + $0xc] sm:$0xf]
        %2581 = vrot.lane.b32.xlu0 %v2575, 96
        %v2582 = vpop.permute.xlu0 %2581
        %v2587 = vunpack.c.l.b16 %v2576
        %v2588 = vunpack.c.l.b16 %v2577
        %v2589 = vunpack.c.l.b16 %v2578
        %v2590 = vunpack.c.l.b16 %v2579
        %v2591 = vpack.c.b16 %v2588, %v2587
        %v2592 = vpack.c.b16 %v2590, %v2589
        %v2596 = vsel %vm854, %v2582, 0
        %2598 = vmatprep.subr.bf16.mxu0 0
        %2599 = vmatpush1.bf16.msra.mxu0 %v2591
        %2600 = vmatprep.subr.bf16.mxu0 0
        %2601 = vmatpush1.bf16.msra.mxu0 %v2592
        %2602 = vmatprep.subr.bf16.mxu0 0
        %2603 = vmatpush1.bf16.msra.mxu0 0
        %2604 = vmatprep.subr.bf16.mxu0 0
        %2605 = vmatpush1.bf16.msra.mxu0 0
        %2606 = vmatprep.subr.bf16.mxu0 0
        %2607 = vmatpush1.bf16.msra.mxu0 0
        %2608 = vmatprep.subr.bf16.mxu0 0
        %2609 = vmatpush1.bf16.msra.mxu0 0
        %2610 = vmatprep.subr.bf16.mxu0 0
        %2611 = vmatpush1.bf16.msra.mxu0 0
        %2612 = vmatprep.subr.bf16.mxu0 0
        %2613 = vmatpush1.bf16.msra.mxu0 0
        %2614 = vmatprep.subr.bf16.mxu0 0
        %2615 = vmatpush1.bf16.msra.mxu0 0
        %2616 = vmatprep.subr.bf16.mxu0 0
        %2617 = vmatpush1.bf16.msra.mxu0 0
        %2618 = vmatprep.subr.bf16.mxu0 0
        %2619 = vmatpush1.bf16.msra.mxu0 0
        %2620 = vmatprep.subr.bf16.mxu0 0
        %2621 = vmatpush1.bf16.msra.mxu0 0
        %2622 = vmatprep.subr.bf16.mxu0 0
        %2623 = vmatpush1.bf16.msra.mxu0 0
        %2624 = vmatprep.subr.bf16.mxu0 0
        %2625 = vmatpush1.bf16.msra.mxu0 0
        %2626 = vmatprep.subr.bf16.mxu0 0
        %2627 = vmatpush1.bf16.msra.mxu0 0
        %2628 = vmatprep.subr.bf16.mxu0 0
        %2629 = vmatpush1.bf16.msra.mxu0 0
        %2630 = vmatprep.mubr.bf16.mxu0 0
        %2631 = vmatmul.mubr.bf16.gmra.mrb[0].mxu0 %v2596
        %v2632 = vpop.f32.mrb[0].mxu0
        %v2633 = vadd.f32 0.0, %v2632
        %v2634 = vpop.f32.mrb[0].mxu0
        %v2635 = vpop.f32.mrb[0].mxu0
        %v2636 = vpop.f32.mrb[0].mxu0
        %2637 = vdwg.mxu0
        %v2638 = vadd.f32 %v2574, %v2633
        %v2639 = vpack.c.bf16 %v2461, %v2461
        %v2640 = vld [vmem:[#allocation16] sm:$0xf]
        %v2641 = vld [vmem:[#allocation16 + $0x4] sm:$0xf]
        %v2642 = vld [vmem:[#allocation16 + $0x8] sm:$0xf]
        %v2643 = vld [vmem:[#allocation16 + $0xc] sm:$0xf]
        %v2644 = vld [vmem:[#allocation17] sm:$0x1]
        %v2646 = vlaneseq
        %v2647 = vshrl.u32 %v2646, 7
        %v2648 = vsub.s32 0, %v2647
        %v2649 = vrot.slane %v2644, %v2648
        %2652 = vrot.lane.b32.xlu0 %v2639, 96
        %v2653 = vpop.permute.xlu0 %2652
        %v2658 = vunpack.c.l.b16 %v2640
        %v2659 = vunpack.c.l.b16 %v2641
        %v2660 = vunpack.c.l.b16 %v2642
        %v2661 = vunpack.c.l.b16 %v2643
        %v2662 = vpack.c.b16 %v2659, %v2658
        %v2663 = vpack.c.b16 %v2661, %v2660
        %v2667 = vsel %vm854, %v2653, 0
        %2669 = vmatprep.subr.bf16.mxu0 0
        %2670 = vmatpush1.bf16.msra.mxu0 %v2662
        %2671 = vmatprep.subr.bf16.mxu0 0
        %2672 = vmatpush1.bf16.msra.mxu0 %v2663
        %2673 = vmatprep.subr.bf16.mxu0 0
        %2674 = vmatpush1.bf16.msra.mxu0 0
        %2675 = vmatprep.subr.bf16.mxu0 0
        %2676 = vmatpush1.bf16.msra.mxu0 0
        %2677 = vmatprep.subr.bf16.mxu0 0
        %2678 = vmatpush1.bf16.msra.mxu0 0
        %2679 = vmatprep.subr.bf16.mxu0 0
        %2680 = vmatpush1.bf16.msra.mxu0 0
        %2681 = vmatprep.subr.bf16.mxu0 0
        %2682 = vmatpush1.bf16.msra.mxu0 0
        %2683 = vmatprep.subr.bf16.mxu0 0
        %2684 = vmatpush1.bf16.msra.mxu0 0
        %2685 = vmatprep.subr.bf16.mxu0 0
        %2686 = vmatpush1.bf16.msra.mxu0 0
        %2687 = vmatprep.subr.bf16.mxu0 0
        %2688 = vmatpush1.bf16.msra.mxu0 0
        %2689 = vmatprep.subr.bf16.mxu0 0
        %2690 = vmatpush1.bf16.msra.mxu0 0
        %2691 = vmatprep.subr.bf16.mxu0 0
        %2692 = vmatpush1.bf16.msra.mxu0 0
        %2693 = vmatprep.subr.bf16.mxu0 0
        %2694 = vmatpush1.bf16.msra.mxu0 0
        %2695 = vmatprep.subr.bf16.mxu0 0
        %2696 = vmatpush1.bf16.msra.mxu0 0
        %2697 = vmatprep.subr.bf16.mxu0 0
        %2698 = vmatpush1.bf16.msra.mxu0 0
        %2699 = vmatprep.subr.bf16.mxu0 0
        %2700 = vmatpush1.bf16.msra.mxu0 0
        %2701 = vmatprep.mubr.bf16.mxu0 0
        %2702 = vmatmul.mubr.bf16.gmra.mrb[0].mxu0 %v2667
        %v2703 = vpop.f32.mrb[0].mxu0
        %v2704 = vadd.f32 %v2649, %v2703
        %v2705 = vpop.f32.mrb[0].mxu0
        %v2706 = vpop.f32.mrb[0].mxu0
        %v2707 = vpop.f32.mrb[0].mxu0
        %2708 = vdwg.mxu0
        %v2709 = vadd.f32 %v2638, %v2704
        %v2710 = vxor.u32 %v2709, 2147483648
        %v2711 = vmul.f32 %v2710, 1.442695
        %v2712 = vpow.pop %v2711
        %v2713 = vadd.f32 %v2712, 1.0
        %v2714 = vrcp.pop %v2713
        %v2715 = vmul.f32 1.0, %v2714
        %2717 = vrot.lane.b32.xlu0 %v2704, 64
        %v2718 = vpop.permute.xlu0 %2717
        %v2720 = vmul.f32 %v2715, %v2718
        %2722 = vrot.lane.b32.xlu0 %v2720, 64
        %v2723 = vpop.permute.xlu0 %2722
        %v2725 = vadd.f32 %v2638, %v2723
        %v2726 = vtanh.pop %v2725
        %v2727 = vsub.f32 1.0, %v2715
        %2729 = vrot.lane.b32.xlu0 %v2726, 96
        %v2730 = vpop.permute.xlu0 %2729
        %v2732 = vmul.f32 %v2727, %v2730
        %v2733 = vmul.f32 %v2715, %v2461
        %v2734 = vadd.f32 %v2732, %v2733
        %2736 = vrot.lane.b32.xlu0 %v2734, 96
        %v2737 = vpop.permute.xlu0 %2736
        %s2739 = scalar_lea.vmem [#allocation4], 12
        %2740 = vst.msk [vmem:[%s2739] sm:$0x3] %vm1101, %v2737
        %v2741 = vpack.c.bf16 %v2565, %v2565
        %v2742 = vld [vmem:[#allocation11] sm:$0xf]
        %v2743 = vld [vmem:[#allocation11 + $0x4] sm:$0xf]
        %v2744 = vld [vmem:[#allocation11 + $0x8] sm:$0xf]
        %v2745 = vld [vmem:[#allocation11 + $0xc] sm:$0xf]
        %v2746 = vld [vmem:[#allocation13] sm:$0x1]
        %v2748 = vlaneseq
        %v2749 = vshrl.u32 %v2748, 7
        %v2750 = vsub.s32 0, %v2749
        %v2751 = vrot.slane %v2746, %v2750
        %2754 = vrot.lane.b32.xlu0 %v2741, 96
        %v2755 = vpop.permute.xlu0 %2754
        %v2760 = vunpack.c.l.b16 %v2742
        %v2761 = vunpack.c.l.b16 %v2743
        %v2762 = vunpack.c.l.b16 %v2744
        %v2763 = vunpack.c.l.b16 %v2745
        %v2764 = vpack.c.b16 %v2761, %v2760
        %v2765 = vpack.c.b16 %v2763, %v2762
        %v2769 = vsel %vm854, %v2755, 0
        %2771 = vmatprep.subr.bf16.mxu0 0
        %2772 = vmatpush1.bf16.msra.mxu0 %v2764
        %2773 = vmatprep.subr.bf16.mxu0 0
        %2774 = vmatpush1.bf16.msra.mxu0 %v2765
        %2775 = vmatprep.subr.bf16.mxu0 0
        %2776 = vmatpush1.bf16.msra.mxu0 0
        %2777 = vmatprep.subr.bf16.mxu0 0
        %2778 = vmatpush1.bf16.msra.mxu0 0
        %2779 = vmatprep.subr.bf16.mxu0 0
        %2780 = vmatpush1.bf16.msra.mxu0 0
        %2781 = vmatprep.subr.bf16.mxu0 0
        %2782 = vmatpush1.bf16.msra.mxu0 0
        %2783 = vmatprep.subr.bf16.mxu0 0
        %2784 = vmatpush1.bf16.msra.mxu0 0
        %2785 = vmatprep.subr.bf16.mxu0 0
        %2786 = vmatpush1.bf16.msra.mxu0 0
        %2787 = vmatprep.subr.bf16.mxu0 0
        %2788 = vmatpush1.bf16.msra.mxu0 0
        %2789 = vmatprep.subr.bf16.mxu0 0
        %2790 = vmatpush1.bf16.msra.mxu0 0
        %2791 = vmatprep.subr.bf16.mxu0 0
        %2792 = vmatpush1.bf16.msra.mxu0 0
        %2793 = vmatprep.subr.bf16.mxu0 0
        %2794 = vmatpush1.bf16.msra.mxu0 0
        %2795 = vmatprep.subr.bf16.mxu0 0
        %2796 = vmatpush1.bf16.msra.mxu0 0
        %2797 = vmatprep.subr.bf16.mxu0 0
        %2798 = vmatpush1.bf16.msra.mxu0 0
        %2799 = vmatprep.subr.bf16.mxu0 0
        %2800 = vmatpush1.bf16.msra.mxu0 0
        %2801 = vmatprep.subr.bf16.mxu0 0
        %2802 = vmatpush1.bf16.msra.mxu0 0
        %2803 = vmatprep.mubr.bf16.mxu0 0
        %2804 = vmatmul.mubr.bf16.gmra.mrb[0].mxu0 %v2769
        %v2805 = vpop.f32.mrb[0].mxu0
        %v2806 = vadd.f32 %v2751, %v2805
        %v2807 = vpop.f32.mrb[0].mxu0
        %v2808 = vpop.f32.mrb[0].mxu0
        %v2809 = vpop.f32.mrb[0].mxu0
        %2810 = vdwg.mxu0
        %s2811 = scalar_lea.vmem %s691, 14 [#allocation5]
        %v2812 = vld [vmem:[%s2811] sm:$0x3]
        %v2813 = vadd.f32 %v2812, %v2806
        %v2814 = vxor.u32 %v2813, 2147483648
        %v2815 = vmul.f32 %v2814, 1.442695
        %v2816 = vpow.pop %v2815
        %v2817 = vadd.f32 %v2816, 1.0
        %v2818 = vrcp.pop %v2817
        %v2819 = vmul.f32 1.0, %v2818
        %2821 = vrot.lane.b32.xlu0 %v2806, 64
        %v2822 = vpop.permute.xlu0 %2821
        %v2824 = vmul.f32 %v2819, %v2822
        %2826 = vrot.lane.b32.xlu0 %v2824, 64
        %v2827 = vpop.permute.xlu0 %2826
        %v2829 = vadd.f32 %v2812, %v2827
        %v2830 = vtanh.pop %v2829
        %v2831 = vsub.f32 1.0, %v2819
        %2833 = vrot.lane.b32.xlu0 %v2830, 96
        %v2834 = vpop.permute.xlu0 %2833
        %v2836 = vmul.f32 %v2831, %v2834
        %v2837 = vmul.f32 %v2819, %v2565
        %v2838 = vadd.f32 %v2836, %v2837
        %s2839 = scalar_lea.vmem %s709, 14 [#allocation10]
        %v2840 = vld [vmem:[%s2839] sm:$0x3]
        %2842 = vrot.lane.b32.xlu0 %v2840, 32
        %v2843 = vpop.permute.xlu0 %2842
        %v2845 = vadd.f32 %v2838, %v2843
        %s2846 = scalar_lea.vmem %s700, 14 [#allocation8]
        %v2847 = vld [vmem:[%s2846] sm:$0x3]
        %v2848 = vpack.c.bf16 %v2845, %v2845
        %v2849 = vld [vmem:[#allocation14] sm:$0xf]
        %v2850 = vld [vmem:[#allocation14 + $0x4] sm:$0xf]
        %v2851 = vld [vmem:[#allocation14 + $0x8] sm:$0xf]
        %v2852 = vld [vmem:[#allocation14 + $0xc] sm:$0xf]
        %2854 = vrot.lane.b32.xlu0 %v2848, 96
        %v2855 = vpop.permute.xlu0 %2854
        %v2860 = vunpack.c.l.b16 %v2849
        %v2861 = vunpack.c.l.b16 %v2850
        %v2862 = vunpack.c.l.b16 %v2851
        %v2863 = vunpack.c.l.b16 %v2852
        %v2864 = vpack.c.b16 %v2861, %v2860
        %v2865 = vpack.c.b16 %v2863, %v2862
        %v2869 = vsel %vm854, %v2855, 0
        %2871 = vmatprep.subr.bf16.mxu0 0
        %2872 = vmatpush1.bf16.msra.mxu0 %v2864
        %2873 = vmatprep.subr.bf16.mxu0 0
        %2874 = vmatpush1.bf16.msra.mxu0 %v2865
        %2875 = vmatprep.subr.bf16.mxu0 0
        %2876 = vmatpush1.bf16.msra.mxu0 0
        %2877 = vmatprep.subr.bf16.mxu0 0
        %2878 = vmatpush1.bf16.msra.mxu0 0
        %2879 = vmatprep.subr.bf16.mxu0 0
        %2880 = vmatpush1.bf16.msra.mxu0 0
        %2881 = vmatprep.subr.bf16.mxu0 0
        %2882 = vmatpush1.bf16.msra.mxu0 0
        %2883 = vmatprep.subr.bf16.mxu0 0
        %2884 = vmatpush1.bf16.msra.mxu0 0
        %2885 = vmatprep.subr.bf16.mxu0 0
        %2886 = vmatpush1.bf16.msra.mxu0 0
        %2887 = vmatprep.subr.bf16.mxu0 0
        %2888 = vmatpush1.bf16.msra.mxu0 0
        %2889 = vmatprep.subr.bf16.mxu0 0
        %2890 = vmatpush1.bf16.msra.mxu0 0
        %2891 = vmatprep.subr.bf16.mxu0 0
        %2892 = vmatpush1.bf16.msra.mxu0 0
        %2893 = vmatprep.subr.bf16.mxu0 0
        %2894 = vmatpush1.bf16.msra.mxu0 0
        %2895 = vmatprep.subr.bf16.mxu0 0
        %2896 = vmatpush1.bf16.msra.mxu0 0
        %2897 = vmatprep.subr.bf16.mxu0 0
        %2898 = vmatpush1.bf16.msra.mxu0 0
        %2899 = vmatprep.subr.bf16.mxu0 0
        %2900 = vmatpush1.bf16.msra.mxu0 0
        %2901 = vmatprep.subr.bf16.mxu0 0
        %2902 = vmatpush1.bf16.msra.mxu0 0
        %2903 = vmatprep.mubr.bf16.mxu0 0
        %2904 = vmatmul.mubr.bf16.gmra.mrb[0].mxu0 %v2869
        %v2905 = vpop.f32.mrb[0].mxu0
        %v2906 = vadd.f32 0.0, %v2905
        %v2907 = vpop.f32.mrb[0].mxu0
        %v2908 = vpop.f32.mrb[0].mxu0
        %v2909 = vpop.f32.mrb[0].mxu0
        %2910 = vdwg.mxu0
        %v2911 = vadd.f32 %v2847, %v2906
        %v2912 = vpack.c.bf16 %v2734, %v2734
        %v2913 = vld [vmem:[#allocation16] sm:$0xf]
        %v2914 = vld [vmem:[#allocation16 + $0x4] sm:$0xf]
        %v2915 = vld [vmem:[#allocation16 + $0x8] sm:$0xf]
        %v2916 = vld [vmem:[#allocation16 + $0xc] sm:$0xf]
        %v2917 = vld [vmem:[#allocation17] sm:$0x1]
        %v2919 = vlaneseq
        %v2920 = vshrl.u32 %v2919, 7
        %v2921 = vsub.s32 0, %v2920
        %v2922 = vrot.slane %v2917, %v2921
        %2925 = vrot.lane.b32.xlu0 %v2912, 96
        %v2926 = vpop.permute.xlu0 %2925
        %v2931 = vunpack.c.l.b16 %v2913
        %v2932 = vunpack.c.l.b16 %v2914
        %v2933 = vunpack.c.l.b16 %v2915
        %v2934 = vunpack.c.l.b16 %v2916
        %v2935 = vpack.c.b16 %v2932, %v2931
        %v2936 = vpack.c.b16 %v2934, %v2933
        %v2940 = vsel %vm854, %v2926, 0
        %2942 = vmatprep.subr.bf16.mxu0 0
        %2943 = vmatpush1.bf16.msra.mxu0 %v2935
        %2944 = vmatprep.subr.bf16.mxu0 0
        %2945 = vmatpush1.bf16.msra.mxu0 %v2936
        %2946 = vmatprep.subr.bf16.mxu0 0
        %2947 = vmatpush1.bf16.msra.mxu0 0
        %2948 = vmatprep.subr.bf16.mxu0 0
        %2949 = vmatpush1.bf16.msra.mxu0 0
        %2950 = vmatprep.subr.bf16.mxu0 0
        %2951 = vmatpush1.bf16.msra.mxu0 0
        %2952 = vmatprep.subr.bf16.mxu0 0
        %2953 = vmatpush1.bf16.msra.mxu0 0
        %2954 = vmatprep.subr.bf16.mxu0 0
        %2955 = vmatpush1.bf16.msra.mxu0 0
        %2956 = vmatprep.subr.bf16.mxu0 0
        %2957 = vmatpush1.bf16.msra.mxu0 0
        %2958 = vmatprep.subr.bf16.mxu0 0
        %2959 = vmatpush1.bf16.msra.mxu0 0
        %2960 = vmatprep.subr.bf16.mxu0 0
        %2961 = vmatpush1.bf16.msra.mxu0 0
        %2962 = vmatprep.subr.bf16.mxu0 0
        %2963 = vmatpush1.bf16.msra.mxu0 0
        %2964 = vmatprep.subr.bf16.mxu0 0
        %2965 = vmatpush1.bf16.msra.mxu0 0
        %2966 = vmatprep.subr.bf16.mxu0 0
        %2967 = vmatpush1.bf16.msra.mxu0 0
        %2968 = vmatprep.subr.bf16.mxu0 0
        %2969 = vmatpush1.bf16.msra.mxu0 0
        %2970 = vmatprep.subr.bf16.mxu0 0
        %2971 = vmatpush1.bf16.msra.mxu0 0
        %2972 = vmatprep.subr.bf16.mxu0 0
        %2973 = vmatpush1.bf16.msra.mxu0 0
        %2974 = vmatprep.mubr.bf16.mxu0 0
        %2975 = vmatmul.mubr.bf16.gmra.mrb[0].mxu0 %v2940
        %v2976 = vpop.f32.mrb[0].mxu0
        %v2977 = vadd.f32 %v2922, %v2976
        %v2978 = vpop.f32.mrb[0].mxu0
        %v2979 = vpop.f32.mrb[0].mxu0
        %v2980 = vpop.f32.mrb[0].mxu0
        %2981 = vdwg.mxu0
        %v2982 = vadd.f32 %v2911, %v2977
        %v2983 = vxor.u32 %v2982, 2147483648
        %v2984 = vmul.f32 %v2983, 1.442695
        %v2985 = vpow.pop %v2984
        %v2986 = vadd.f32 %v2985, 1.0
        %v2987 = vrcp.pop %v2986
        %v2988 = vmul.f32 1.0, %v2987
        %2990 = vrot.lane.b32.xlu0 %v2977, 64
        %v2991 = vpop.permute.xlu0 %2990
        %v2993 = vmul.f32 %v2988, %v2991
        %2995 = vrot.lane.b32.xlu0 %v2993, 64
        %v2996 = vpop.permute.xlu0 %2995
        %v2998 = vadd.f32 %v2911, %v2996
        %v2999 = vtanh.pop %v2998
        %v3000 = vsub.f32 1.0, %v2988
        %3002 = vrot.lane.b32.xlu0 %v2999, 96
        %v3003 = vpop.permute.xlu0 %3002
        %v3005 = vmul.f32 %v3000, %v3003
        %v3006 = vmul.f32 %v2988, %v2734
        %v3007 = vadd.f32 %v3005, %v3006
        %3009 = vrot.lane.b32.xlu0 %v3007, 96
        %v3010 = vpop.permute.xlu0 %3009
        %s3012 = scalar_lea.vmem [#allocation4], 14
        %3013 = vst.msk [vmem:[%s3012] sm:$0x3] %vm1101, %v3010
        %3015 = vrot.lane.b32.xlu0 %v2838, 96
        %v3016 = vpop.permute.xlu0 %3015
        %3018 = vst.msk [vmem:[#allocation2] sm:$0x3] %vm1101, %v3016
        %3019 = vst.msk [vmem:[#allocation3] sm:$0x3] %vm1101, %v3010
        %v3020 = vld [vmem:[#allocation4] sm:$0xff]
        %v3021 = vld [vmem:[#allocation4 + $0x8] sm:$0xff]
        %v3022 = vpack.c.bf16 %v3021, %v3020
        %v3023 = vld [vmem:[#allocation19] sm:$0xf]
        %v3024 = vld [vmem:[#allocation19 + $0x4] sm:$0xf]
        %v3025 = vld [vmem:[#allocation19 + $0x8] sm:$0xf]
        %v3026 = vld [vmem:[#allocation19 + $0xc] sm:$0xf]
        %v3027 = vld [vmem:[#allocation20] sm:$0x1]
        %v3029 = vlaneseq
        %v3030 = vshrl.u32 %v3029, 7
        %v3031 = vsub.s32 0, %v3030
        %v3032 = vrot.slane %v3027, %v3031
        %v3038 = vunpack.c.l.b16 %v3023
        %v3039 = vunpack.c.l.b16 %v3024
        %v3040 = vunpack.c.l.b16 %v3025
        %v3041 = vunpack.c.l.b16 %v3026
        %v3042 = vpack.c.b16 %v3039, %v3038
        %v3043 = vpack.c.b16 %v3041, %v3040
        %v3047 = vsel %vm854, %v3022, 0
        %3049 = vmatprep.subr.bf16.mxu0 0
        %3050 = vmatpush1.bf16.msra.mxu0 %v3042
        %3051 = vmatprep.subr.bf16.mxu0 0
        %3052 = vmatpush1.bf16.msra.mxu0 %v3043
        %3053 = vmatprep.subr.bf16.mxu0 0
        %3054 = vmatpush1.bf16.msra.mxu0 0
        %3055 = vmatprep.subr.bf16.mxu0 0
        %3056 = vmatpush1.bf16.msra.mxu0 0
        %3057 = vmatprep.subr.bf16.mxu0 0
        %3058 = vmatpush1.bf16.msra.mxu0 0
        %3059 = vmatprep.subr.bf16.mxu0 0
        %3060 = vmatpush1.bf16.msra.mxu0 0
        %3061 = vmatprep.subr.bf16.mxu0 0
        %3062 = vmatpush1.bf16.msra.mxu0 0
        %3063 = vmatprep.subr.bf16.mxu0 0
        %3064 = vmatpush1.bf16.msra.mxu0 0
        %3065 = vmatprep.subr.bf16.mxu0 0
        %3066 = vmatpush1.bf16.msra.mxu0 0
        %3067 = vmatprep.subr.bf16.mxu0 0
        %3068 = vmatpush1.bf16.msra.mxu0 0
        %3069 = vmatprep.subr.bf16.mxu0 0
        %3070 = vmatpush1.bf16.msra.mxu0 0
        %3071 = vmatprep.subr.bf16.mxu0 0
        %3072 = vmatpush1.bf16.msra.mxu0 0
        %3073 = vmatprep.subr.bf16.mxu0 0
        %3074 = vmatpush1.bf16.msra.mxu0 0
        %3075 = vmatprep.subr.bf16.mxu0 0
        %3076 = vmatpush1.bf16.msra.mxu0 0
        %3077 = vmatprep.subr.bf16.mxu0 0
        %3078 = vmatpush1.bf16.msra.mxu0 0
        %3079 = vmatprep.subr.bf16.mxu0 0
        %3080 = vmatpush1.bf16.msra.mxu0 0
        %3081 = vmatprep.mubr.bf16.mxu0 0
        %3082 = vmatmul.mubr.bf16.gmra.mrb[0].mxu0 %v3047
        %v3083 = vpop.f32.mrb[0].mxu0
        %v3084 = vadd.f32 %v3032, %v3083
        %v3085 = vpop.f32.mrb[0].mxu0
        %v3086 = vpop.f32.mrb[0].mxu0
        %v3087 = vadd.f32 %v3032, %v3086
        %v3088 = vpop.f32.mrb[0].mxu0
        %3089 = vdwg.mxu0
        %v3090 = vtanh.pop %v3084
        %v3091 = vtanh.pop %v3087
        %v3092 = vld [vmem:[#allocation23] sm:$0xf]
        %v3093 = vld [vmem:[#allocation23 + $0x4] sm:$0xf]
        %v3094 = vld [vmem:[#allocation23 + $0x8] sm:$0xf]
        %v3095 = vld [vmem:[#allocation23 + $0xc] sm:$0xf]
        %v3096 = vld [vmem:[#allocation25] sm:$0x1]
        %v3098 = vlaneseq
        %v3099 = vshrl.u32 %v3098, 7
        %v3100 = vsub.s32 0, %v3099
        %v3101 = vrot.slane %v3096, %v3100
        %v3107 = vunpack.c.l.b16 %v3092
        %v3108 = vunpack.c.l.b16 %v3093
        %v3109 = vunpack.c.l.b16 %v3094
        %v3110 = vunpack.c.l.b16 %v3095
        %v3111 = vpack.c.b16 %v3108, %v3107
        %v3112 = vpack.c.b16 %v3110, %v3109
        %3115 = vmatprep.subr.bf16.mxu0 0
        %3116 = vmatpush1.bf16.msra.mxu0 %v3111
        %3117 = vmatprep.subr.bf16.mxu0 0
        %3118 = vmatpush1.bf16.msra.mxu0 %v3112
        %3119 = vmatprep.subr.bf16.mxu0 0
        %3120 = vmatpush1.bf16.msra.mxu0 0
        %3121 = vmatprep.subr.bf16.mxu0 0
        %3122 = vmatpush1.bf16.msra.mxu0 0
        %3123 = vmatprep.subr.bf16.mxu0 0
        %3124 = vmatpush1.bf16.msra.mxu0 0
        %3125 = vmatprep.subr.bf16.mxu0 0
        %3126 = vmatpush1.bf16.msra.mxu0 0
        %3127 = vmatprep.subr.bf16.mxu0 0
        %3128 = vmatpush1.bf16.msra.mxu0 0
        %3129 = vmatprep.subr.bf16.mxu0 0
        %3130 = vmatpush1.bf16.msra.mxu0 0
        %3131 = vmatprep.subr.bf16.mxu0 0
        %3132 = vmatpush1.bf16.msra.mxu0 0
        %3133 = vmatprep.subr.bf16.mxu0 0
        %3134 = vmatpush1.bf16.msra.mxu0 0
        %3135 = vmatprep.subr.bf16.mxu0 0
        %3136 = vmatpush1.bf16.msra.mxu0 0
        %3137 = vmatprep.subr.bf16.mxu0 0
        %3138 = vmatpush1.bf16.msra.mxu0 0
        %3139 = vmatprep.subr.bf16.mxu0 0
        %3140 = vmatpush1.bf16.msra.mxu0 0
        %3141 = vmatprep.subr.bf16.mxu0 0
        %3142 = vmatpush1.bf16.msra.mxu0 0
        %3143 = vmatprep.subr.bf16.mxu0 0
        %3144 = vmatpush1.bf16.msra.mxu0 0
        %3145 = vmatprep.subr.bf16.mxu0 0
        %3146 = vmatpush1.bf16.msra.mxu0 0
        %3147 = vmatprep.mubr.bf16.mxu0 0
        %3148 = vmatmul.mubr.bf16.gmra.mrb[0].mxu0 %v3047
        %v3149 = vpop.f32.mrb[0].mxu0
        %v3150 = vadd.f32 %v3101, %v3149
        %v3151 = vpop.f32.mrb[0].mxu0
        %v3152 = vpop.f32.mrb[0].mxu0
        %v3153 = vadd.f32 %v3101, %v3152
        %v3154 = vpop.f32.mrb[0].mxu0
        %3155 = vdwg.mxu0
        %v3156 = vtanh.pop %v3150
        %v3157 = vtanh.pop %v3153
        %v3158 = vld [vmem:[#allocation22] sm:$0x1]
        %v3160 = vlaneseq
        %v3161 = vshrl.u32 %v3160, 7
        %v3162 = vsub.s32 0, %v3161
        %v3163 = vrot.slane %v3158, %v3162
        %v3165 = vmul.f32 %v3163, %v3090
        %v3166 = vmul.f32 %v3163, %v3091
        %v3167 = vld [vmem:[#allocation26] sm:$0x1]
        %v3169 = vlaneseq
        %v3170 = vshrl.u32 %v3169, 7
        %v3171 = vsub.s32 0, %v3170
        %v3172 = vrot.slane %v3167, %v3171
        %v3174 = vmul.f32 %v3172, %v3156
        %v3175 = vmul.f32 %v3172, %v3157
        %v3176 = vadd.f32 %v3165, %v3174
        %v3177 = vadd.f32 %v3166, %v3175
        %v3178 = vxor.u32 %v3176, 2147483648
        %v3179 = vxor.u32 %v3177, 2147483648
        %v3180 = vmul.f32 %v3178, 1.442695
        %v3181 = vpow.pop %v3180
        %v3182 = vmul.f32 %v3179, 1.442695
        %v3183 = vpow.pop %v3182
        %v3184 = vadd.f32 %v3181, 1.0
        %v3185 = vadd.f32 %v3183, 1.0
        %v3186 = vrcp.pop %v3184
        %v3187 = vmul.f32 1.0, %v3186
        %v3188 = vrcp.pop %v3185
        %v3189 = vmul.f32 1.0, %v3188
        %v3190 = vmax.f32 %v3187, 1e-07
        %v3191 = vmax.f32 %v3189, 1e-07
        %v3192 = vmin.f32 %v3190, 0.9999999
        %v3193 = vmin.f32 %v3191, 0.9999999
        %v3194 = vlog2.pop %v3192
        %v3195 = vmul.f32 %v3194, 0.6931472
        %v3196 = vlog2.pop %v3193
        %v3197 = vmul.f32 %v3196, 0.6931472
        %v3198 = vld [vmem:[#allocation28] sm:$0xff]
        %v3199 = vld [vmem:[#allocation28 + $0x8] sm:$0xff]
        %v3200 = vsub.f32 1.0, %v3192
        %v3201 = vsub.f32 1.0, %v3193
        %v3202 = vlog2.pop %v3200
        %v3203 = vmul.f32 %v3202, 0.6931472
        %v3204 = vlog2.pop %v3201
        %v3205 = vmul.f32 %v3204, 0.6931472
        %v3206 = vld [vmem:[#allocation29] sm:$0xff]
        %v3207 = vld [vmem:[#allocation29 + $0x8] sm:$0xff]
        %vm3208 = vcmask 130048
        %v3210 = vsel %vm3208, %v3203, 0
        %v3213 = vsel %vm3208, %v3205, 0
        %3215 = vmatprep.subr.mxu0 0.0
        %3216 = vmatpush1.msra.mxu0 %v3206
        %3217 = vmatprep.subr.mxu0 0.0
        %3218 = vmatpush1.msra.mxu0 %v3207
        %3219 = vmatprep.subr.mxu0 0.0
        %3220 = vmatpush1.msra.mxu0 0.0
        %3221 = vmatprep.subr.mxu0 0.0
        %3222 = vmatpush1.msra.mxu0 0.0
        %3223 = vmatprep.subr.mxu0 0.0
        %3224 = vmatpush1.msra.mxu0 0.0
        %3225 = vmatprep.subr.mxu0 0.0
        %3226 = vmatpush1.msra.mxu0 0.0
        %3227 = vmatprep.subr.mxu0 0.0
        %3228 = vmatpush1.msra.mxu0 0.0
        %3229 = vmatprep.subr.mxu0 0.0
        %3230 = vmatpush1.msra.mxu0 0.0
        %3231 = vmatprep.subr.mxu0 0.0
        %3232 = vmatpush1.msra.mxu0 0.0
        %3233 = vmatprep.subr.mxu0 0.0
        %3234 = vmatpush1.msra.mxu0 0.0
        %3235 = vmatprep.subr.mxu0 0.0
        %3236 = vmatpush1.msra.mxu0 0.0
        %3237 = vmatprep.subr.mxu0 0.0
        %3238 = vmatpush1.msra.mxu0 0.0
        %3239 = vmatprep.subr.mxu0 0.0
        %3240 = vmatpush1.msra.mxu0 0.0
        %3241 = vmatprep.subr.mxu0 0.0
        %3242 = vmatpush1.msra.mxu0 0.0
        %3243 = vmatprep.subr.mxu0 0.0
        %3244 = vmatpush1.msra.mxu0 0.0
        %3245 = vmatprep.subr.mxu0 0.0
        %3246 = vmatpush1.msra.mxu0 0.0
        %3247 = vmatprep.subr.mxu0 0.0
        %3248 = vmatpush1.msra.mxu0 0.0
        %3249 = vmatprep.subr.mxu0 0.0
        %3250 = vmatpush1.msra.mxu0 0.0
        %3251 = vmatprep.subr.mxu0 0.0
        %3252 = vmatpush1.msra.mxu0 0.0
        %3253 = vmatprep.subr.mxu0 0.0
        %3254 = vmatpush1.msra.mxu0 0.0
        %3255 = vmatprep.subr.mxu0 0.0
        %3256 = vmatpush1.msra.mxu0 0.0
        %3257 = vmatprep.subr.mxu0 0.0
        %3258 = vmatpush1.msra.mxu0 0.0
        %3259 = vmatprep.subr.mxu0 0.0
        %3260 = vmatpush1.msra.mxu0 0.0
        %3261 = vmatprep.subr.mxu0 0.0
        %3262 = vmatpush1.msra.mxu0 0.0
        %3263 = vmatprep.subr.mxu0 0.0
        %3264 = vmatpush1.msra.mxu0 0.0
        %3265 = vmatprep.subr.mxu0 0.0
        %3266 = vmatpush1.msra.mxu0 0.0
        %3267 = vmatprep.subr.mxu0 0.0
        %3268 = vmatpush1.msra.mxu0 0.0
        %3269 = vmatprep.subr.mxu0 0.0
        %3270 = vmatpush1.msra.mxu0 0.0
        %3271 = vmatprep.subr.mxu0 0.0
        %3272 = vmatpush1.msra.mxu0 0.0
        %3273 = vmatprep.subr.mxu0 0.0
        %3274 = vmatpush1.msra.mxu0 0.0
        %3275 = vmatprep.subr.mxu0 0.0
        %3276 = vmatpush1.msra.mxu0 0.0
        %3277 = vmatprep.subr.mxu0 0.0
        %3278 = vmatpush1.msra.mxu0 0.0
        %3279 = vmatprep.mubr.f32.mxu0 0.0
        %3280 = vmatmul.mubr.f32.gmra.mrb[0].mxu0 %v3210
        %v3281 = vpop.f32.mrb[0].mxu0
        %v3282 = vadd.f32 0.0, %v3281
        %v3283 = vpop.f32.mrb[0].mxu0
        %3284 = vmatprep.mubr.f32.mxu0 0.0
        %3285 = vmatmul.mubr.f32.gmra.mrb[0].mxu0 %v3213
        %v3286 = vpop.f32.mrb[0].mxu0
        %v3287 = vadd.f32 0.0, %v3286
        %v3288 = vpop.f32.mrb[0].mxu0
        %3289 = vdwg.mxu0
        %v3291 = vsel %vm3208, %v3195, 0
        %v3294 = vsel %vm3208, %v3197, 0
        %3296 = vmatprep.subr.mxu0 0.0
        %3297 = vmatpush1.msra.mxu0 %v3198
        %3298 = vmatprep.subr.mxu0 0.0
        %3299 = vmatpush1.msra.mxu0 %v3199
        %3300 = vmatprep.subr.mxu0 0.0
        %3301 = vmatpush1.msra.mxu0 0.0
        %3302 = vmatprep.subr.mxu0 0.0
        %3303 = vmatpush1.msra.mxu0 0.0
        %3304 = vmatprep.subr.mxu0 0.0
        %3305 = vmatpush1.msra.mxu0 0.0
        %3306 = vmatprep.subr.mxu0 0.0
        %3307 = vmatpush1.msra.mxu0 0.0
        %3308 = vmatprep.subr.mxu0 0.0
        %3309 = vmatpush1.msra.mxu0 0.0
        %3310 = vmatprep.subr.mxu0 0.0
        %3311 = vmatpush1.msra.mxu0 0.0
        %3312 = vmatprep.subr.mxu0 0.0
        %3313 = vmatpush1.msra.mxu0 0.0
        %3314 = vmatprep.subr.mxu0 0.0
        %3315 = vmatpush1.msra.mxu0 0.0
        %3316 = vmatprep.subr.mxu0 0.0
        %3317 = vmatpush1.msra.mxu0 0.0
        %3318 = vmatprep.subr.mxu0 0.0
        %3319 = vmatpush1.msra.mxu0 0.0
        %3320 = vmatprep.subr.mxu0 0.0
        %3321 = vmatpush1.msra.mxu0 0.0
        %3322 = vmatprep.subr.mxu0 0.0
        %3323 = vmatpush1.msra.mxu0 0.0
        %3324 = vmatprep.subr.mxu0 0.0
        %3325 = vmatpush1.msra.mxu0 0.0
        %3326 = vmatprep.subr.mxu0 0.0
        %3327 = vmatpush1.msra.mxu0 0.0
        %3328 = vmatprep.subr.mxu0 0.0
        %3329 = vmatpush1.msra.mxu0 0.0
        %3330 = vmatprep.subr.mxu0 0.0
        %3331 = vmatpush1.msra.mxu0 0.0
        %3332 = vmatprep.subr.mxu0 0.0
        %3333 = vmatpush1.msra.mxu0 0.0
        %3334 = vmatprep.subr.mxu0 0.0
        %3335 = vmatpush1.msra.mxu0 0.0
        %3336 = vmatprep.subr.mxu0 0.0
        %3337 = vmatpush1.msra.mxu0 0.0
        %3338 = vmatprep.subr.mxu0 0.0
        %3339 = vmatpush1.msra.mxu0 0.0
        %3340 = vmatprep.subr.mxu0 0.0
        %3341 = vmatpush1.msra.mxu0 0.0
        %3342 = vmatprep.subr.mxu0 0.0
        %3343 = vmatpush1.msra.mxu0 0.0
        %3344 = vmatprep.subr.mxu0 0.0
        %3345 = vmatpush1.msra.mxu0 0.0
        %3346 = vmatprep.subr.mxu0 0.0
        %3347 = vmatpush1.msra.mxu0 0.0
        %3348 = vmatprep.subr.mxu0 0.0
        %3349 = vmatpush1.msra.mxu0 0.0
        %3350 = vmatprep.subr.mxu0 0.0
        %3351 = vmatpush1.msra.mxu0 0.0
        %3352 = vmatprep.subr.mxu0 0.0
        %3353 = vmatpush1.msra.mxu0 0.0
        %3354 = vmatprep.subr.mxu0 0.0
        %3355 = vmatpush1.msra.mxu0 0.0
        %3356 = vmatprep.subr.mxu0 0.0
        %3357 = vmatpush1.msra.mxu0 0.0
        %3358 = vmatprep.subr.mxu0 0.0
        %3359 = vmatpush1.msra.mxu0 0.0
        %3360 = vmatprep.mubr.f32.mxu0 0.0
        %3361 = vmatmul.mubr.f32.gmra.mrb[0].mxu0 %v3291
        %v3362 = vpop.f32.mrb[0].mxu0
        %v3363 = vadd.f32 %v3282, %v3362
        %v3364 = vpop.f32.mrb[0].mxu0
        %3365 = vmatprep.mubr.f32.mxu0 0.0
        %3366 = vmatmul.mubr.f32.gmra.mrb[0].mxu0 %v3294
        %v3367 = vpop.f32.mrb[0].mxu0
        %v3368 = vadd.f32 %v3287, %v3367
        %v3369 = vpop.f32.mrb[0].mxu0
        %3370 = vdwg.mxu0
        %3371 = vst.msk [vmem:[%s819] sm:$0xff] %vm3208, %v3363
        %3372 = vst.msk [vmem:[%s819 + $0x8] sm:$0xff] %vm3208, %v3368
        %s3373 = sand.u32 %s422, 1
        %s3374 = scalar_lea.sflag [#allocation7], %s3373
        %s3375 = sand.u32 %s422, 1
        %s3376 = smul.addr %s3375, 16
        %s3377 = scalar_lea.vmem [#allocation31], %s3376
        // Predicated region
        $region153: #{tpu_custom_call.1} parent=83 // pred_check
          %p3378 = pneg %p432
        $region154: #{tpu_custom_call.1} parent=83 // pred_check_branch
          %3380 = sbr.rel (%p3378) target = $region156
        $region155: #{tpu_custom_call.1} parent=83 // pred_region
          %s3382 = ssub.s32 256, 256
          %3383 = vsyncadd %s3374, %s3382
          %s3384 = smul.addr %s48, 2
          %s3385 = smul.addr %s47, 4
          %s3386 = sadd.s32 %s3384, %s3385
          %s3387 = smul.addr %s3386, 128
          %s3388 = scalar_lea.hbm %s16, %s3387
          %s3389 = sshll.u32 %s3377, 4
          %s3390 = int_to_ptr.vmem [resolvable:$true] %s3389
          %3395 = dma.vmem_to_hbm [thread:$0]  %s3390, 256, %s3388, %s3374, 128, 128, 8
        $region156: #{tpu_custom_call.1} parent=83 // pred_fallthru
          _
      $region84: #{tpu_custom_call.1} parent=5 // pred_fallthru
        _
      %p3396 = scmp.le.s32.totalorder 2, %s38
      // Predicated region
      $region157: #{tpu_custom_call.1} parent=5 // pred_check
        %p3397 = pneg %p3396
      $region158: #{tpu_custom_call.1} parent=5 // pred_check_branch
        %3399 = sbr.rel (%p3397) target = $region160
      $region159: #{tpu_custom_call.1} parent=5 // pred_region
        %s3400 = ssub.s32 %s38, 2
        // Predicated region
        $region161: #{tpu_custom_call.1} parent=159 // pred_check
          %p3401 = pneg %p438
        $region162: #{tpu_custom_call.1} parent=159 // pred_check_branch
          %3403 = sbr.rel (%p3401) target = $region164
        $region163: #{tpu_custom_call.1} parent=159 // pred_region
          %s3404 = sand.u32 %s423, 1
          %s3405 = scalar_lea.sflag [#allocation7], %s3404
          %s3406 = sand.u32 %s423, 1
          %s3407 = smul.addr %s3406, 16
          %s3408 = scalar_lea.vmem [#allocation31], %s3407
          %3409 = dma.done %s3405, 256
        $region164: #{tpu_custom_call.1} parent=159 // pred_fallthru
          _
      $region160: #{tpu_custom_call.1} parent=5 // pred_fallthru
        _
    $region6: #{tpu_custom_call.1} parent=1 // loop_footer
      %s42 = sadd.s32 1, %s38
    $region7: #{tpu_custom_call.1} parent=1 // loop_footer_branch
      %37 = sbr.rel target = $region3
    $region8: #{tpu_custom_call.1} parent=1 // loop_exit
      _
    %3410 = vsyncpa [#allocation6], 1
    %s3411 = scalar_lea.sflag [#allocation6], 1
    %3412 = vsyncpa %s3411, 1
    %3413 = vsyncpa [#allocation9], 1
    %s3414 = scalar_lea.sflag [#allocation9], 1
    %3415 = vsyncpa %s3414, 1
    %3416 = vsyncpa [#allocation12], 1
    %3417 = vsyncpa [#allocation15], 1
    %3418 = vsyncpa [#allocation18], 1
    %3419 = vsyncpa [#allocation21], 1
    %3420 = vsyncpa [#allocation24], 1
    %3421 = vsyncpa [#allocation27], 1
    %3422 = vsyncpa [#allocation30], 1
    %3423 = vsyncpa [#allocation7], 1
    %s3424 = scalar_lea.sflag [#allocation7], 1
    %3425 = vsyncpa %s3424, 1

</llo_original>
